<compile_context>
chip_gen: v7x
topology: tpu7x:2x2x1
jax: 0.10.0
libtpu: 0.0.40
codegen_flags: <defaults>
</compile_context>

<pallas_src>
import functools

import jax
import jax.numpy as jnp
import numpy as np
from jax.experimental import pallas as pl
from jax.experimental.pallas import tpu as pltpu


def _vmem_limit_bytes():
    # Half of physical VMEM: v5e/v6e (128 MiB) -> 64 MiB, v7x (64 MiB) -> 32 MiB.
    try:
        cap = int(pltpu.get_tpu_info().vmem_capacity_bytes)
        return int(min(max(cap // 2, 32 * 1024 * 1024), 100 * 1024 * 1024))
    except Exception:
        return 32 * 1024 * 1024


VMEM_LIMIT_BYTES = _vmem_limit_bytes()


# ---------------------------------------------------------------------------
# Kernel 1a: per-topic softmax statistics of the beta logits in [K, V] layout.
#   logit[k, v] = (Wa @ rho^T)[k, v]            (vocab on the lane axis)
#   m[k]    = max_v logit[k, v]
#   invZ[k] = 1 / sum_v exp(logit[k, v] - m[k])
# Online max/sum accumulation across vocab tiles (grid = (nV,), "arbitrary").
# ---------------------------------------------------------------------------
def beta_stats_kernel(wa_ref, rhot_ref, m_ref, invz_ref, m_acc, s_acc):
    j = pl.program_id(0)

    @pl.when(j == 0)
    def _():
        m_acc[...] = jnp.full_like(m_acc, -jnp.inf)
        s_acc[...] = jnp.zeros_like(s_acc)

    logit = jnp.dot(wa_ref[...], rhot_ref[...],
                    preferred_element_type=jnp.float32)            # [K, TV] f32
    m_new = jnp.maximum(m_acc[...],
                        jnp.max(logit, axis=-1, keepdims=True))    # [K, 1]
    s_acc[...] = (s_acc[...] * jnp.exp(m_acc[...] - m_new)
                  + jnp.sum(jnp.exp(logit - m_new), axis=-1, keepdims=True))
    m_acc[...] = m_new

    @pl.when(j == pl.num_programs(0) - 1)
    def _():
        m_ref[...] = m_acc[...]
        invz_ref[...] = 1.0 / s_acc[...]


# ---------------------------------------------------------------------------
# Kernel 1b: materialize beta[K, V] in bf16 (lane-dense), one vocab tile per
# grid step:  beta[k, v] = exp(logit[k, v] - m[k]) * invZ[k].
# Each step writes an independent output tile -> "parallel".
# ---------------------------------------------------------------------------
def beta_materialize_kernel(wa_ref, rhot_ref, m_ref, invz_ref, beta_ref):
    logit = jnp.dot(wa_ref[...], rhot_ref[...],
                    preferred_element_type=jnp.float32)            # [K, TV] f32
    beta_ref[...] = (jnp.exp(logit - m_ref[...])
                     * invz_ref[...]).astype(beta_ref.dtype)


# ---------------------------------------------------------------------------
# Kernel 2: encoder. Vocab-tiled reduction of Xn @ W1 (bf16 MXU, f32 VMEM acc),
# then MLP tail + fused mu|logsigma head + per-sample KL + theta softmax at the
# last vocab step. grid = (nB "parallel", nV "arbitrary").
# Xn streams in f32 (no wrapper cast); the tile is cast to bf16 in-kernel.
# ---------------------------------------------------------------------------
def encoder_kernel(xn_ref, w1_ref, b1_ref, w2_ref, b2_ref, wh_ref, bh_ref,
                   theta_ref, kld_ref, acc_ref):
    j = pl.program_id(1)

    @pl.when(j == 0)
    def _():
        acc_ref[...] = jnp.zeros_like(acc_ref)

    acc_ref[...] += jnp.dot(xn_ref[...].astype(jnp.bfloat16), w1_ref[...],
                            preferred_element_type=jnp.float32)

    @pl.when(j == pl.num_programs(1) - 1)
    def _():
        k = theta_ref.shape[-1]
        h1 = jnp.maximum(acc_ref[...] + b1_ref[...], 0.0)
        h2 = jnp.maximum(
            jnp.dot(h1, w2_ref[...], preferred_element_type=jnp.float32)
            + b2_ref[...], 0.0)
        # fused mu|logsigma head: a single [H, 2K] matmul, then slice
        head = (jnp.dot(h2, wh_ref[...], preferred_element_type=jnp.float32)
                + bh_ref[...])
        mu = head[:, :k]
        ls = head[:, k:]
        kld_ref[...] = -0.5 * jnp.sum(1.0 + ls - mu * mu - jnp.exp(ls),
                                      axis=-1, keepdims=True)
        zm = mu - jnp.max(mu, axis=-1, keepdims=True)
        ez = jnp.exp(zm)
        theta_ref[...] = ez / jnp.sum(ez, axis=-1, keepdims=True)


# ---------------------------------------------------------------------------
# Kernel 3: decode + reconstruction loss, streamed over vocab tiles of the
# pre-materialized bf16 beta. Fuses matmul/log/mul/row-sum per tile so no
# [B, V] intermediate is ever materialized. X streams in f32 directly.
# ---------------------------------------------------------------------------
def decode_kernel(x_ref, theta_ref, beta_ref, recon_ref, acc_ref):
    j = pl.program_id(1)

    @pl.when(j == 0)
    def _():
        acc_ref[...] = jnp.zeros_like(acc_ref)

    res = jnp.dot(theta_ref[...].astype(jnp.bfloat16), beta_ref[...],
                  preferred_element_type=jnp.float32)              # [TB, TV] f32
    preds = jnp.log(res + 1e-6)
    acc_ref[...] += jnp.sum(preds * x_ref[...], axis=-1, keepdims=True)

    @pl.when(j == pl.num_programs(1) - 1)
    def _():
        recon_ref[...] = -acc_ref[...]


# ---------------------------------------------------------------------------
# Parameter prep: done ONCE at setup time (not per forward call) — hoists the
# layout transposes, bf16 casts, and mu|logsigma head fusion out of the step.
# ---------------------------------------------------------------------------
def prepare_params(params):
    rho, Wa, W1, b1, W2, b2, Wmu, bmu, Wls, bls = params
    bf16, f32 = jnp.bfloat16, jnp.float32
    return {
        "rho_t": jnp.asarray(rho).T.astype(bf16),                       # [R, V]
        "wa": jnp.asarray(Wa).astype(bf16),                             # [K, R]
        "w1": jnp.asarray(W1).T.astype(bf16),                           # [V, H]
        "b1": jnp.asarray(b1)[None, :].astype(f32),                     # [1, H]
        "w2": jnp.asarray(W2).T.astype(f32),                            # [H, H]
        "b2": jnp.asarray(b2)[None, :].astype(f32),                     # [1, H]
        "w_head": jnp.concatenate(
            [jnp.asarray(Wmu).T, jnp.asarray(Wls).T], axis=1).astype(f32),  # [H, 2K]
        "b_head": jnp.concatenate(
            [jnp.asarray(bmu), jnp.asarray(bls)])[None, :].astype(f32),     # [1, 2K]
    }


@functools.partial(jax.jit, static_argnames=("tb", "tv", "tv_beta"))
def etm_forward(X, Xn, prepped, *, tb=128, tv=512, tv_beta=2048):
    B, V = X.shape
    H = prepped["w2"].shape[0]
    K, R = prepped["wa"].shape
    tb = min(tb, B)
    tv = min(tv, V)
    tv_beta = min(tv_beta, V)
    assert B % tb == 0 and V % tv == 0 and V % tv_beta == 0, \
        "demo requires divisible tile sizes"
    nb, nv, nvb = B // tb, V // tv, V // tv_beta

    # ---- beta softmax statistics (per-topic max and 1/Z) over the vocab axis ----
    m, invz = pl.pallas_call(
        beta_stats_kernel,
        grid=(nvb,),
        in_specs=[pl.BlockSpec((K, R), lambda j: (0, 0)),
                  pl.BlockSpec((R, tv_beta), lambda j: (0, j))],
        out_specs=(pl.BlockSpec((K, 1), lambda j: (0, 0)),
                   pl.BlockSpec((K, 1), lambda j: (0, 0))),
        out_shape=(jax.ShapeDtypeStruct((K, 1), jnp.float32),
                   jax.ShapeDtypeStruct((K, 1), jnp.float32)),
        scratch_shapes=[pltpu.VMEM((K, 1), jnp.float32),
                        pltpu.VMEM((K, 1), jnp.float32)],
        compiler_params=pltpu.CompilerParams(
            dimension_semantics=("arbitrary",),
            vmem_limit_bytes=VMEM_LIMIT_BYTES),
        cost_estimate=pl.CostEstimate(
            flops=int(2 * K * R * V), transcendentals=int(K * V),
            bytes_accessed=int(2 * R * V + 2 * K * R + 8 * K)),
    )(prepped["wa"], prepped["rho_t"])

    # ---- materialize beta[K, V] in bf16 once (rho^T read from HBM once more) ----
    beta = pl.pallas_call(
        beta_materialize_kernel,
        grid=(nvb,),
        in_specs=[pl.BlockSpec((K, R), lambda j: (0, 0)),
                  pl.BlockSpec((R, tv_beta), lambda j: (0, j)),
                  pl.BlockSpec((K, 1), lambda j: (0, 0)),
                  pl.BlockSpec((K, 1), lambda j: (0, 0))],
        out_specs=pl.BlockSpec((K, tv_beta), lambda j: (0, j)),
        out_shape=jax.ShapeDtypeStruct((K, V), jnp.bfloat16),
        compiler_params=pltpu.CompilerParams(
            dimension_semantics=("parallel",),
            vmem_limit_bytes=VMEM_LIMIT_BYTES),
        cost_estimate=pl.CostEstimate(
            flops=int(2 * K * R * V + 2 * K * V), transcendentals=int(K * V),
            bytes_accessed=int(2 * R * V + 2 * K * V + 2 * K * R + 8 * K)),
    )(prepped["wa"], prepped["rho_t"], m, invz)

    # ---- encoder: vocab-tiled Xn @ W1 reduction, theta + per-sample KL ----
    theta, kld_rows = pl.pallas_call(
        encoder_kernel,
        grid=(nb, nv),
        in_specs=[
            pl.BlockSpec((tb, tv), lambda i, j: (i, j)),     # Xn tile (f32)
            pl.BlockSpec((tv, H), lambda i, j: (j, 0)),      # W1 tile (bf16)
            pl.BlockSpec((1, H), lambda i, j: (0, 0)),       # b1
            pl.BlockSpec((H, H), lambda i, j: (0, 0)),       # W2
            pl.BlockSpec((1, H), lambda i, j: (0, 0)),       # b2
            pl.BlockSpec((H, 2 * K), lambda i, j: (0, 0)),   # Wmu|Wls fused
            pl.BlockSpec((1, 2 * K), lambda i, j: (0, 0)),   # bmu|bls fused
        ],
        out_specs=(pl.BlockSpec((tb, K), lambda i, j: (i, 0)),
                   pl.BlockSpec((tb, 1), lambda i, j: (i, 0))),
        out_shape=(jax.ShapeDtypeStruct((B, K), jnp.float32),
                   jax.ShapeDtypeStruct((B, 1), jnp.float32)),
        scratch_shapes=[pltpu.VMEM((tb, H), jnp.float32)],
        compiler_params=pltpu.CompilerParams(
            dimension_semantics=("parallel", "arbitrary"),
            vmem_limit_bytes=VMEM_LIMIT_BYTES),
        cost_estimate=pl.CostEstimate(
            flops=int(2 * B * V * H + 2 * B * H * H + 4 * B * H * K),
            transcendentals=int(3 * B * K),
            bytes_accessed=int(4 * B * V + 2 * nb * V * H
                               + 4 * (H * H + 2 * H * K + 3 * H)
                               + 4 * B * (K + 1))),
    )(Xn, prepped["w1"], prepped["b1"], prepped["w2"], prepped["b2"],
      prepped["w_head"], prepped["b_head"])

    # ---- decode + reconstruction loss, streamed over bf16 beta vocab tiles ----
    recon_rows = pl.pallas_call(
        decode_kernel,
        grid=(nb, nv),
        in_specs=[
            pl.BlockSpec((tb, tv), lambda i, j: (i, j)),     # X tile (f32)
            pl.BlockSpec((tb, K), lambda i, j: (i, 0)),      # theta tile
            pl.BlockSpec((K, tv), lambda i, j: (0, j)),      # beta tile (bf16)
        ],
        out_specs=pl.BlockSpec((tb, 1), lambda i, j: (i, 0)),
        out_shape=jax.ShapeDtypeStruct((B, 1), jnp.float32),
        scratch_shapes=[pltpu.VMEM((tb, 1), jnp.float32)],
        compiler_params=pltpu.CompilerParams(
            dimension_semantics=("parallel", "arbitrary"),
            vmem_limit_bytes=VMEM_LIMIT_BYTES),
        cost_estimate=pl.CostEstimate(
            flops=int(2 * B * K * V + 3 * B * V),
            transcendentals=int(B * V),
            bytes_accessed=int(4 * B * V + 2 * nb * K * V + 4 * B * (K + 1))),
    )(X, theta, beta)

    # Tiny cross-tile means finished in XLA (correct under megacore batch sharding).
    recon = jnp.mean(recon_rows)
    kld = jnp.mean(kld_rows)
    return recon, kld


def etm_reference(X, Xn, params):
    rho, Wa, W1, b1, W2, b2, Wmu, bmu, Wls, bls = params
    h1 = jax.nn.relu(Xn @ W1.T + b1)
    h2 = jax.nn.relu(h1 @ W2.T + b2)
    mu = h2 @ Wmu.T + bmu
    ls = h2 @ Wls.T + bls
    kld = jnp.mean(-0.5 * jnp.sum(1 + ls - mu ** 2 - jnp.exp(ls), axis=-1))
    theta = jax.nn.softmax(mu, axis=-1)
    beta = jax.nn.softmax(rho @ Wa.T, axis=0).T
    preds = jnp.log(theta @ beta + 1e-6)
    recon = jnp.mean(-jnp.sum(preds * X, axis=1))
    return recon, kld


if __name__ == "__main__":
    # Small, shape-consistent config that still exercises all grid axes:
    # bsz=256, vocab=1024, t_hidden=128, rho_size=64, num_topics=32;
    # tiles tb=128 (nb=2, even -> both v7x cores busy), tv=512, tv_beta=1024.
    B, V, H, R, K = 256, 1024, 128, 64, 32
    TB, TV, TVB = 128, 512, 1024

    key = jax.random.PRNGKey(0)
    keys = jax.random.split(key, 12)

    rho = jax.random.normal(keys[0], (V, R), jnp.float32)          # nn.Parameter
    Wa  = 0.1 * jax.random.normal(keys[1], (K, R), jnp.float32)    # alphas (no bias)
    W1  = 0.1 * jax.random.normal(keys[2], (H, V), jnp.float32)    # q_theta[0]
    b1  = 0.1 * jax.random.normal(keys[3], (H,), jnp.float32)
    W2  = 0.1 * jax.random.normal(keys[4], (H, H), jnp.float32)    # q_theta[2]
    b2  = 0.1 * jax.random.normal(keys[5], (H,), jnp.float32)
    Wmu = 0.1 * jax.random.normal(keys[6], (K, H), jnp.float32)    # mu_q_theta
    bmu = 0.1 * jax.random.normal(keys[7], (K,), jnp.float32)
    Wls = 0.1 * jax.random.normal(keys[8], (K, H), jnp.float32)    # logsigma_q_theta
    bls = 0.1 * jax.random.normal(keys[9], (K,), jnp.float32)
    params = (rho, Wa, W1, b1, W2, b2, Wmu, bmu, Wls, bls)

    # Bag-of-words counts and their row-normalized version.
    X = jnp.floor(4.0 * jax.random.uniform(keys[10], (B, V), jnp.float32))
    Xn = X / jnp.maximum(jnp.sum(X, axis=1, keepdims=True), 1.0)

    prepped = prepare_params(params)   # one-time layout/dtype prep

    recon, kld = etm_forward(X, Xn, prepped, tb=TB, tv=TV, tv_beta=TVB)
    jax.block_until_ready((recon, kld))

    recon_ref, kld_ref = etm_reference(X, Xn, params)
    # bf16 MXU operands with f32 accumulation -> slightly looser tolerances.
    np.testing.assert_allclose(np.array(recon), np.array(recon_ref),
                               rtol=2e-2, atol=2e-2)
    np.testing.assert_allclose(np.array(kld), np.array(kld_ref),
                               rtol=2e-2, atol=2e-2)

    print("KERNEL_OK")
</pallas_src>

<mosaic_0001>
module attributes {stable_mosaic.version = 11 : i64} {
  func.func @beta_materialize_kernel(%arg0: i32, %arg1: memref<32x64xbf16, #tpu.memory_space<vmem>>, %arg2: memref<64x1024xbf16, #tpu.memory_space<vmem>>, %arg3: memref<32x1xf32, #tpu.memory_space<vmem>>, %arg4: memref<32x1xf32, #tpu.memory_space<vmem>>, %arg5: memref<32x1024xbf16, #tpu.memory_space<vmem>>) attributes {dimension_semantics = [#tpu.dimension_semantics<parallel>], iteration_bounds = array<i64: 1>, scalar_prefetch = 0 : i64, scratch_operands = 0 : i64, tpu.core_type = #tpu.core_type<tc>, window_params = [{pipeline_mode = #tpu.pipeline_mode<synchronous>, transform_indices = @transform_0, window_bounds = array<i64: 32, 64>}, {transform_indices = @transform_1, window_bounds = array<i64: 64, 1024>}, {pipeline_mode = #tpu.pipeline_mode<synchronous>, transform_indices = @transform_2, window_bounds = array<i64: 32, 1>}, {pipeline_mode = #tpu.pipeline_mode<synchronous>, transform_indices = @transform_3, window_bounds = array<i64: 32, 1>}, {transform_indices = @transform_4, window_bounds = array<i64: 32, 1024>}]} {
    %c0 = arith.constant 0 : index
    %c0_0 = arith.constant 0 : index
    %0 = vector.load %arg1[%c0, %c0_0] : memref<32x64xbf16, #tpu.memory_space<vmem>>, vector<32x64xbf16>
    %c0_1 = arith.constant 0 : index
    %c0_2 = arith.constant 0 : index
    %1 = vector.load %arg2[%c0_1, %c0_2] : memref<64x1024xbf16, #tpu.memory_space<vmem>>, vector<64x1024xbf16>
    %cst = arith.constant dense<0.000000e+00> : vector<32x1024xf32>
    %2 = tpu.matmul %0, %1, %cst {dimension_numbers = #tpu.dot_dimension_numbers<[1], [0], [0], [1], [0, 0, 1, 1], [], []>} : vector<32x64xbf16>, vector<64x1024xbf16>, vector<32x1024xf32> -> vector<32x1024xf32>
    %c0_3 = arith.constant 0 : index
    %c0_4 = arith.constant 0 : index
    %3 = vector.load %arg3[%c0_3, %c0_4] : memref<32x1xf32, #tpu.memory_space<vmem>>, vector<32x1xf32>
    %4 = vector.broadcast %3 : vector<32x1xf32> to vector<32x1024xf32>
    %5 = arith.subf %2, %4 : vector<32x1024xf32>
    %6 = math.exp %5 : vector<32x1024xf32>
    %c0_5 = arith.constant 0 : index
    %c0_6 = arith.constant 0 : index
    %7 = vector.load %arg4[%c0_5, %c0_6] : memref<32x1xf32, #tpu.memory_space<vmem>>, vector<32x1xf32>
    %8 = vector.broadcast %7 : vector<32x1xf32> to vector<32x1024xf32>
    %9 = arith.mulf %6, %8 : vector<32x1024xf32>
    %10 = arith.truncf %9 : vector<32x1024xf32> to vector<32x1024xbf16>
    %c0_7 = arith.constant 0 : index
    %c0_8 = arith.constant 0 : index
    %11 = vector.load %arg5[%c0_7, %c0_8] : memref<32x1024xbf16, #tpu.memory_space<vmem>>, vector<32x1024xbf16>
    tpu.vector_store %arg5[%c0_7, %c0_8], %10 {strides = array<i32>} : memref<32x1024xbf16, #tpu.memory_space<vmem>>, vector<32x1024xbf16>,
    return
  }
  func.func @transform_0(%arg0: i32) -> (i32, i32) {
    %c0_i32 = arith.constant 0 : i32
    %c0_i32_0 = arith.constant 0 : i32
    %c0_i32_1 = arith.constant 0 : i32
    return %c0_i32, %c0_i32_0 : i32, i32
  }
  func.func @transform_1(%arg0: i32) -> (i32, i32) {
    %c0_i32 = arith.constant 0 : i32
    %c0_i32_0 = arith.constant 0 : i32
    return %c0_i32, %arg0 : i32, i32
  }
  func.func @transform_2(%arg0: i32) -> (i32, i32) {
    %c0_i32 = arith.constant 0 : i32
    %c0_i32_0 = arith.constant 0 : i32
    %c0_i32_1 = arith.constant 0 : i32
    return %c0_i32, %c0_i32_0 : i32, i32
  }
  func.func @transform_3(%arg0: i32) -> (i32, i32) {
    %c0_i32 = arith.constant 0 : i32
    %c0_i32_0 = arith.constant 0 : i32
    %c0_i32_1 = arith.constant 0 : i32
    return %c0_i32, %c0_i32_0 : i32, i32
  }
  func.func @transform_4(%arg0: i32) -> (i32, i32) {
    %c0_i32 = arith.constant 0 : i32
    %c0_i32_0 = arith.constant 0 : i32
    return %c0_i32, %arg0 : i32, i32
  }
}

module attributes {stable_mosaic.version = 11 : i64} {
  func.func @encoder_kernel(%arg0: i32, %arg1: i32, %arg2: memref<128x512xf32, #tpu.memory_space<vmem>>, %arg3: memref<512x128xbf16, #tpu.memory_space<vmem>>, %arg4: memref<1x128xf32, #tpu.memory_space<vmem>>, %arg5: memref<128x128xf32, #tpu.memory_space<vmem>>, %arg6: memref<1x128xf32, #tpu.memory_space<vmem>>, %arg7: memref<128x64xf32, #tpu.memory_space<vmem>>, %arg8: memref<1x64xf32, #tpu.memory_space<vmem>>, %arg9: memref<128x32xf32, #tpu.memory_space<vmem>>, %arg10: memref<128x1xf32, #tpu.memory_space<vmem>>, %arg11: memref<128x128xf32, #tpu.memory_space<vmem>>) attributes {dimension_semantics = [#tpu.dimension_semantics<parallel>, #tpu.dimension_semantics<arbitrary>], iteration_bounds = array<i64: 2, 2>, scalar_prefetch = 0 : i64, scratch_operands = 1 : i64, tpu.core_type = #tpu.core_type<tc>, window_params = [{transform_indices = @transform_0, window_bounds = array<i64: 128, 512>}, {transform_indices = @transform_1, window_bounds = array<i64: 512, 128>}, {pipeline_mode = #tpu.pipeline_mode<synchronous>, transform_indices = @transform_2, window_bounds = array<i64: 1, 128>}, {pipeline_mode = #tpu.pipeline_mode<synchronous>, transform_indices = @transform_3, window_bounds = array<i64: 128, 128>}, {pipeline_mode = #tpu.pipeline_mode<synchronous>, transform_indices = @transform_4, window_bounds = array<i64: 1, 128>}, {pipeline_mode = #tpu.pipeline_mode<synchronous>, transform_indices = @transform_5, window_bounds = array<i64: 128, 64>}, {pipeline_mode = #tpu.pipeline_mode<synchronous>, transform_indices = @transform_6, window_bounds = array<i64: 1, 64>}, {transform_indices = @transform_7, window_bounds = array<i64: 128, 32>}, {transform_indices = @transform_8, window_bounds = array<i64: 128, 1>}]} {
    %c0_i32 = arith.constant 0 : i32
    %0 = arith.cmpi eq, %arg1, %c0_i32 : i32
    %1 = arith.extui %0 : i1 to i32
    %c0_i32_0 = arith.constant 0 : i32
    %2 = arith.cmpi ne, %1, %c0_i32_0 : i32
    scf.if %2 {
      %cst_9 = arith.constant 0.000000e+00 : f32
      %13 = vector.broadcast %cst_9 : f32 to vector<128x128xf32>
      %c0_10 = arith.constant 0 : index
      %c0_11 = arith.constant 0 : index
      %14 = vector.load %arg11[%c0_10, %c0_11] : memref<128x128xf32, #tpu.memory_space<vmem>>, vector<128x128xf32>
      tpu.vector_store %arg11[%c0_10, %c0_11], %13 {strides = array<i32>} : memref<128x128xf32, #tpu.memory_space<vmem>>, vector<128x128xf32>,
    } else {
    }
    %c0 = arith.constant 0 : index
    %c0_1 = arith.constant 0 : index
    %3 = vector.load %arg11[%c0, %c0_1] : memref<128x128xf32, #tpu.memory_space<vmem>>, vector<128x128xf32>
    %c0_2 = arith.constant 0 : index
    %c0_3 = arith.constant 0 : index
    %4 = vector.load %arg2[%c0_2, %c0_3] : memref<128x512xf32, #tpu.memory_space<vmem>>, vector<128x512xf32>
    %5 = arith.truncf %4 : vector<128x512xf32> to vector<128x512xbf16>
    %c0_4 = arith.constant 0 : index
    %c0_5 = arith.constant 0 : index
    %6 = vector.load %arg3[%c0_4, %c0_5] : memref<512x128xbf16, #tpu.memory_space<vmem>>, vector<512x128xbf16>
    %cst = arith.constant dense<0.000000e+00> : vector<128x128xf32>
    %7 = tpu.matmul %5, %6, %cst {dimension_numbers = #tpu.dot_dimension_numbers<[1], [0], [0], [1], [0, 0, 1, 1], [], []>} : vector<128x512xbf16>, vector<512x128xbf16>, vector<128x128xf32> -> vector<128x128xf32>
    %8 = arith.addf %3, %7 : vector<128x128xf32>
    %c0_6 = arith.constant 0 : index
    %c0_7 = arith.constant 0 : index
    %9 = vector.load %arg11[%c0_6, %c0_7] : memref<128x128xf32, #tpu.memory_space<vmem>>, vector<128x128xf32>
    tpu.vector_store %arg11[%c0_6, %c0_7], %8 {strides = array<i32>} : memref<128x128xf32, #tpu.memory_space<vmem>>, vector<128x128xf32>,
    %c1_i32 = arith.constant 1 : i32
    %10 = arith.cmpi eq, %arg1, %c1_i32 : i32
    %11 = arith.extui %10 : i1 to i32
    %c0_i32_8 = arith.constant 0 : i32
    %12 = arith.cmpi ne, %11, %c0_i32_8 : i32
    scf.if %12 {
      %c0_9 = arith.constant 0 : index
      %c0_10 = arith.constant 0 : index
      %13 = vector.load %arg11[%c0_9, %c0_10] : memref<128x128xf32, #tpu.memory_space<vmem>>, vector<128x128xf32>
      %c0_11 = arith.constant 0 : index
      %c0_12 = arith.constant 0 : index
      %14 = vector.load %arg4[%c0_11, %c0_12] : memref<1x128xf32, #tpu.memory_space<vmem>>, vector<1x128xf32>
      %15 = vector.broadcast %14 : vector<1x128xf32> to vector<128x128xf32>
      %16 = arith.addf %13, %15 : vector<128x128xf32>
      %cst_13 = arith.constant 0.000000e+00 : f32
      %17 = vector.broadcast %cst_13 : f32 to vector<128x128xf32>
      %18 = arith.maximumf %16, %17 : vector<128x128xf32>
      %c0_14 = arith.constant 0 : index
      %c0_15 = arith.constant 0 : index
      %19 = vector.load %arg5[%c0_14, %c0_15] : memref<128x128xf32, #tpu.memory_space<vmem>>, vector<128x128xf32>
      %cst_16 = arith.constant dense<0.000000e+00> : vector<128x128xf32>
      %20 = tpu.matmul %18, %19, %cst_16 {dimension_numbers = #tpu.dot_dimension_numbers<[1], [0], [0], [1], [0, 0, 1, 1], [], []>} : vector<128x128xf32>, vector<128x128xf32>, vector<128x128xf32> -> vector<128x128xf32>
      %c0_17 = arith.constant 0 : index
      %c0_18 = arith.constant 0 : index
      %21 = vector.load %arg6[%c0_17, %c0_18] : memref<1x128xf32, #tpu.memory_space<vmem>>, vector<1x128xf32>
      %22 = vector.broadcast %21 : vector<1x128xf32> to vector<128x128xf32>
      %23 = arith.addf %20, %22 : vector<128x128xf32>
      %cst_19 = arith.constant 0.000000e+00 : f32
      %24 = vector.broadcast %cst_19 : f32 to vector<128x128xf32>
      %25 = arith.maximumf %23, %24 : vector<128x128xf32>
      %c0_20 = arith.constant 0 : index
      %c0_21 = arith.constant 0 : index
      %26 = vector.load %arg7[%c0_20, %c0_21] : memref<128x64xf32, #tpu.memory_space<vmem>>, vector<128x64xf32>
      %cst_22 = arith.constant dense<0.000000e+00> : vector<128x64xf32>
      %27 = tpu.matmul %25, %26, %cst_22 {dimension_numbers = #tpu.dot_dimension_numbers<[1], [0], [0], [1], [0, 0, 1, 1], [], []>} : vector<128x128xf32>, vector<128x64xf32>, vector<128x64xf32> -> vector<128x64xf32>
      %c0_23 = arith.constant 0 : index
      %c0_24 = arith.constant 0 : index
      %28 = vector.load %arg8[%c0_23, %c0_24] : memref<1x64xf32, #tpu.memory_space<vmem>>, vector<1x64xf32>
      %29 = vector.broadcast %28 : vector<1x64xf32> to vector<128x64xf32>
      %30 = arith.addf %27, %29 : vector<128x64xf32>
      %31 = vector.extract_strided_slice %30 {offsets = [0, 0], sizes = [128, 32], strides = [1, 1]} : vector<128x64xf32> to vector<128x32xf32>
      %32 = vector.extract_strided_slice %30 {offsets = [0, 32], sizes = [128, 32], strides = [1, 1]} : vector<128x64xf32> to vector<128x32xf32>
      %cst_25 = arith.constant 1.000000e+00 : f32
      %33 = vector.broadcast %cst_25 : f32 to vector<128x32xf32>
      %34 = arith.addf %33, %32 : vector<128x32xf32>
      %35 = arith.mulf %31, %31 : vector<128x32xf32>
      %36 = arith.subf %34, %35 : vector<128x32xf32>
      %37 = math.exp %32 : vector<128x32xf32>
      %38 = arith.subf %36, %37 : vector<128x32xf32>
      %cst_26 = arith.constant dense<0.000000e+00> : vector<128xf32>
      %39 = vector.multi_reduction <add>, %38, %cst_26 [1] : vector<128x32xf32> to vector<128xf32>
      %40 = vector.shape_cast %39 : vector<128xf32> to vector<128x1xf32>
      %cst_27 = arith.constant -5.000000e-01 : f32
      %41 = vector.broadcast %cst_27 : f32 to vector<128x1xf32>
      %42 = arith.mulf %41, %40 : vector<128x1xf32>
      %c0_28 = arith.constant 0 : index
      %c0_29 = arith.constant 0 : index
      %43 = vector.load %arg10[%c0_28, %c0_29] : memref<128x1xf32, #tpu.memory_space<vmem>>, vector<128x1xf32>
      tpu.vector_store %arg10[%c0_28, %c0_29], %42 {strides = array<i32>} : memref<128x1xf32, #tpu.memory_space<vmem>>, vector<128x1xf32>,
      %cst_30 = arith.constant dense<0xFF800000> : vector<128xf32>
      %44 = vector.multi_reduction <maximumf>, %31, %cst_30 [1] : vector<128x32xf32> to vector<128xf32>
      %45 = vector.shape_cast %44 : vector<128xf32> to vector<128x1xf32>
      %46 = vector.broadcast %45 : vector<128x1xf32> to vector<128x32xf32>
      %47 = arith.subf %31, %46 : vector<128x32xf32>
      %48 = math.exp %47 : vector<128x32xf32>
      %cst_31 = arith.constant dense<0.000000e+00> : vector<128xf32>
      %49 = vector.multi_reduction <add>, %48, %cst_31 [1] : vector<128x32xf32> to vector<128xf32>
      %50 = vector.shape_cast %49 : vector<128xf32> to vector<128x1xf32>
      %51 = vector.broadcast %50 : vector<128x1xf32> to vector<128x32xf32>
      %52 = arith.divf %48, %51 : vector<128x32xf32>
      %c0_32 = arith.constant 0 : index
      %c0_33 = arith.constant 0 : index
      %53 = vector.load %arg9[%c0_32, %c0_33] : memref<128x32xf32, #tpu.memory_space<vmem>>, vector<128x32xf32>
      tpu.vector_store %arg9[%c0_32, %c0_33], %52 {strides = array<i32>} : memref<128x32xf32, #tpu.memory_space<vmem>>, vector<128x32xf32>,
    } else {
    }
    return
  }
  func.func @transform_0(%arg0: i32, %arg1: i32) -> (i32, i32) {
    %c0_i32 = arith.constant 0 : i32
    return %arg0, %arg1 : i32, i32
  }
  func.func @transform_1(%arg0: i32, %arg1: i32) -> (i32, i32) {
    %c0_i32 = arith.constant 0 : i32
    %c0_i32_0 = arith.constant 0 : i32
    return %arg1, %c0_i32 : i32, i32
  }
  func.func @transform_2(%arg0: i32, %arg1: i32) -> (i32, i32) {
    %c0_i32 = arith.constant 0 : i32
    %c0_i32_0 = arith.constant 0 : i32
    %c0_i32_1 = arith.constant 0 : i32
    return %c0_i32, %c0_i32_0 : i32, i32
  }
  func.func @transform_3(%arg0: i32, %arg1: i32) -> (i32, i32) {
    %c0_i32 = arith.constant 0 : i32
    %c0_i32_0 = arith.constant 0 : i32
    %c0_i32_1 = arith.constant 0 : i32
    return %c0_i32, %c0_i32_0 : i32, i32
  }
  func.func @transform_4(%arg0: i32, %arg1: i32) -> (i32, i32) {
    %c0_i32 = arith.constant 0 : i32
    %c0_i32_0 = arith.constant 0 : i32
    %c0_i32_1 = arith.constant 0 : i32
    return %c0_i32, %c0_i32_0 : i32, i32
  }
  func.func @transform_5(%arg0: i32, %arg1: i32) -> (i32, i32) {
    %c0_i32 = arith.constant 0 : i32
    %c0_i32_0 = arith.constant 0 : i32
    %c0_i32_1 = arith.constant 0 : i32
    return %c0_i32, %c0_i32_0 : i32, i32
  }
  func.func @transform_6(%arg0: i32, %arg1: i32) -> (i32, i32) {
    %c0_i32 = arith.constant 0 : i32
    %c0_i32_0 = arith.constant 0 : i32
    %c0_i32_1 = arith.constant 0 : i32
    return %c0_i32, %c0_i32_0 : i32, i32
  }
  func.func @transform_7(%arg0: i32, %arg1: i32) -> (i32, i32) {
    %c0_i32 = arith.constant 0 : i32
    %c0_i32_0 = arith.constant 0 : i32
    return %arg0, %c0_i32 : i32, i32
  }
  func.func @transform_8(%arg0: i32, %arg1: i32) -> (i32, i32) {
    %c0_i32 = arith.constant 0 : i32
    %c0_i32_0 = arith.constant 0 : i32
    return %arg0, %c0_i32 : i32, i32
  }
}

module attributes {stable_mosaic.version = 11 : i64} {
  func.func @beta_stats_kernel(%arg0: i32, %arg1: memref<32x64xbf16, #tpu.memory_space<vmem>>, %arg2: memref<64x1024xbf16, #tpu.memory_space<vmem>>, %arg3: memref<32x1xf32, #tpu.memory_space<vmem>>, %arg4: memref<32x1xf32, #tpu.memory_space<vmem>>, %arg5: memref<32x1xf32, #tpu.memory_space<vmem>>, %arg6: memref<32x1xf32, #tpu.memory_space<vmem>>) attributes {dimension_semantics = [#tpu.dimension_semantics<arbitrary>], iteration_bounds = array<i64: 1>, scalar_prefetch = 0 : i64, scratch_operands = 2 : i64, tpu.core_type = #tpu.core_type<tc>, window_params = [{pipeline_mode = #tpu.pipeline_mode<synchronous>, transform_indices = @transform_0, window_bounds = array<i64: 32, 64>}, {transform_indices = @transform_1, window_bounds = array<i64: 64, 1024>}, {pipeline_mode = #tpu.pipeline_mode<synchronous>, transform_indices = @transform_2, window_bounds = array<i64: 32, 1>}, {pipeline_mode = #tpu.pipeline_mode<synchronous>, transform_indices = @transform_3, window_bounds = array<i64: 32, 1>}]} {
    %c0_i32 = arith.constant 0 : i32
    %0 = arith.cmpi eq, %arg0, %c0_i32 : i32
    %1 = arith.extui %0 : i1 to i32
    %c0_i32_0 = arith.constant 0 : i32
    %2 = arith.cmpi ne, %1, %c0_i32_0 : i32
    scf.if %2 {
      %cst_18 = arith.constant 0xFF800000 : f32
      %26 = vector.broadcast %cst_18 : f32 to vector<32x1xf32>
      %c0_19 = arith.constant 0 : index
      %c0_20 = arith.constant 0 : index
      %27 = vector.load %arg5[%c0_19, %c0_20] : memref<32x1xf32, #tpu.memory_space<vmem>>, vector<32x1xf32>
      tpu.vector_store %arg5[%c0_19, %c0_20], %26 {strides = array<i32>} : memref<32x1xf32, #tpu.memory_space<vmem>>, vector<32x1xf32>,
      %cst_21 = arith.constant 0.000000e+00 : f32
      %28 = vector.broadcast %cst_21 : f32 to vector<32x1xf32>
      %c0_22 = arith.constant 0 : index
      %c0_23 = arith.constant 0 : index
      %29 = vector.load %arg6[%c0_22, %c0_23] : memref<32x1xf32, #tpu.memory_space<vmem>>, vector<32x1xf32>
      tpu.vector_store %arg6[%c0_22, %c0_23], %28 {strides = array<i32>} : memref<32x1xf32, #tpu.memory_space<vmem>>, vector<32x1xf32>,
    } else {
    }
    %c0 = arith.constant 0 : index
    %c0_1 = arith.constant 0 : index
    %3 = vector.load %arg1[%c0, %c0_1] : memref<32x64xbf16, #tpu.memory_space<vmem>>, vector<32x64xbf16>
    %c0_2 = arith.constant 0 : index
    %c0_3 = arith.constant 0 : index
    %4 = vector.load %arg2[%c0_2, %c0_3] : memref<64x1024xbf16, #tpu.memory_space<vmem>>, vector<64x1024xbf16>
    %cst = arith.constant dense<0.000000e+00> : vector<32x1024xf32>
    %5 = tpu.matmul %3, %4, %cst {dimension_numbers = #tpu.dot_dimension_numbers<[1], [0], [0], [1], [0, 0, 1, 1], [], []>} : vector<32x64xbf16>, vector<64x1024xbf16>, vector<32x1024xf32> -> vector<32x1024xf32>
    %c0_4 = arith.constant 0 : index
    %c0_5 = arith.constant 0 : index
    %6 = vector.load %arg5[%c0_4, %c0_5] : memref<32x1xf32, #tpu.memory_space<vmem>>, vector<32x1xf32>
    %cst_6 = arith.constant dense<0xFF800000> : vector<32xf32>
    %7 = vector.multi_reduction <maximumf>, %5, %cst_6 [1] : vector<32x1024xf32> to vector<32xf32>
    %8 = vector.shape_cast %7 : vector<32xf32> to vector<32x1xf32>
    %9 = arith.maximumf %6, %8 : vector<32x1xf32>
    %c0_7 = arith.constant 0 : index
    %c0_8 = arith.constant 0 : index
    %10 = vector.load %arg6[%c0_7, %c0_8] : memref<32x1xf32, #tpu.memory_space<vmem>>, vector<32x1xf32>
    %c0_9 = arith.constant 0 : index
    %c0_10 = arith.constant 0 : index
    %11 = vector.load %arg5[%c0_9, %c0_10] : memref<32x1xf32, #tpu.memory_space<vmem>>, vector<32x1xf32>
    %12 = arith.subf %11, %9 : vector<32x1xf32>
    %13 = math.exp %12 : vector<32x1xf32>
    %14 = arith.mulf %10, %13 : vector<32x1xf32>
    %15 = vector.broadcast %9 : vector<32x1xf32> to vector<32x1024xf32>
    %16 = arith.subf %5, %15 : vector<32x1024xf32>
    %17 = math.exp %16 : vector<32x1024xf32>
    %cst_11 = arith.constant dense<0.000000e+00> : vector<32xf32>
    %18 = vector.multi_reduction <add>, %17, %cst_11 [1] : vector<32x1024xf32> to vector<32xf32>
    %19 = vector.shape_cast %18 : vector<32xf32> to vector<32x1xf32>
    %20 = arith.addf %14, %19 : vector<32x1xf32>
    %c0_12 = arith.constant 0 : index
    %c0_13 = arith.constant 0 : index
    %21 = vector.load %arg6[%c0_12, %c0_13] : memref<32x1xf32, #tpu.memory_space<vmem>>, vector<32x1xf32>
    tpu.vector_store %arg6[%c0_12, %c0_13], %20 {strides = array<i32>} : memref<32x1xf32, #tpu.memory_space<vmem>>, vector<32x1xf32>,
    %c0_14 = arith.constant 0 : index
    %c0_15 = arith.constant 0 : index
    %22 = vector.load %arg5[%c0_14, %c0_15] : memref<32x1xf32, #tpu.memory_space<vmem>>, vector<32x1xf32>
    tpu.vector_store %arg5[%c0_14, %c0_15], %9 {strides = array<i32>} : memref<32x1xf32, #tpu.memory_space<vmem>>, vector<32x1xf32>,
    %c0_i32_16 = arith.constant 0 : i32
    %23 = arith.cmpi eq, %arg0, %c0_i32_16 : i32
    %24 = arith.extui %23 : i1 to i32
    %c0_i32_17 = arith.constant 0 : i32
    %25 = arith.cmpi ne, %24, %c0_i32_17 : i32
    scf.if %25 {
      %c0_18 = arith.constant 0 : index
      %c0_19 = arith.constant 0 : index
      %26 = vector.load %arg5[%c0_18, %c0_19] : memref<32x1xf32, #tpu.memory_space<vmem>>, vector<32x1xf32>
      %c0_20 = arith.constant 0 : index
      %c0_21 = arith.constant 0 : index
      %27 = vector.load %arg3[%c0_20, %c0_21] : memref<32x1xf32, #tpu.memory_space<vmem>>, vector<32x1xf32>
      tpu.vector_store %arg3[%c0_20, %c0_21], %26 {strides = array<i32>} : memref<32x1xf32, #tpu.memory_space<vmem>>, vector<32x1xf32>,
      %c0_22 = arith.constant 0 : index
      %c0_23 = arith.constant 0 : index
      %28 = vector.load %arg6[%c0_22, %c0_23] : memref<32x1xf32, #tpu.memory_space<vmem>>, vector<32x1xf32>
      %cst_24 = arith.constant 1.000000e+00 : f32
      %29 = vector.broadcast %cst_24 : f32 to vector<32x1xf32>
      %30 = arith.divf %29, %28 : vector<32x1xf32>
      %c0_25 = arith.constant 0 : index
      %c0_26 = arith.constant 0 : index
      %31 = vector.load %arg4[%c0_25, %c0_26] : memref<32x1xf32, #tpu.memory_space<vmem>>, vector<32x1xf32>
      tpu.vector_store %arg4[%c0_25, %c0_26], %30 {strides = array<i32>} : memref<32x1xf32, #tpu.memory_space<vmem>>, vector<32x1xf32>,
    } else {
    }
    return
  }
  func.func @transform_0(%arg0: i32) -> (i32, i32) {
    %c0_i32 = arith.constant 0 : i32
    %c0_i32_0 = arith.constant 0 : i32
    %c0_i32_1 = arith.constant 0 : i32
    return %c0_i32, %c0_i32_0 : i32, i32
  }
  func.func @transform_1(%arg0: i32) -> (i32, i32) {
    %c0_i32 = arith.constant 0 : i32
    %c0_i32_0 = arith.constant 0 : i32
    return %c0_i32, %arg0 : i32, i32
  }
  func.func @transform_2(%arg0: i32) -> (i32, i32) {
    %c0_i32 = arith.constant 0 : i32
    %c0_i32_0 = arith.constant 0 : i32
    %c0_i32_1 = arith.constant 0 : i32
    return %c0_i32, %c0_i32_0 : i32, i32
  }
  func.func @transform_3(%arg0: i32) -> (i32, i32) {
    %c0_i32 = arith.constant 0 : i32
    %c0_i32_0 = arith.constant 0 : i32
    %c0_i32_1 = arith.constant 0 : i32
    return %c0_i32, %c0_i32_0 : i32, i32
  }
}

module attributes {stable_mosaic.version = 11 : i64} {
  func.func @decode_kernel(%arg0: i32, %arg1: i32, %arg2: memref<128x512xf32, #tpu.memory_space<vmem>>, %arg3: memref<128x32xf32, #tpu.memory_space<vmem>>, %arg4: memref<32x512xbf16, #tpu.memory_space<vmem>>, %arg5: memref<128x1xf32, #tpu.memory_space<vmem>>, %arg6: memref<128x1xf32, #tpu.memory_space<vmem>>) attributes {dimension_semantics = [#tpu.dimension_semantics<parallel>, #tpu.dimension_semantics<arbitrary>], iteration_bounds = array<i64: 2, 2>, scalar_prefetch = 0 : i64, scratch_operands = 1 : i64, tpu.core_type = #tpu.core_type<tc>, window_params = [{transform_indices = @transform_0, window_bounds = array<i64: 128, 512>}, {transform_indices = @transform_1, window_bounds = array<i64: 128, 32>}, {transform_indices = @transform_2, window_bounds = array<i64: 32, 512>}, {transform_indices = @transform_3, window_bounds = array<i64: 128, 1>}]} {
    %c0_i32 = arith.constant 0 : i32
    %0 = arith.cmpi eq, %arg1, %c0_i32 : i32
    %1 = arith.extui %0 : i1 to i32
    %c0_i32_0 = arith.constant 0 : i32
    %2 = arith.cmpi ne, %1, %c0_i32_0 : i32
    scf.if %2 {
      %cst_13 = arith.constant 0.000000e+00 : f32
      %20 = vector.broadcast %cst_13 : f32 to vector<128x1xf32>
      %c0_14 = arith.constant 0 : index
      %c0_15 = arith.constant 0 : index
      %21 = vector.load %arg6[%c0_14, %c0_15] : memref<128x1xf32, #tpu.memory_space<vmem>>, vector<128x1xf32>
      tpu.vector_store %arg6[%c0_14, %c0_15], %20 {strides = array<i32>} : memref<128x1xf32, #tpu.memory_space<vmem>>, vector<128x1xf32>,
    } else {
    }
    %c0 = arith.constant 0 : index
    %c0_1 = arith.constant 0 : index
    %3 = vector.load %arg3[%c0, %c0_1] : memref<128x32xf32, #tpu.memory_space<vmem>>, vector<128x32xf32>
    %4 = arith.truncf %3 : vector<128x32xf32> to vector<128x32xbf16>
    %c0_2 = arith.constant 0 : index
    %c0_3 = arith.constant 0 : index
    %5 = vector.load %arg4[%c0_2, %c0_3] : memref<32x512xbf16, #tpu.memory_space<vmem>>, vector<32x512xbf16>
    %cst = arith.constant dense<0.000000e+00> : vector<128x512xf32>
    %6 = tpu.matmul %4, %5, %cst {dimension_numbers = #tpu.dot_dimension_numbers<[1], [0], [0], [1], [0, 0, 1, 1], [], []>} : vector<128x32xbf16>, vector<32x512xbf16>, vector<128x512xf32> -> vector<128x512xf32>
    %cst_4 = arith.constant 9.99999997E-7 : f32
    %7 = vector.broadcast %cst_4 : f32 to vector<128x512xf32>
    %8 = arith.addf %6, %7 : vector<128x512xf32>
    %9 = math.log %8 : vector<128x512xf32>
    %c0_5 = arith.constant 0 : index
    %c0_6 = arith.constant 0 : index
    %10 = vector.load %arg6[%c0_5, %c0_6] : memref<128x1xf32, #tpu.memory_space<vmem>>, vector<128x1xf32>
    %c0_7 = arith.constant 0 : index
    %c0_8 = arith.constant 0 : index
    %11 = vector.load %arg2[%c0_7, %c0_8] : memref<128x512xf32, #tpu.memory_space<vmem>>, vector<128x512xf32>
    %12 = arith.mulf %9, %11 : vector<128x512xf32>
    %cst_9 = arith.constant dense<0.000000e+00> : vector<128xf32>
    %13 = vector.multi_reduction <add>, %12, %cst_9 [1] : vector<128x512xf32> to vector<128xf32>
    %14 = vector.shape_cast %13 : vector<128xf32> to vector<128x1xf32>
    %15 = arith.addf %10, %14 : vector<128x1xf32>
    %c0_10 = arith.constant 0 : index
    %c0_11 = arith.constant 0 : index
    %16 = vector.load %arg6[%c0_10, %c0_11] : memref<128x1xf32, #tpu.memory_space<vmem>>, vector<128x1xf32>
    tpu.vector_store %arg6[%c0_10, %c0_11], %15 {strides = array<i32>} : memref<128x1xf32, #tpu.memory_space<vmem>>, vector<128x1xf32>,
    %c1_i32 = arith.constant 1 : i32
    %17 = arith.cmpi eq, %arg1, %c1_i32 : i32
    %18 = arith.extui %17 : i1 to i32
    %c0_i32_12 = arith.constant 0 : i32
    %19 = arith.cmpi ne, %18, %c0_i32_12 : i32
    scf.if %19 {
      %c0_13 = arith.constant 0 : index
      %c0_14 = arith.constant 0 : index
      %20 = vector.load %arg6[%c0_13, %c0_14] : memref<128x1xf32, #tpu.memory_space<vmem>>, vector<128x1xf32>
      %cst_15 = arith.constant 0.000000e+00 : f32
      %21 = vector.broadcast %cst_15 : f32 to vector<128x1xf32>
      %22 = arith.subf %21, %20 : vector<128x1xf32>
      %c0_16 = arith.constant 0 : index
      %c0_17 = arith.constant 0 : index
      %23 = vector.load %arg5[%c0_16, %c0_17] : memref<128x1xf32, #tpu.memory_space<vmem>>, vector<128x1xf32>
      tpu.vector_store %arg5[%c0_16, %c0_17], %22 {strides = array<i32>} : memref<128x1xf32, #tpu.memory_space<vmem>>, vector<128x1xf32>,
    } else {
    }
    return
  }
  func.func @transform_0(%arg0: i32, %arg1: i32) -> (i32, i32) {
    %c0_i32 = arith.constant 0 : i32
    return %arg0, %arg1 : i32, i32
  }
  func.func @transform_1(%arg0: i32, %arg1: i32) -> (i32, i32) {
    %c0_i32 = arith.constant 0 : i32
    %c0_i32_0 = arith.constant 0 : i32
    return %arg0, %c0_i32 : i32, i32
  }
  func.func @transform_2(%arg0: i32, %arg1: i32) -> (i32, i32) {
    %c0_i32 = arith.constant 0 : i32
    %c0_i32_0 = arith.constant 0 : i32
    return %c0_i32, %arg1 : i32, i32
  }
  func.func @transform_3(%arg0: i32, %arg1: i32) -> (i32, i32) {
    %c0_i32 = arith.constant 0 : i32
    %c0_i32_0 = arith.constant 0 : i32
    return %arg0, %c0_i32 : i32, i32
  }
}

</mosaic_0001>

<llo_original>
// kernel: etm_forward.5
$region0: #{etm_forward.5}
  #allocation0 [shape = 'u32[]', space=smem, size = 0x4, offset = 0x4, fixed_abs, tag = 'smem constant byte address 0x4 - core index']
  #allocation1 [shape = 'u32[144,128]{1,0:T(1,128)}', space=vmem, size = 0x12000, scoped, tag = 'internal scratch']
  %s0 = inlined_call_operand.hbm [shape: bf16[32,64], index: 0, kind: input, shape index: {}]
  %s1 = inlined_call_operand.vmem [shape: bf16[64,1024], index: 1, kind: input, shape index: {}]
  %s2 = inlined_call_operand.vmem [shape: f32[32,1], index: 2, kind: input, shape index: {}]
  %s3 = inlined_call_operand.vmem [shape: f32[32,1], index: 3, kind: input, shape index: {}]
  %s4 = inlined_call_operand.vmem [shape: bf16[32,1024], index: 4, kind: output, shape index: {}]
  %s5 = sld [smem:[#allocation0]]
  $region30: #{etm_forward.5} parent=0
    _
  %s7 = ssub.s32 1, %s5
  %s8 = scalar_select 0, %s7, %s5
  $region1: #{etm_forward.5} parent=0
    #allocation2 [shape = 'u8[8192]{0}', space=vmem, size = 0x2000, scoped, tag = 'input window, operand 0, single buffered']
    #allocation3 [shape = 's32[1]{0}', space=sflag, size = 0x4, scoped, tag = 'scoped memory for etm_forward.5']
    %9 = vsyncpa [#allocation3], 0
    // Predicated region
    $region2: #{etm_forward.5} parent=1 // pred_check
      _
    $region3: #{etm_forward.5} parent=1 // pred_check_branch
      %11 = sbr.rel (0) target = $region5
    $region4: #{etm_forward.5} parent=1 // pred_region
      %s13 = ssub.s32 256, 256
      %14 = vsyncadd [#allocation3], %s13
      %s15 = sshll.u32 [#allocation2], 4
      %s16 = int_to_ptr.vmem [resolvable:$true] %s15
      %21 = dma.hbm_to_vmem [thread:$0]  %s0, 256, %s16, [#allocation3], 64, 64, 4
    $region5: #{etm_forward.5} parent=1 // pred_fallthru
      _
    // Predicated region
    $region6: #{etm_forward.5} parent=1 // pred_check
      _
    $region7: #{etm_forward.5} parent=1 // pred_check_branch
      %23 = sbr.rel (0) target = $region9
    $region8: #{etm_forward.5} parent=1 // pred_region
      _
    $region9: #{etm_forward.5} parent=1 // pred_fallthru
      _
    // Predicated region
    $region10: #{etm_forward.5} parent=1 // pred_check
      _
    $region11: #{etm_forward.5} parent=1 // pred_check_branch
      %25 = sbr.rel (0) target = $region13
    $region12: #{etm_forward.5} parent=1 // pred_region
      _
    $region13: #{etm_forward.5} parent=1 // pred_fallthru
      _
    // Predicated region
    $region14: #{etm_forward.5} parent=1 // pred_check
      _
    $region15: #{etm_forward.5} parent=1 // pred_check_branch
      %27 = sbr.rel (0) target = $region17
    $region16: #{etm_forward.5} parent=1 // pred_region
      _
    $region17: #{etm_forward.5} parent=1 // pred_fallthru
      _
    // Predicated region
    $region18: #{etm_forward.5} parent=1 // pred_check
      _
    $region19: #{etm_forward.5} parent=1 // pred_check_branch
      %29 = sbr.rel (0) target = $region21
    $region20: #{etm_forward.5} parent=1 // pred_region
      %30 = dma.done [#allocation3], 256
    $region21: #{etm_forward.5} parent=1 // pred_fallthru
      _
    %v32 = vld [vmem:[#allocation2] sm:$0xf]
    %v33 = vld [vmem:[#allocation2 + $0x4] sm:$0xf]
    %v34 = vld [vmem:[#allocation2 + $0x8] sm:$0xf]
    %v35 = vld [vmem:[#allocation2 + $0xc] sm:$0xf]
    %v36 = vld [vmem:[%s1] sm:$0xff]
    %v37 = vld [vmem:[%s1 + $0x8] sm:$0xff]
    %v38 = vld [vmem:[%s1 + $0x10] sm:$0xff]
    %v39 = vld [vmem:[%s1 + $0x18] sm:$0xff]
    %v40 = vld [vmem:[%s1 + $0x20] sm:$0xff]
    %v41 = vld [vmem:[%s1 + $0x28] sm:$0xff]
    %v42 = vld [vmem:[%s1 + $0x30] sm:$0xff]
    %v43 = vld [vmem:[%s1 + $0x38] sm:$0xff]
    %v44 = vld [vmem:[%s1 + $0x40] sm:$0xff]
    %v45 = vld [vmem:[%s1 + $0x48] sm:$0xff]
    %v46 = vld [vmem:[%s1 + $0x50] sm:$0xff]
    %v47 = vld [vmem:[%s1 + $0x58] sm:$0xff]
    %v48 = vld [vmem:[%s1 + $0x60] sm:$0xff]
    %v49 = vld [vmem:[%s1 + $0x68] sm:$0xff]
    %v50 = vld [vmem:[%s1 + $0x70] sm:$0xff]
    %v51 = vld [vmem:[%s1 + $0x78] sm:$0xff]
    %v52 = vld [vmem:[%s1 + $0x80] sm:$0xff]
    %v53 = vld [vmem:[%s1 + $0x88] sm:$0xff]
    %v54 = vld [vmem:[%s1 + $0x90] sm:$0xff]
    %v55 = vld [vmem:[%s1 + $0x98] sm:$0xff]
    %v56 = vld [vmem:[%s1 + $0xa0] sm:$0xff]
    %v57 = vld [vmem:[%s1 + $0xa8] sm:$0xff]
    %v58 = vld [vmem:[%s1 + $0xb0] sm:$0xff]
    %v59 = vld [vmem:[%s1 + $0xb8] sm:$0xff]
    %v60 = vld [vmem:[%s1 + $0xc0] sm:$0xff]
    %v61 = vld [vmem:[%s1 + $0xc8] sm:$0xff]
    %v62 = vld [vmem:[%s1 + $0xd0] sm:$0xff]
    %v63 = vld [vmem:[%s1 + $0xd8] sm:$0xff]
    %v64 = vld [vmem:[%s1 + $0xe0] sm:$0xff]
    %v65 = vld [vmem:[%s1 + $0xe8] sm:$0xff]
    %v66 = vld [vmem:[%s1 + $0xf0] sm:$0xff]
    %v67 = vld [vmem:[%s1 + $0xf8] sm:$0xff]
    %v72 = vunpack.c.l.b16 %v32
    %v73 = vunpack.c.l.b16 %v33
    %v74 = vunpack.c.l.b16 %v34
    %v75 = vunpack.c.l.b16 %v35
    %v76 = vpack.c.b16 %v73, %v72
    %v77 = vpack.c.b16 %v75, %v74
    %v110 = vunpack.c.l.b16 %v36
    %v111 = vunpack.c.h.b16 %v36
    %v112 = vunpack.c.l.b16 %v37
    %v113 = vunpack.c.h.b16 %v37
    %v114 = vunpack.c.l.b16 %v38
    %v115 = vunpack.c.h.b16 %v38
    %v116 = vunpack.c.l.b16 %v39
    %v117 = vunpack.c.h.b16 %v39
    %v118 = vunpack.c.l.b16 %v40
    %v119 = vunpack.c.h.b16 %v40
    %v120 = vunpack.c.l.b16 %v41
    %v121 = vunpack.c.h.b16 %v41
    %v122 = vunpack.c.l.b16 %v42
    %v123 = vunpack.c.h.b16 %v42
    %v124 = vunpack.c.l.b16 %v43
    %v125 = vunpack.c.h.b16 %v43
    %v126 = vunpack.c.l.b16 %v44
    %v127 = vunpack.c.h.b16 %v44
    %v128 = vunpack.c.l.b16 %v45
    %v129 = vunpack.c.h.b16 %v45
    %v130 = vunpack.c.l.b16 %v46
    %v131 = vunpack.c.h.b16 %v46
    %v132 = vunpack.c.l.b16 %v47
    %v133 = vunpack.c.h.b16 %v47
    %v134 = vunpack.c.l.b16 %v48
    %v135 = vunpack.c.h.b16 %v48
    %v136 = vunpack.c.l.b16 %v49
    %v137 = vunpack.c.h.b16 %v49
    %v138 = vunpack.c.l.b16 %v50
    %v139 = vunpack.c.h.b16 %v50
    %v140 = vunpack.c.l.b16 %v51
    %v141 = vunpack.c.h.b16 %v51
    %v142 = vunpack.c.l.b16 %v52
    %v143 = vunpack.c.h.b16 %v52
    %v144 = vunpack.c.l.b16 %v53
    %v145 = vunpack.c.h.b16 %v53
    %v146 = vunpack.c.l.b16 %v54
    %v147 = vunpack.c.h.b16 %v54
    %v148 = vunpack.c.l.b16 %v55
    %v149 = vunpack.c.h.b16 %v55
    %v150 = vunpack.c.l.b16 %v56
    %v151 = vunpack.c.h.b16 %v56
    %v152 = vunpack.c.l.b16 %v57
    %v153 = vunpack.c.h.b16 %v57
    %v154 = vunpack.c.l.b16 %v58
    %v155 = vunpack.c.h.b16 %v58
    %v156 = vunpack.c.l.b16 %v59
    %v157 = vunpack.c.h.b16 %v59
    %v158 = vunpack.c.l.b16 %v60
    %v159 = vunpack.c.h.b16 %v60
    %v160 = vunpack.c.l.b16 %v61
    %v161 = vunpack.c.h.b16 %v61
    %v162 = vunpack.c.l.b16 %v62
    %v163 = vunpack.c.h.b16 %v62
    %v164 = vunpack.c.l.b16 %v63
    %v165 = vunpack.c.h.b16 %v63
    %v166 = vunpack.c.l.b16 %v64
    %v167 = vunpack.c.h.b16 %v64
    %v168 = vunpack.c.l.b16 %v65
    %v169 = vunpack.c.h.b16 %v65
    %v170 = vunpack.c.l.b16 %v66
    %v171 = vunpack.c.h.b16 %v66
    %v172 = vunpack.c.l.b16 %v67
    %v173 = vunpack.c.h.b16 %v67
    %v174 = vpack.c.b16 %v118, %v110
    %v175 = vpack.c.b16 %v119, %v111
    %v176 = vpack.c.b16 %v120, %v112
    %v177 = vpack.c.b16 %v121, %v113
    %v178 = vpack.c.b16 %v122, %v114
    %v179 = vpack.c.b16 %v123, %v115
    %v180 = vpack.c.b16 %v124, %v116
    %v181 = vpack.c.b16 %v125, %v117
    %v182 = vpack.c.b16 %v134, %v126
    %v183 = vpack.c.b16 %v135, %v127
    %v184 = vpack.c.b16 %v136, %v128
    %v185 = vpack.c.b16 %v137, %v129
    %v186 = vpack.c.b16 %v138, %v130
    %v187 = vpack.c.b16 %v139, %v131
    %v188 = vpack.c.b16 %v140, %v132
    %v189 = vpack.c.b16 %v141, %v133
    %v190 = vpack.c.b16 %v150, %v142
    %v191 = vpack.c.b16 %v151, %v143
    %v192 = vpack.c.b16 %v152, %v144
    %v193 = vpack.c.b16 %v153, %v145
    %v194 = vpack.c.b16 %v154, %v146
    %v195 = vpack.c.b16 %v155, %v147
    %v196 = vpack.c.b16 %v156, %v148
    %v197 = vpack.c.b16 %v157, %v149
    %v198 = vpack.c.b16 %v166, %v158
    %v199 = vpack.c.b16 %v167, %v159
    %v200 = vpack.c.b16 %v168, %v160
    %v201 = vpack.c.b16 %v169, %v161
    %v202 = vpack.c.b16 %v170, %v162
    %v203 = vpack.c.b16 %v171, %v163
    %v204 = vpack.c.b16 %v172, %v164
    %v205 = vpack.c.b16 %v173, %v165
    %vm238 = vcmask 523264
    %v240 = vsel %vm238, %v76, 0
    %v243 = vsel %vm238, %v77, 0
    %245 = vmatprep.subr.bf16.mxu0 %v175
    %246 = vmatpush1.bf16.msra.mxu0 %v174
    %247 = vmatprep.subr.bf16.mxu0 %v183
    %248 = vmatpush1.bf16.msra.mxu0 %v182
    %249 = vmatprep.subr.bf16.mxu0 %v191
    %250 = vmatpush1.bf16.msra.mxu0 %v190
    %251 = vmatprep.subr.bf16.mxu0 %v199
    %252 = vmatpush1.bf16.msra.mxu0 %v198
    %253 = vmatprep.subr.bf16.mxu0 0
    %254 = vmatpush1.bf16.msra.mxu0 0
    %255 = vmatprep.subr.bf16.mxu0 0
    %256 = vmatpush1.bf16.msra.mxu0 0
    %257 = vmatprep.subr.bf16.mxu0 0
    %258 = vmatpush1.bf16.msra.mxu0 0
    %259 = vmatprep.subr.bf16.mxu0 0
    %260 = vmatpush1.bf16.msra.mxu0 0
    %261 = vmatprep.subr.bf16.mxu0 0
    %262 = vmatpush1.bf16.msra.mxu0 0
    %263 = vmatprep.subr.bf16.mxu0 0
    %264 = vmatpush1.bf16.msra.mxu0 0
    %265 = vmatprep.subr.bf16.mxu0 0
    %266 = vmatpush1.bf16.msra.mxu0 0
    %267 = vmatprep.subr.bf16.mxu0 0
    %268 = vmatpush1.bf16.msra.mxu0 0
    %269 = vmatprep.subr.bf16.mxu0 0
    %270 = vmatpush1.bf16.msra.mxu0 0
    %271 = vmatprep.subr.bf16.mxu0 0
    %272 = vmatpush1.bf16.msra.mxu0 0
    %273 = vmatprep.subr.bf16.mxu0 0
    %274 = vmatpush1.bf16.msra.mxu0 0
    %275 = vmatprep.subr.bf16.mxu0 0
    %276 = vmatpush1.bf16.msra.mxu0 0
    %277 = vmatprep.mubr.bf16.mxu0 0
    %278 = vmatmul.mubr.bf16.gmra.mrb[0].mxu0 %v240
    %v279 = vpop.f32.mrb[0].mxu0
    %v280 = vadd.f32 0.0, %v279
    %v281 = vpop.f32.mrb[0].mxu0
    %v282 = vadd.f32 0.0, %v281
    %v283 = vpop.f32.mrb[0].mxu0
    %v284 = vadd.f32 0.0, %v283
    %v285 = vpop.f32.mrb[0].mxu0
    %v286 = vadd.f32 0.0, %v285
    %287 = vmatprep.mubr.bf16.mxu0 0
    %288 = vmatmul.mubr.bf16.gmra.mrb[0].mxu0 %v243
    %v289 = vpop.f32.mrb[0].mxu0
    %v290 = vadd.f32 0.0, %v289
    %v291 = vpop.f32.mrb[0].mxu0
    %v292 = vadd.f32 0.0, %v291
    %v293 = vpop.f32.mrb[0].mxu0
    %v294 = vadd.f32 0.0, %v293
    %v295 = vpop.f32.mrb[0].mxu0
    %v296 = vadd.f32 0.0, %v295
    %297 = vdwg.mxu0
    %298 = vmatprep.subr.bf16.mxu0 %v177
    %299 = vmatpush1.bf16.msra.mxu0 %v176
    %300 = vmatprep.subr.bf16.mxu0 %v185
    %301 = vmatpush1.bf16.msra.mxu0 %v184
    %302 = vmatprep.subr.bf16.mxu0 %v193
    %303 = vmatpush1.bf16.msra.mxu0 %v192
    %304 = vmatprep.subr.bf16.mxu0 %v201
    %305 = vmatpush1.bf16.msra.mxu0 %v200
    %306 = vmatprep.subr.bf16.mxu0 0
    %307 = vmatpush1.bf16.msra.mxu0 0
    %308 = vmatprep.subr.bf16.mxu0 0
    %309 = vmatpush1.bf16.msra.mxu0 0
    %310 = vmatprep.subr.bf16.mxu0 0
    %311 = vmatpush1.bf16.msra.mxu0 0
    %312 = vmatprep.subr.bf16.mxu0 0
    %313 = vmatpush1.bf16.msra.mxu0 0
    %314 = vmatprep.subr.bf16.mxu0 0
    %315 = vmatpush1.bf16.msra.mxu0 0
    %316 = vmatprep.subr.bf16.mxu0 0
    %317 = vmatpush1.bf16.msra.mxu0 0
    %318 = vmatprep.subr.bf16.mxu0 0
    %319 = vmatpush1.bf16.msra.mxu0 0
    %320 = vmatprep.subr.bf16.mxu0 0
    %321 = vmatpush1.bf16.msra.mxu0 0
    %322 = vmatprep.subr.bf16.mxu0 0
    %323 = vmatpush1.bf16.msra.mxu0 0
    %324 = vmatprep.subr.bf16.mxu0 0
    %325 = vmatpush1.bf16.msra.mxu0 0
    %326 = vmatprep.subr.bf16.mxu0 0
    %327 = vmatpush1.bf16.msra.mxu0 0
    %328 = vmatprep.subr.bf16.mxu0 0
    %329 = vmatpush1.bf16.msra.mxu0 0
    %330 = vmatprep.mubr.bf16.mxu0 0
    %331 = vmatmul.mubr.bf16.gmra.mrb[0].mxu0 %v240
    %v332 = vpop.f32.mrb[0].mxu0
    %v333 = vadd.f32 0.0, %v332
    %v334 = vpop.f32.mrb[0].mxu0
    %v335 = vadd.f32 0.0, %v334
    %v336 = vpop.f32.mrb[0].mxu0
    %v337 = vadd.f32 0.0, %v336
    %v338 = vpop.f32.mrb[0].mxu0
    %v339 = vadd.f32 0.0, %v338
    %340 = vmatprep.mubr.bf16.mxu0 0
    %341 = vmatmul.mubr.bf16.gmra.mrb[0].mxu0 %v243
    %v342 = vpop.f32.mrb[0].mxu0
    %v343 = vadd.f32 0.0, %v342
    %v344 = vpop.f32.mrb[0].mxu0
    %v345 = vadd.f32 0.0, %v344
    %v346 = vpop.f32.mrb[0].mxu0
    %v347 = vadd.f32 0.0, %v346
    %v348 = vpop.f32.mrb[0].mxu0
    %v349 = vadd.f32 0.0, %v348
    %350 = vdwg.mxu0
    %351 = vmatprep.subr.bf16.mxu0 %v179
    %352 = vmatpush1.bf16.msra.mxu0 %v178
    %353 = vmatprep.subr.bf16.mxu0 %v187
    %354 = vmatpush1.bf16.msra.mxu0 %v186
    %355 = vmatprep.subr.bf16.mxu0 %v195
    %356 = vmatpush1.bf16.msra.mxu0 %v194
    %357 = vmatprep.subr.bf16.mxu0 %v203
    %358 = vmatpush1.bf16.msra.mxu0 %v202
    %359 = vmatprep.subr.bf16.mxu0 0
    %360 = vmatpush1.bf16.msra.mxu0 0
    %361 = vmatprep.subr.bf16.mxu0 0
    %362 = vmatpush1.bf16.msra.mxu0 0
    %363 = vmatprep.subr.bf16.mxu0 0
    %364 = vmatpush1.bf16.msra.mxu0 0
    %365 = vmatprep.subr.bf16.mxu0 0
    %366 = vmatpush1.bf16.msra.mxu0 0
    %367 = vmatprep.subr.bf16.mxu0 0
    %368 = vmatpush1.bf16.msra.mxu0 0
    %369 = vmatprep.subr.bf16.mxu0 0
    %370 = vmatpush1.bf16.msra.mxu0 0
    %371 = vmatprep.subr.bf16.mxu0 0
    %372 = vmatpush1.bf16.msra.mxu0 0
    %373 = vmatprep.subr.bf16.mxu0 0
    %374 = vmatpush1.bf16.msra.mxu0 0
    %375 = vmatprep.subr.bf16.mxu0 0
    %376 = vmatpush1.bf16.msra.mxu0 0
    %377 = vmatprep.subr.bf16.mxu0 0
    %378 = vmatpush1.bf16.msra.mxu0 0
    %379 = vmatprep.subr.bf16.mxu0 0
    %380 = vmatpush1.bf16.msra.mxu0 0
    %381 = vmatprep.subr.bf16.mxu0 0
    %382 = vmatpush1.bf16.msra.mxu0 0
    %383 = vmatprep.mubr.bf16.mxu0 0
    %384 = vmatmul.mubr.bf16.gmra.mrb[0].mxu0 %v240
    %v385 = vpop.f32.mrb[0].mxu0
    %v386 = vadd.f32 0.0, %v385
    %v387 = vpop.f32.mrb[0].mxu0
    %v388 = vadd.f32 0.0, %v387
    %v389 = vpop.f32.mrb[0].mxu0
    %v390 = vadd.f32 0.0, %v389
    %v391 = vpop.f32.mrb[0].mxu0
    %v392 = vadd.f32 0.0, %v391
    %393 = vmatprep.mubr.bf16.mxu0 0
    %394 = vmatmul.mubr.bf16.gmra.mrb[0].mxu0 %v243
    %v395 = vpop.f32.mrb[0].mxu0
    %v396 = vadd.f32 0.0, %v395
    %v397 = vpop.f32.mrb[0].mxu0
    %v398 = vadd.f32 0.0, %v397
    %v399 = vpop.f32.mrb[0].mxu0
    %v400 = vadd.f32 0.0, %v399
    %v401 = vpop.f32.mrb[0].mxu0
    %v402 = vadd.f32 0.0, %v401
    %403 = vdwg.mxu0
    %404 = vmatprep.subr.bf16.mxu0 %v181
    %405 = vmatpush1.bf16.msra.mxu0 %v180
    %406 = vmatprep.subr.bf16.mxu0 %v189
    %407 = vmatpush1.bf16.msra.mxu0 %v188
    %408 = vmatprep.subr.bf16.mxu0 %v197
    %409 = vmatpush1.bf16.msra.mxu0 %v196
    %410 = vmatprep.subr.bf16.mxu0 %v205
    %411 = vmatpush1.bf16.msra.mxu0 %v204
    %412 = vmatprep.subr.bf16.mxu0 0
    %413 = vmatpush1.bf16.msra.mxu0 0
    %414 = vmatprep.subr.bf16.mxu0 0
    %415 = vmatpush1.bf16.msra.mxu0 0
    %416 = vmatprep.subr.bf16.mxu0 0
    %417 = vmatpush1.bf16.msra.mxu0 0
    %418 = vmatprep.subr.bf16.mxu0 0
    %419 = vmatpush1.bf16.msra.mxu0 0
    %420 = vmatprep.subr.bf16.mxu0 0
    %421 = vmatpush1.bf16.msra.mxu0 0
    %422 = vmatprep.subr.bf16.mxu0 0
    %423 = vmatpush1.bf16.msra.mxu0 0
    %424 = vmatprep.subr.bf16.mxu0 0
    %425 = vmatpush1.bf16.msra.mxu0 0
    %426 = vmatprep.subr.bf16.mxu0 0
    %427 = vmatpush1.bf16.msra.mxu0 0
    %428 = vmatprep.subr.bf16.mxu0 0
    %429 = vmatpush1.bf16.msra.mxu0 0
    %430 = vmatprep.subr.bf16.mxu0 0
    %431 = vmatpush1.bf16.msra.mxu0 0
    %432 = vmatprep.subr.bf16.mxu0 0
    %433 = vmatpush1.bf16.msra.mxu0 0
    %434 = vmatprep.subr.bf16.mxu0 0
    %435 = vmatpush1.bf16.msra.mxu0 0
    %436 = vmatprep.mubr.bf16.mxu0 0
    %437 = vmatmul.mubr.bf16.gmra.mrb[0].mxu0 %v240
    %v438 = vpop.f32.mrb[0].mxu0
    %v439 = vadd.f32 0.0, %v438
    %v440 = vpop.f32.mrb[0].mxu0
    %v441 = vadd.f32 0.0, %v440
    %v442 = vpop.f32.mrb[0].mxu0
    %v443 = vadd.f32 0.0, %v442
    %v444 = vpop.f32.mrb[0].mxu0
    %v445 = vadd.f32 0.0, %v444
    %446 = vmatprep.mubr.bf16.mxu0 0
    %447 = vmatmul.mubr.bf16.gmra.mrb[0].mxu0 %v243
    %v448 = vpop.f32.mrb[0].mxu0
    %v449 = vadd.f32 0.0, %v448
    %v450 = vpop.f32.mrb[0].mxu0
    %v451 = vadd.f32 0.0, %v450
    %v452 = vpop.f32.mrb[0].mxu0
    %v453 = vadd.f32 0.0, %v452
    %v454 = vpop.f32.mrb[0].mxu0
    %v455 = vadd.f32 0.0, %v454
    %456 = vdwg.mxu0
    %v457 = vld [vmem:[%s2] sm:$0xff]
    %v458 = vld [vmem:[%s2 + $0x8] sm:$0xff]
    %v459 = vld [vmem:[%s2 + $0x10] sm:$0xff]
    %v460 = vld [vmem:[%s2 + $0x18] sm:$0xff]
    %462 = vset.pattern.permute.xlu0 0
    %463 = vperm.xlu0 %462, %v457
    %v464 = vpop.permute.xlu0 %463
    %467 = vset.pattern.permute.xlu0 0
    %468 = vperm.xlu0 %467, %v458
    %v469 = vpop.permute.xlu0 %468
    %472 = vset.pattern.permute.xlu0 0
    %473 = vperm.xlu0 %472, %v459
    %v474 = vpop.permute.xlu0 %473
    %477 = vset.pattern.permute.xlu0 0
    %478 = vperm.xlu0 %477, %v460
    %v479 = vpop.permute.xlu0 %478
    %v481 = vsub.f32 %v280, %v464
    %v482 = vsub.f32 %v282, %v464
    %v483 = vsub.f32 %v333, %v464
    %v484 = vsub.f32 %v335, %v464
    %v485 = vsub.f32 %v386, %v464
    %v486 = vsub.f32 %v388, %v464
    %v487 = vsub.f32 %v439, %v464
    %v488 = vsub.f32 %v441, %v464
    %v489 = vsub.f32 %v284, %v469
    %v490 = vsub.f32 %v286, %v469
    %v491 = vsub.f32 %v337, %v469
    %v492 = vsub.f32 %v339, %v469
    %v493 = vsub.f32 %v390, %v469
    %v494 = vsub.f32 %v392, %v469
    %v495 = vsub.f32 %v443, %v469
    %v496 = vsub.f32 %v445, %v469
    %v497 = vsub.f32 %v290, %v474
    %v498 = vsub.f32 %v292, %v474
    %v499 = vsub.f32 %v343, %v474
    %v500 = vsub.f32 %v345, %v474
    %v501 = vsub.f32 %v396, %v474
    %v502 = vsub.f32 %v398, %v474
    %v503 = vsub.f32 %v449, %v474
    %v504 = vsub.f32 %v451, %v474
    %v505 = vsub.f32 %v294, %v479
    %v506 = vsub.f32 %v296, %v479
    %v507 = vsub.f32 %v347, %v479
    %v508 = vsub.f32 %v349, %v479
    %v509 = vsub.f32 %v400, %v479
    %v510 = vsub.f32 %v402, %v479
    %v511 = vsub.f32 %v453, %v479
    %v512 = vsub.f32 %v455, %v479
    %v513 = vmul.f32 %v481, 1.442695
    %v514 = vpow.pop %v513
    %v515 = vmul.f32 %v482, 1.442695
    %v516 = vpow.pop %v515
    %v517 = vmul.f32 %v483, 1.442695
    %v518 = vpow.pop %v517
    %v519 = vmul.f32 %v484, 1.442695
    %v520 = vpow.pop %v519
    %v521 = vmul.f32 %v485, 1.442695
    %v522 = vpow.pop %v521
    %v523 = vmul.f32 %v486, 1.442695
    %v524 = vpow.pop %v523
    %v525 = vmul.f32 %v487, 1.442695
    %v526 = vpow.pop %v525
    %v527 = vmul.f32 %v488, 1.442695
    %v528 = vpow.pop %v527
    %v529 = vmul.f32 %v489, 1.442695
    %v530 = vpow.pop %v529
    %v531 = vmul.f32 %v490, 1.442695
    %v532 = vpow.pop %v531
    %v533 = vmul.f32 %v491, 1.442695
    %v534 = vpow.pop %v533
    %v535 = vmul.f32 %v492, 1.442695
    %v536 = vpow.pop %v535
    %v537 = vmul.f32 %v493, 1.442695
    %v538 = vpow.pop %v537
    %v539 = vmul.f32 %v494, 1.442695
    %v540 = vpow.pop %v539
    %v541 = vmul.f32 %v495, 1.442695
    %v542 = vpow.pop %v541
    %v543 = vmul.f32 %v496, 1.442695
    %v544 = vpow.pop %v543
    %v545 = vmul.f32 %v497, 1.442695
    %v546 = vpow.pop %v545
    %v547 = vmul.f32 %v498, 1.442695
    %v548 = vpow.pop %v547
    %v549 = vmul.f32 %v499, 1.442695
    %v550 = vpow.pop %v549
    %v551 = vmul.f32 %v500, 1.442695
    %v552 = vpow.pop %v551
    %v553 = vmul.f32 %v501, 1.442695
    %v554 = vpow.pop %v553
    %v555 = vmul.f32 %v502, 1.442695
    %v556 = vpow.pop %v555
    %v557 = vmul.f32 %v503, 1.442695
    %v558 = vpow.pop %v557
    %v559 = vmul.f32 %v504, 1.442695
    %v560 = vpow.pop %v559
    %v561 = vmul.f32 %v505, 1.442695
    %v562 = vpow.pop %v561
    %v563 = vmul.f32 %v506, 1.442695
    %v564 = vpow.pop %v563
    %v565 = vmul.f32 %v507, 1.442695
    %v566 = vpow.pop %v565
    %v567 = vmul.f32 %v508, 1.442695
    %v568 = vpow.pop %v567
    %v569 = vmul.f32 %v509, 1.442695
    %v570 = vpow.pop %v569
    %v571 = vmul.f32 %v510, 1.442695
    %v572 = vpow.pop %v571
    %v573 = vmul.f32 %v511, 1.442695
    %v574 = vpow.pop %v573
    %v575 = vmul.f32 %v512, 1.442695
    %v576 = vpow.pop %v575
    %v577 = vld [vmem:[%s3] sm:$0xff]
    %v578 = vld [vmem:[%s3 + $0x8] sm:$0xff]
    %v579 = vld [vmem:[%s3 + $0x10] sm:$0xff]
    %v580 = vld [vmem:[%s3 + $0x18] sm:$0xff]
    %582 = vset.pattern.permute.xlu0 0
    %583 = vperm.xlu0 %582, %v577
    %v584 = vpop.permute.xlu0 %583
    %587 = vset.pattern.permute.xlu0 0
    %588 = vperm.xlu0 %587, %v578
    %v589 = vpop.permute.xlu0 %588
    %592 = vset.pattern.permute.xlu0 0
    %593 = vperm.xlu0 %592, %v579
    %v594 = vpop.permute.xlu0 %593
    %597 = vset.pattern.permute.xlu0 0
    %598 = vperm.xlu0 %597, %v580
    %v599 = vpop.permute.xlu0 %598
    %v601 = vmul.f32 %v514, %v584
    %v602 = vmul.f32 %v516, %v584
    %v603 = vmul.f32 %v518, %v584
    %v604 = vmul.f32 %v520, %v584
    %v605 = vmul.f32 %v522, %v584
    %v606 = vmul.f32 %v524, %v584
    %v607 = vmul.f32 %v526, %v584
    %v608 = vmul.f32 %v528, %v584
    %v609 = vmul.f32 %v530, %v589
    %v610 = vmul.f32 %v532, %v589
    %v611 = vmul.f32 %v534, %v589
    %v612 = vmul.f32 %v536, %v589
    %v613 = vmul.f32 %v538, %v589
    %v614 = vmul.f32 %v540, %v589
    %v615 = vmul.f32 %v542, %v589
    %v616 = vmul.f32 %v544, %v589
    %v617 = vmul.f32 %v546, %v594
    %v618 = vmul.f32 %v548, %v594
    %v619 = vmul.f32 %v550, %v594
    %v620 = vmul.f32 %v552, %v594
    %v621 = vmul.f32 %v554, %v594
    %v622 = vmul.f32 %v556, %v594
    %v623 = vmul.f32 %v558, %v594
    %v624 = vmul.f32 %v560, %v594
    %v625 = vmul.f32 %v562, %v599
    %v626 = vmul.f32 %v564, %v599
    %v627 = vmul.f32 %v566, %v599
    %v628 = vmul.f32 %v568, %v599
    %v629 = vmul.f32 %v570, %v599
    %v630 = vmul.f32 %v572, %v599
    %v631 = vmul.f32 %v574, %v599
    %v632 = vmul.f32 %v576, %v599
    %v633 = vpack.c.bf16 %v609, %v601
    %v634 = vpack.c.bf16 %v610, %v602
    %v635 = vpack.c.bf16 %v611, %v603
    %v636 = vpack.c.bf16 %v612, %v604
    %v637 = vpack.c.bf16 %v613, %v605
    %v638 = vpack.c.bf16 %v614, %v606
    %v639 = vpack.c.bf16 %v615, %v607
    %v640 = vpack.c.bf16 %v616, %v608
    %v641 = vpack.c.bf16 %v625, %v617
    %v642 = vpack.c.bf16 %v626, %v618
    %v643 = vpack.c.bf16 %v627, %v619
    %v644 = vpack.c.bf16 %v628, %v620
    %v645 = vpack.c.bf16 %v629, %v621
    %v646 = vpack.c.bf16 %v630, %v622
    %v647 = vpack.c.bf16 %v631, %v623
    %v648 = vpack.c.bf16 %v632, %v624
    %v665 = vunpack.c.l.b16 %v633
    %v666 = vunpack.c.l.b16 %v634
    %v667 = vunpack.c.l.b16 %v635
    %v668 = vunpack.c.l.b16 %v636
    %v669 = vunpack.c.l.b16 %v637
    %v670 = vunpack.c.l.b16 %v638
    %v671 = vunpack.c.l.b16 %v639
    %v672 = vunpack.c.l.b16 %v640
    %v673 = vunpack.c.h.b16 %v633
    %v674 = vunpack.c.h.b16 %v634
    %v675 = vunpack.c.h.b16 %v635
    %v676 = vunpack.c.h.b16 %v636
    %v677 = vunpack.c.h.b16 %v637
    %v678 = vunpack.c.h.b16 %v638
    %v679 = vunpack.c.h.b16 %v639
    %v680 = vunpack.c.h.b16 %v640
    %v681 = vunpack.c.l.b16 %v641
    %v682 = vunpack.c.l.b16 %v642
    %v683 = vunpack.c.l.b16 %v643
    %v684 = vunpack.c.l.b16 %v644
    %v685 = vunpack.c.l.b16 %v645
    %v686 = vunpack.c.l.b16 %v646
    %v687 = vunpack.c.l.b16 %v647
    %v688 = vunpack.c.l.b16 %v648
    %v689 = vunpack.c.h.b16 %v641
    %v690 = vunpack.c.h.b16 %v642
    %v691 = vunpack.c.h.b16 %v643
    %v692 = vunpack.c.h.b16 %v644
    %v693 = vunpack.c.h.b16 %v645
    %v694 = vunpack.c.h.b16 %v646
    %v695 = vunpack.c.h.b16 %v647
    %v696 = vunpack.c.h.b16 %v648
    %v697 = vpack.c.b16 %v666, %v665
    %v698 = vpack.c.b16 %v668, %v667
    %v699 = vpack.c.b16 %v670, %v669
    %v700 = vpack.c.b16 %v672, %v671
    %v701 = vpack.c.b16 %v674, %v673
    %v702 = vpack.c.b16 %v676, %v675
    %v703 = vpack.c.b16 %v678, %v677
    %v704 = vpack.c.b16 %v680, %v679
    %v705 = vpack.c.b16 %v682, %v681
    %v706 = vpack.c.b16 %v684, %v683
    %v707 = vpack.c.b16 %v686, %v685
    %v708 = vpack.c.b16 %v688, %v687
    %v709 = vpack.c.b16 %v690, %v689
    %v710 = vpack.c.b16 %v692, %v691
    %v711 = vpack.c.b16 %v694, %v693
    %v712 = vpack.c.b16 %v696, %v695
    %729 = vst [vmem:[%s4] sm:$0xff] %v697
    %730 = vst [vmem:[%s4 + $0x8] sm:$0xff] %v698
    %731 = vst [vmem:[%s4 + $0x10] sm:$0xff] %v699
    %732 = vst [vmem:[%s4 + $0x18] sm:$0xff] %v700
    %733 = vst [vmem:[%s4 + $0x20] sm:$0xff] %v701
    %734 = vst [vmem:[%s4 + $0x28] sm:$0xff] %v702
    %735 = vst [vmem:[%s4 + $0x30] sm:$0xff] %v703
    %736 = vst [vmem:[%s4 + $0x38] sm:$0xff] %v704
    %737 = vst [vmem:[%s4 + $0x40] sm:$0xff] %v705
    %738 = vst [vmem:[%s4 + $0x48] sm:$0xff] %v706
    %739 = vst [vmem:[%s4 + $0x50] sm:$0xff] %v707
    %740 = vst [vmem:[%s4 + $0x58] sm:$0xff] %v708
    %741 = vst [vmem:[%s4 + $0x60] sm:$0xff] %v709
    %742 = vst [vmem:[%s4 + $0x68] sm:$0xff] %v710
    %743 = vst [vmem:[%s4 + $0x70] sm:$0xff] %v711
    %744 = vst [vmem:[%s4 + $0x78] sm:$0xff] %v712
    // Predicated region
    $region22: #{etm_forward.5} parent=1 // pred_check
      _
    $region23: #{etm_forward.5} parent=1 // pred_check_branch
      %746 = sbr.rel (0) target = $region25
    $region24: #{etm_forward.5} parent=1 // pred_region
      _
    $region25: #{etm_forward.5} parent=1 // pred_fallthru
      _
    // Predicated region
    $region26: #{etm_forward.5} parent=1 // pred_check
      _
    $region27: #{etm_forward.5} parent=1 // pred_check_branch
      %748 = sbr.rel (0) target = $region29
    $region28: #{etm_forward.5} parent=1 // pred_region
      _
    $region29: #{etm_forward.5} parent=1 // pred_fallthru
      _
    %749 = vsyncpa [#allocation3], 1

// kernel: etm_forward.4
$region0: #{etm_forward.4}
  #allocation0 [shape = 'u32[]', space=smem, size = 0x4, offset = 0x4, fixed_abs, tag = 'smem constant byte address 0x4 - core index']
  #allocation1 [shape = 'u32[144,128]{1,0:T(1,128)}', space=vmem, size = 0x12000, scoped, tag = 'internal scratch']
  #allocation2 [shape = 'f32[32,1]{1,0:T(8,128)}', space=vmem, size = 0x4000, scoped, tag = 'scratch operand']
  #allocation3 [shape = 'f32[32,1]{1,0:T(8,128)}', space=vmem, size = 0x4000, scoped, tag = 'scratch operand']
  %s0 = inlined_call_operand.hbm [shape: bf16[32,64], index: 0, kind: input, shape index: {}]
  %s1 = inlined_call_operand.hbm [shape: bf16[64,1024], index: 1, kind: input, shape index: {}]
  %s2 = inlined_call_operand.vmem [shape: f32[32,1], index: 2, kind: output, shape index: {0}]
  %s3 = inlined_call_operand.vmem [shape: f32[32,1], index: 3, kind: output, shape index: {1}]
  %4 = xla_tuple %s2, %s3
  %s5 = sld [smem:[#allocation0]]
  $region42: #{etm_forward.4} parent=0
    _
  %s7 = ssub.s32 1, %s5
  %s8 = scalar_select 0, %s7, %s5
  $region1: #{etm_forward.4} parent=0
    #allocation4 [shape = 'u8[8192]{0}', space=vmem, size = 0x2000, scoped, tag = 'input window, operand 0, single buffered']
    #allocation5 [shape = 's32[1]{0}', space=sflag, size = 0x4, scoped, tag = 'scoped memory for etm_forward.4']
    #allocation6 [shape = 'u8[131072]{0}', space=vmem, size = 0x20000, scoped, tag = 'input window, operand 1, single buffered']
    #allocation7 [shape = 's32[1]{0}', space=sflag, size = 0x4, scoped, tag = 'scoped memory for etm_forward.4']
    %9 = vsyncpa [#allocation5], 0
    %10 = vsyncpa [#allocation7], 0
    // Predicated region
    $region2: #{etm_forward.4} parent=1 // pred_check
      _
    $region3: #{etm_forward.4} parent=1 // pred_check_branch
      %12 = sbr.rel (0) target = $region5
    $region4: #{etm_forward.4} parent=1 // pred_region
      %s14 = ssub.s32 256, 256
      %15 = vsyncadd [#allocation5], %s14
      %s16 = sshll.u32 [#allocation4], 4
      %s17 = int_to_ptr.vmem [resolvable:$true] %s16
      %22 = dma.hbm_to_vmem [thread:$0]  %s0, 256, %s17, [#allocation5], 64, 64, 4
    $region5: #{etm_forward.4} parent=1 // pred_fallthru
      _
    // Predicated region
    $region6: #{etm_forward.4} parent=1 // pred_check
      _
    $region7: #{etm_forward.4} parent=1 // pred_check_branch
      %24 = sbr.rel (0) target = $region9
    $region8: #{etm_forward.4} parent=1 // pred_region
      %s26 = ssub.s32 4096, 4096
      %27 = vsyncadd [#allocation7], %s26
      %s28 = sshll.u32 [#allocation6], 4
      %s29 = int_to_ptr.vmem [resolvable:$true] %s28
      %34 = dma.hbm_to_vmem [thread:$0]  %s1, 4096, %s29, [#allocation7], 512, 512, 32
    $region9: #{etm_forward.4} parent=1 // pred_fallthru
      _
    // Predicated region
    $region10: #{etm_forward.4} parent=1 // pred_check
      _
    $region11: #{etm_forward.4} parent=1 // pred_check_branch
      %36 = sbr.rel (0) target = $region13
    $region12: #{etm_forward.4} parent=1 // pred_region
      %37 = dma.done [#allocation5], 256
    $region13: #{etm_forward.4} parent=1 // pred_fallthru
      _
    // Predicated region
    $region14: #{etm_forward.4} parent=1 // pred_check
      _
    $region15: #{etm_forward.4} parent=1 // pred_check_branch
      %39 = sbr.rel (0) target = $region17
    $region16: #{etm_forward.4} parent=1 // pred_region
      %40 = dma.done [#allocation7], 4096
    $region17: #{etm_forward.4} parent=1 // pred_fallthru
      _
    %p42 = scmp.eq.s32.totalorder 0, 0
    // Predicated region
    $region18: #{etm_forward.4} parent=1 // pred_check
      %p43 = pneg %p42
    $region19: #{etm_forward.4} parent=1 // pred_check_branch
      %45 = sbr.rel (%p43) target = $region21
    $region20: #{etm_forward.4} parent=1 // pred_region
      %vm46 = vcmask 7168
      %47 = vst.msk [vmem:[#allocation2] sm:$0xff] %vm46, -inf
      %48 = vst.msk [vmem:[#allocation2 + $0x8] sm:$0xff] %vm46, -inf
      %49 = vst.msk [vmem:[#allocation2 + $0x10] sm:$0xff] %vm46, -inf
      %50 = vst.msk [vmem:[#allocation2 + $0x18] sm:$0xff] %vm46, -inf
      %51 = vst.msk [vmem:[#allocation3] sm:$0xff] %vm46, 0.0
      %52 = vst.msk [vmem:[#allocation3 + $0x8] sm:$0xff] %vm46, 0.0
      %53 = vst.msk [vmem:[#allocation3 + $0x10] sm:$0xff] %vm46, 0.0
      %54 = vst.msk [vmem:[#allocation3 + $0x18] sm:$0xff] %vm46, 0.0
    $region21: #{etm_forward.4} parent=1 // pred_fallthru
      _
    %v55 = vld [vmem:[#allocation4] sm:$0xf]
    %v56 = vld [vmem:[#allocation4 + $0x4] sm:$0xf]
    %v57 = vld [vmem:[#allocation4 + $0x8] sm:$0xf]
    %v58 = vld [vmem:[#allocation4 + $0xc] sm:$0xf]
    %v59 = vld [vmem:[#allocation6] sm:$0xff]
    %v60 = vld [vmem:[#allocation6 + $0x8] sm:$0xff]
    %v61 = vld [vmem:[#allocation6 + $0x10] sm:$0xff]
    %v62 = vld [vmem:[#allocation6 + $0x18] sm:$0xff]
    %v63 = vld [vmem:[#allocation6 + $0x20] sm:$0xff]
    %v64 = vld [vmem:[#allocation6 + $0x28] sm:$0xff]
    %v65 = vld [vmem:[#allocation6 + $0x30] sm:$0xff]
    %v66 = vld [vmem:[#allocation6 + $0x38] sm:$0xff]
    %v67 = vld [vmem:[#allocation6 + $0x40] sm:$0xff]
    %v68 = vld [vmem:[#allocation6 + $0x48] sm:$0xff]
    %v69 = vld [vmem:[#allocation6 + $0x50] sm:$0xff]
    %v70 = vld [vmem:[#allocation6 + $0x58] sm:$0xff]
    %v71 = vld [vmem:[#allocation6 + $0x60] sm:$0xff]
    %v72 = vld [vmem:[#allocation6 + $0x68] sm:$0xff]
    %v73 = vld [vmem:[#allocation6 + $0x70] sm:$0xff]
    %v74 = vld [vmem:[#allocation6 + $0x78] sm:$0xff]
    %v75 = vld [vmem:[#allocation6 + $0x80] sm:$0xff]
    %v76 = vld [vmem:[#allocation6 + $0x88] sm:$0xff]
    %v77 = vld [vmem:[#allocation6 + $0x90] sm:$0xff]
    %v78 = vld [vmem:[#allocation6 + $0x98] sm:$0xff]
    %v79 = vld [vmem:[#allocation6 + $0xa0] sm:$0xff]
    %v80 = vld [vmem:[#allocation6 + $0xa8] sm:$0xff]
    %v81 = vld [vmem:[#allocation6 + $0xb0] sm:$0xff]
    %v82 = vld [vmem:[#allocation6 + $0xb8] sm:$0xff]
    %v83 = vld [vmem:[#allocation6 + $0xc0] sm:$0xff]
    %v84 = vld [vmem:[#allocation6 + $0xc8] sm:$0xff]
    %v85 = vld [vmem:[#allocation6 + $0xd0] sm:$0xff]
    %v86 = vld [vmem:[#allocation6 + $0xd8] sm:$0xff]
    %v87 = vld [vmem:[#allocation6 + $0xe0] sm:$0xff]
    %v88 = vld [vmem:[#allocation6 + $0xe8] sm:$0xff]
    %v89 = vld [vmem:[#allocation6 + $0xf0] sm:$0xff]
    %v90 = vld [vmem:[#allocation6 + $0xf8] sm:$0xff]
    %v95 = vunpack.c.l.b16 %v55
    %v96 = vunpack.c.l.b16 %v56
    %v97 = vunpack.c.l.b16 %v57
    %v98 = vunpack.c.l.b16 %v58
    %v99 = vpack.c.b16 %v96, %v95
    %v100 = vpack.c.b16 %v98, %v97
    %v133 = vunpack.c.l.b16 %v59
    %v134 = vunpack.c.h.b16 %v59
    %v135 = vunpack.c.l.b16 %v60
    %v136 = vunpack.c.h.b16 %v60
    %v137 = vunpack.c.l.b16 %v61
    %v138 = vunpack.c.h.b16 %v61
    %v139 = vunpack.c.l.b16 %v62
    %v140 = vunpack.c.h.b16 %v62
    %v141 = vunpack.c.l.b16 %v63
    %v142 = vunpack.c.h.b16 %v63
    %v143 = vunpack.c.l.b16 %v64
    %v144 = vunpack.c.h.b16 %v64
    %v145 = vunpack.c.l.b16 %v65
    %v146 = vunpack.c.h.b16 %v65
    %v147 = vunpack.c.l.b16 %v66
    %v148 = vunpack.c.h.b16 %v66
    %v149 = vunpack.c.l.b16 %v67
    %v150 = vunpack.c.h.b16 %v67
    %v151 = vunpack.c.l.b16 %v68
    %v152 = vunpack.c.h.b16 %v68
    %v153 = vunpack.c.l.b16 %v69
    %v154 = vunpack.c.h.b16 %v69
    %v155 = vunpack.c.l.b16 %v70
    %v156 = vunpack.c.h.b16 %v70
    %v157 = vunpack.c.l.b16 %v71
    %v158 = vunpack.c.h.b16 %v71
    %v159 = vunpack.c.l.b16 %v72
    %v160 = vunpack.c.h.b16 %v72
    %v161 = vunpack.c.l.b16 %v73
    %v162 = vunpack.c.h.b16 %v73
    %v163 = vunpack.c.l.b16 %v74
    %v164 = vunpack.c.h.b16 %v74
    %v165 = vunpack.c.l.b16 %v75
    %v166 = vunpack.c.h.b16 %v75
    %v167 = vunpack.c.l.b16 %v76
    %v168 = vunpack.c.h.b16 %v76
    %v169 = vunpack.c.l.b16 %v77
    %v170 = vunpack.c.h.b16 %v77
    %v171 = vunpack.c.l.b16 %v78
    %v172 = vunpack.c.h.b16 %v78
    %v173 = vunpack.c.l.b16 %v79
    %v174 = vunpack.c.h.b16 %v79
    %v175 = vunpack.c.l.b16 %v80
    %v176 = vunpack.c.h.b16 %v80
    %v177 = vunpack.c.l.b16 %v81
    %v178 = vunpack.c.h.b16 %v81
    %v179 = vunpack.c.l.b16 %v82
    %v180 = vunpack.c.h.b16 %v82
    %v181 = vunpack.c.l.b16 %v83
    %v182 = vunpack.c.h.b16 %v83
    %v183 = vunpack.c.l.b16 %v84
    %v184 = vunpack.c.h.b16 %v84
    %v185 = vunpack.c.l.b16 %v85
    %v186 = vunpack.c.h.b16 %v85
    %v187 = vunpack.c.l.b16 %v86
    %v188 = vunpack.c.h.b16 %v86
    %v189 = vunpack.c.l.b16 %v87
    %v190 = vunpack.c.h.b16 %v87
    %v191 = vunpack.c.l.b16 %v88
    %v192 = vunpack.c.h.b16 %v88
    %v193 = vunpack.c.l.b16 %v89
    %v194 = vunpack.c.h.b16 %v89
    %v195 = vunpack.c.l.b16 %v90
    %v196 = vunpack.c.h.b16 %v90
    %v197 = vpack.c.b16 %v141, %v133
    %v198 = vpack.c.b16 %v142, %v134
    %v199 = vpack.c.b16 %v143, %v135
    %v200 = vpack.c.b16 %v144, %v136
    %v201 = vpack.c.b16 %v145, %v137
    %v202 = vpack.c.b16 %v146, %v138
    %v203 = vpack.c.b16 %v147, %v139
    %v204 = vpack.c.b16 %v148, %v140
    %v205 = vpack.c.b16 %v157, %v149
    %v206 = vpack.c.b16 %v158, %v150
    %v207 = vpack.c.b16 %v159, %v151
    %v208 = vpack.c.b16 %v160, %v152
    %v209 = vpack.c.b16 %v161, %v153
    %v210 = vpack.c.b16 %v162, %v154
    %v211 = vpack.c.b16 %v163, %v155
    %v212 = vpack.c.b16 %v164, %v156
    %v213 = vpack.c.b16 %v173, %v165
    %v214 = vpack.c.b16 %v174, %v166
    %v215 = vpack.c.b16 %v175, %v167
    %v216 = vpack.c.b16 %v176, %v168
    %v217 = vpack.c.b16 %v177, %v169
    %v218 = vpack.c.b16 %v178, %v170
    %v219 = vpack.c.b16 %v179, %v171
    %v220 = vpack.c.b16 %v180, %v172
    %v221 = vpack.c.b16 %v189, %v181
    %v222 = vpack.c.b16 %v190, %v182
    %v223 = vpack.c.b16 %v191, %v183
    %v224 = vpack.c.b16 %v192, %v184
    %v225 = vpack.c.b16 %v193, %v185
    %v226 = vpack.c.b16 %v194, %v186
    %v227 = vpack.c.b16 %v195, %v187
    %v228 = vpack.c.b16 %v196, %v188
    %vm261 = vcmask 523264
    %v263 = vsel %vm261, %v99, 0
    %v266 = vsel %vm261, %v100, 0
    %268 = vmatprep.subr.bf16.mxu0 %v198
    %269 = vmatpush1.bf16.msra.mxu0 %v197
    %270 = vmatprep.subr.bf16.mxu0 %v206
    %271 = vmatpush1.bf16.msra.mxu0 %v205
    %272 = vmatprep.subr.bf16.mxu0 %v214
    %273 = vmatpush1.bf16.msra.mxu0 %v213
    %274 = vmatprep.subr.bf16.mxu0 %v222
    %275 = vmatpush1.bf16.msra.mxu0 %v221
    %276 = vmatprep.subr.bf16.mxu0 0
    %277 = vmatpush1.bf16.msra.mxu0 0
    %278 = vmatprep.subr.bf16.mxu0 0
    %279 = vmatpush1.bf16.msra.mxu0 0
    %280 = vmatprep.subr.bf16.mxu0 0
    %281 = vmatpush1.bf16.msra.mxu0 0
    %282 = vmatprep.subr.bf16.mxu0 0
    %283 = vmatpush1.bf16.msra.mxu0 0
    %284 = vmatprep.subr.bf16.mxu0 0
    %285 = vmatpush1.bf16.msra.mxu0 0
    %286 = vmatprep.subr.bf16.mxu0 0
    %287 = vmatpush1.bf16.msra.mxu0 0
    %288 = vmatprep.subr.bf16.mxu0 0
    %289 = vmatpush1.bf16.msra.mxu0 0
    %290 = vmatprep.subr.bf16.mxu0 0
    %291 = vmatpush1.bf16.msra.mxu0 0
    %292 = vmatprep.subr.bf16.mxu0 0
    %293 = vmatpush1.bf16.msra.mxu0 0
    %294 = vmatprep.subr.bf16.mxu0 0
    %295 = vmatpush1.bf16.msra.mxu0 0
    %296 = vmatprep.subr.bf16.mxu0 0
    %297 = vmatpush1.bf16.msra.mxu0 0
    %298 = vmatprep.subr.bf16.mxu0 0
    %299 = vmatpush1.bf16.msra.mxu0 0
    %300 = vmatprep.mubr.bf16.mxu0 0
    %301 = vmatmul.mubr.bf16.gmra.mrb[0].mxu0 %v263
    %v302 = vpop.f32.mrb[0].mxu0
    %v303 = vadd.f32 0.0, %v302
    %v304 = vpop.f32.mrb[0].mxu0
    %v305 = vadd.f32 0.0, %v304
    %v306 = vpop.f32.mrb[0].mxu0
    %v307 = vadd.f32 0.0, %v306
    %v308 = vpop.f32.mrb[0].mxu0
    %v309 = vadd.f32 0.0, %v308
    %310 = vmatprep.mubr.bf16.mxu0 0
    %311 = vmatmul.mubr.bf16.gmra.mrb[0].mxu0 %v266
    %v312 = vpop.f32.mrb[0].mxu0
    %v313 = vadd.f32 0.0, %v312
    %v314 = vpop.f32.mrb[0].mxu0
    %v315 = vadd.f32 0.0, %v314
    %v316 = vpop.f32.mrb[0].mxu0
    %v317 = vadd.f32 0.0, %v316
    %v318 = vpop.f32.mrb[0].mxu0
    %v319 = vadd.f32 0.0, %v318
    %320 = vdwg.mxu0
    %321 = vmatprep.subr.bf16.mxu0 %v200
    %322 = vmatpush1.bf16.msra.mxu0 %v199
    %323 = vmatprep.subr.bf16.mxu0 %v208
    %324 = vmatpush1.bf16.msra.mxu0 %v207
    %325 = vmatprep.subr.bf16.mxu0 %v216
    %326 = vmatpush1.bf16.msra.mxu0 %v215
    %327 = vmatprep.subr.bf16.mxu0 %v224
    %328 = vmatpush1.bf16.msra.mxu0 %v223
    %329 = vmatprep.subr.bf16.mxu0 0
    %330 = vmatpush1.bf16.msra.mxu0 0
    %331 = vmatprep.subr.bf16.mxu0 0
    %332 = vmatpush1.bf16.msra.mxu0 0
    %333 = vmatprep.subr.bf16.mxu0 0
    %334 = vmatpush1.bf16.msra.mxu0 0
    %335 = vmatprep.subr.bf16.mxu0 0
    %336 = vmatpush1.bf16.msra.mxu0 0
    %337 = vmatprep.subr.bf16.mxu0 0
    %338 = vmatpush1.bf16.msra.mxu0 0
    %339 = vmatprep.subr.bf16.mxu0 0
    %340 = vmatpush1.bf16.msra.mxu0 0
    %341 = vmatprep.subr.bf16.mxu0 0
    %342 = vmatpush1.bf16.msra.mxu0 0
    %343 = vmatprep.subr.bf16.mxu0 0
    %344 = vmatpush1.bf16.msra.mxu0 0
    %345 = vmatprep.subr.bf16.mxu0 0
    %346 = vmatpush1.bf16.msra.mxu0 0
    %347 = vmatprep.subr.bf16.mxu0 0
    %348 = vmatpush1.bf16.msra.mxu0 0
    %349 = vmatprep.subr.bf16.mxu0 0
    %350 = vmatpush1.bf16.msra.mxu0 0
    %351 = vmatprep.subr.bf16.mxu0 0
    %352 = vmatpush1.bf16.msra.mxu0 0
    %353 = vmatprep.mubr.bf16.mxu0 0
    %354 = vmatmul.mubr.bf16.gmra.mrb[0].mxu0 %v263
    %v355 = vpop.f32.mrb[0].mxu0
    %v356 = vadd.f32 0.0, %v355
    %v357 = vpop.f32.mrb[0].mxu0
    %v358 = vadd.f32 0.0, %v357
    %v359 = vpop.f32.mrb[0].mxu0
    %v360 = vadd.f32 0.0, %v359
    %v361 = vpop.f32.mrb[0].mxu0
    %v362 = vadd.f32 0.0, %v361
    %363 = vmatprep.mubr.bf16.mxu0 0
    %364 = vmatmul.mubr.bf16.gmra.mrb[0].mxu0 %v266
    %v365 = vpop.f32.mrb[0].mxu0
    %v366 = vadd.f32 0.0, %v365
    %v367 = vpop.f32.mrb[0].mxu0
    %v368 = vadd.f32 0.0, %v367
    %v369 = vpop.f32.mrb[0].mxu0
    %v370 = vadd.f32 0.0, %v369
    %v371 = vpop.f32.mrb[0].mxu0
    %v372 = vadd.f32 0.0, %v371
    %373 = vdwg.mxu0
    %374 = vmatprep.subr.bf16.mxu0 %v202
    %375 = vmatpush1.bf16.msra.mxu0 %v201
    %376 = vmatprep.subr.bf16.mxu0 %v210
    %377 = vmatpush1.bf16.msra.mxu0 %v209
    %378 = vmatprep.subr.bf16.mxu0 %v218
    %379 = vmatpush1.bf16.msra.mxu0 %v217
    %380 = vmatprep.subr.bf16.mxu0 %v226
    %381 = vmatpush1.bf16.msra.mxu0 %v225
    %382 = vmatprep.subr.bf16.mxu0 0
    %383 = vmatpush1.bf16.msra.mxu0 0
    %384 = vmatprep.subr.bf16.mxu0 0
    %385 = vmatpush1.bf16.msra.mxu0 0
    %386 = vmatprep.subr.bf16.mxu0 0
    %387 = vmatpush1.bf16.msra.mxu0 0
    %388 = vmatprep.subr.bf16.mxu0 0
    %389 = vmatpush1.bf16.msra.mxu0 0
    %390 = vmatprep.subr.bf16.mxu0 0
    %391 = vmatpush1.bf16.msra.mxu0 0
    %392 = vmatprep.subr.bf16.mxu0 0
    %393 = vmatpush1.bf16.msra.mxu0 0
    %394 = vmatprep.subr.bf16.mxu0 0
    %395 = vmatpush1.bf16.msra.mxu0 0
    %396 = vmatprep.subr.bf16.mxu0 0
    %397 = vmatpush1.bf16.msra.mxu0 0
    %398 = vmatprep.subr.bf16.mxu0 0
    %399 = vmatpush1.bf16.msra.mxu0 0
    %400 = vmatprep.subr.bf16.mxu0 0
    %401 = vmatpush1.bf16.msra.mxu0 0
    %402 = vmatprep.subr.bf16.mxu0 0
    %403 = vmatpush1.bf16.msra.mxu0 0
    %404 = vmatprep.subr.bf16.mxu0 0
    %405 = vmatpush1.bf16.msra.mxu0 0
    %406 = vmatprep.mubr.bf16.mxu0 0
    %407 = vmatmul.mubr.bf16.gmra.mrb[0].mxu0 %v263
    %v408 = vpop.f32.mrb[0].mxu0
    %v409 = vadd.f32 0.0, %v408
    %v410 = vpop.f32.mrb[0].mxu0
    %v411 = vadd.f32 0.0, %v410
    %v412 = vpop.f32.mrb[0].mxu0
    %v413 = vadd.f32 0.0, %v412
    %v414 = vpop.f32.mrb[0].mxu0
    %v415 = vadd.f32 0.0, %v414
    %416 = vmatprep.mubr.bf16.mxu0 0
    %417 = vmatmul.mubr.bf16.gmra.mrb[0].mxu0 %v266
    %v418 = vpop.f32.mrb[0].mxu0
    %v419 = vadd.f32 0.0, %v418
    %v420 = vpop.f32.mrb[0].mxu0
    %v421 = vadd.f32 0.0, %v420
    %v422 = vpop.f32.mrb[0].mxu0
    %v423 = vadd.f32 0.0, %v422
    %v424 = vpop.f32.mrb[0].mxu0
    %v425 = vadd.f32 0.0, %v424
    %426 = vdwg.mxu0
    %427 = vmatprep.subr.bf16.mxu0 %v204
    %428 = vmatpush1.bf16.msra.mxu0 %v203
    %429 = vmatprep.subr.bf16.mxu0 %v212
    %430 = vmatpush1.bf16.msra.mxu0 %v211
    %431 = vmatprep.subr.bf16.mxu0 %v220
    %432 = vmatpush1.bf16.msra.mxu0 %v219
    %433 = vmatprep.subr.bf16.mxu0 %v228
    %434 = vmatpush1.bf16.msra.mxu0 %v227
    %435 = vmatprep.subr.bf16.mxu0 0
    %436 = vmatpush1.bf16.msra.mxu0 0
    %437 = vmatprep.subr.bf16.mxu0 0
    %438 = vmatpush1.bf16.msra.mxu0 0
    %439 = vmatprep.subr.bf16.mxu0 0
    %440 = vmatpush1.bf16.msra.mxu0 0
    %441 = vmatprep.subr.bf16.mxu0 0
    %442 = vmatpush1.bf16.msra.mxu0 0
    %443 = vmatprep.subr.bf16.mxu0 0
    %444 = vmatpush1.bf16.msra.mxu0 0
    %445 = vmatprep.subr.bf16.mxu0 0
    %446 = vmatpush1.bf16.msra.mxu0 0
    %447 = vmatprep.subr.bf16.mxu0 0
    %448 = vmatpush1.bf16.msra.mxu0 0
    %449 = vmatprep.subr.bf16.mxu0 0
    %450 = vmatpush1.bf16.msra.mxu0 0
    %451 = vmatprep.subr.bf16.mxu0 0
    %452 = vmatpush1.bf16.msra.mxu0 0
    %453 = vmatprep.subr.bf16.mxu0 0
    %454 = vmatpush1.bf16.msra.mxu0 0
    %455 = vmatprep.subr.bf16.mxu0 0
    %456 = vmatpush1.bf16.msra.mxu0 0
    %457 = vmatprep.subr.bf16.mxu0 0
    %458 = vmatpush1.bf16.msra.mxu0 0
    %459 = vmatprep.mubr.bf16.mxu0 0
    %460 = vmatmul.mubr.bf16.gmra.mrb[0].mxu0 %v263
    %v461 = vpop.f32.mrb[0].mxu0
    %v462 = vadd.f32 0.0, %v461
    %v463 = vpop.f32.mrb[0].mxu0
    %v464 = vadd.f32 0.0, %v463
    %v465 = vpop.f32.mrb[0].mxu0
    %v466 = vadd.f32 0.0, %v465
    %v467 = vpop.f32.mrb[0].mxu0
    %v468 = vadd.f32 0.0, %v467
    %469 = vmatprep.mubr.bf16.mxu0 0
    %470 = vmatmul.mubr.bf16.gmra.mrb[0].mxu0 %v266
    %v471 = vpop.f32.mrb[0].mxu0
    %v472 = vadd.f32 0.0, %v471
    %v473 = vpop.f32.mrb[0].mxu0
    %v474 = vadd.f32 0.0, %v473
    %v475 = vpop.f32.mrb[0].mxu0
    %v476 = vadd.f32 0.0, %v475
    %v477 = vpop.f32.mrb[0].mxu0
    %v478 = vadd.f32 0.0, %v477
    %479 = vdwg.mxu0
    %v480 = vld [vmem:[#allocation2] sm:$0xff]
    %v481 = vld [vmem:[#allocation2 + $0x8] sm:$0xff]
    %v482 = vld [vmem:[#allocation2 + $0x10] sm:$0xff]
    %v483 = vld [vmem:[#allocation2 + $0x18] sm:$0xff]
    %v484 = vmax.f32 %v303, %v305
    %v485 = vmax.f32 %v484, %v356
    %v486 = vmax.f32 %v485, %v358
    %v487 = vmax.f32 %v486, %v409
    %v488 = vmax.f32 %v487, %v411
    %v489 = vmax.f32 %v488, %v462
    %v490 = vmax.f32 %v489, %v464
    %491 = vmax.xlane.f32.xlu0 %v490
    %v492 = vpop.xlane.xlu0 %491
    %v493 = vmax.f32 %v307, %v309
    %v494 = vmax.f32 %v493, %v360
    %v495 = vmax.f32 %v494, %v362
    %v496 = vmax.f32 %v495, %v413
    %v497 = vmax.f32 %v496, %v415
    %v498 = vmax.f32 %v497, %v466
    %v499 = vmax.f32 %v498, %v468
    %500 = vmax.xlane.f32.xlu0 %v499
    %v501 = vpop.xlane.xlu0 %500
    %v502 = vmax.f32 %v313, %v315
    %v503 = vmax.f32 %v502, %v366
    %v504 = vmax.f32 %v503, %v368
    %v505 = vmax.f32 %v504, %v419
    %v506 = vmax.f32 %v505, %v421
    %v507 = vmax.f32 %v506, %v472
    %v508 = vmax.f32 %v507, %v474
    %509 = vmax.xlane.f32.xlu0 %v508
    %v510 = vpop.xlane.xlu0 %509
    %v511 = vmax.f32 %v317, %v319
    %v512 = vmax.f32 %v511, %v370
    %v513 = vmax.f32 %v512, %v372
    %v514 = vmax.f32 %v513, %v423
    %v515 = vmax.f32 %v514, %v425
    %v516 = vmax.f32 %v515, %v476
    %v517 = vmax.f32 %v516, %v478
    %518 = vmax.xlane.f32.xlu0 %v517
    %v519 = vpop.xlane.xlu0 %518
    %v520 = vmax.f32 %v480, %v492
    %v521 = vmax.f32 %v481, %v501
    %v522 = vmax.f32 %v482, %v510
    %v523 = vmax.f32 %v483, %v519
    %v524 = vld [vmem:[#allocation3] sm:$0xff]
    %v525 = vld [vmem:[#allocation3 + $0x8] sm:$0xff]
    %v526 = vld [vmem:[#allocation3 + $0x10] sm:$0xff]
    %v527 = vld [vmem:[#allocation3 + $0x18] sm:$0xff]
    %v528 = vsub.f32 %v480, %v520
    %v529 = vsub.f32 %v481, %v521
    %v530 = vsub.f32 %v482, %v522
    %v531 = vsub.f32 %v483, %v523
    %v532 = vmul.f32 %v528, 1.442695
    %v533 = vpow.pop %v532
    %v534 = vmul.f32 %v529, 1.442695
    %v535 = vpow.pop %v534
    %v536 = vmul.f32 %v530, 1.442695
    %v537 = vpow.pop %v536
    %v538 = vmul.f32 %v531, 1.442695
    %v539 = vpow.pop %v538
    %v540 = vmul.f32 %v524, %v533
    %v541 = vmul.f32 %v525, %v535
    %v542 = vmul.f32 %v526, %v537
    %v543 = vmul.f32 %v527, %v539
    %545 = vset.pattern.permute.xlu0 0
    %546 = vperm.xlu0 %545, %v520
    %v547 = vpop.permute.xlu0 %546
    %550 = vset.pattern.permute.xlu0 0
    %551 = vperm.xlu0 %550, %v521
    %v552 = vpop.permute.xlu0 %551
    %555 = vset.pattern.permute.xlu0 0
    %556 = vperm.xlu0 %555, %v522
    %v557 = vpop.permute.xlu0 %556
    %560 = vset.pattern.permute.xlu0 0
    %561 = vperm.xlu0 %560, %v523
    %v562 = vpop.permute.xlu0 %561
    %v564 = vsub.f32 %v303, %v547
    %v565 = vsub.f32 %v305, %v547
    %v566 = vsub.f32 %v356, %v547
    %v567 = vsub.f32 %v358, %v547
    %v568 = vsub.f32 %v409, %v547
    %v569 = vsub.f32 %v411, %v547
    %v570 = vsub.f32 %v462, %v547
    %v571 = vsub.f32 %v464, %v547
    %v572 = vsub.f32 %v307, %v552
    %v573 = vsub.f32 %v309, %v552
    %v574 = vsub.f32 %v360, %v552
    %v575 = vsub.f32 %v362, %v552
    %v576 = vsub.f32 %v413, %v552
    %v577 = vsub.f32 %v415, %v552
    %v578 = vsub.f32 %v466, %v552
    %v579 = vsub.f32 %v468, %v552
    %v580 = vsub.f32 %v313, %v557
    %v581 = vsub.f32 %v315, %v557
    %v582 = vsub.f32 %v366, %v557
    %v583 = vsub.f32 %v368, %v557
    %v584 = vsub.f32 %v419, %v557
    %v585 = vsub.f32 %v421, %v557
    %v586 = vsub.f32 %v472, %v557
    %v587 = vsub.f32 %v474, %v557
    %v588 = vsub.f32 %v317, %v562
    %v589 = vsub.f32 %v319, %v562
    %v590 = vsub.f32 %v370, %v562
    %v591 = vsub.f32 %v372, %v562
    %v592 = vsub.f32 %v423, %v562
    %v593 = vsub.f32 %v425, %v562
    %v594 = vsub.f32 %v476, %v562
    %v595 = vsub.f32 %v478, %v562
    %v596 = vmul.f32 %v564, 1.442695
    %v597 = vpow.pop %v596
    %v598 = vmul.f32 %v565, 1.442695
    %v599 = vpow.pop %v598
    %v600 = vmul.f32 %v566, 1.442695
    %v601 = vpow.pop %v600
    %v602 = vmul.f32 %v567, 1.442695
    %v603 = vpow.pop %v602
    %v604 = vmul.f32 %v568, 1.442695
    %v605 = vpow.pop %v604
    %v606 = vmul.f32 %v569, 1.442695
    %v607 = vpow.pop %v606
    %v608 = vmul.f32 %v570, 1.442695
    %v609 = vpow.pop %v608
    %v610 = vmul.f32 %v571, 1.442695
    %v611 = vpow.pop %v610
    %v612 = vmul.f32 %v572, 1.442695
    %v613 = vpow.pop %v612
    %v614 = vmul.f32 %v573, 1.442695
    %v615 = vpow.pop %v614
    %v616 = vmul.f32 %v574, 1.442695
    %v617 = vpow.pop %v616
    %v618 = vmul.f32 %v575, 1.442695
    %v619 = vpow.pop %v618
    %v620 = vmul.f32 %v576, 1.442695
    %v621 = vpow.pop %v620
    %v622 = vmul.f32 %v577, 1.442695
    %v623 = vpow.pop %v622
    %v624 = vmul.f32 %v578, 1.442695
    %v625 = vpow.pop %v624
    %v626 = vmul.f32 %v579, 1.442695
    %v627 = vpow.pop %v626
    %v628 = vmul.f32 %v580, 1.442695
    %v629 = vpow.pop %v628
    %v630 = vmul.f32 %v581, 1.442695
    %v631 = vpow.pop %v630
    %v632 = vmul.f32 %v582, 1.442695
    %v633 = vpow.pop %v632
    %v634 = vmul.f32 %v583, 1.442695
    %v635 = vpow.pop %v634
    %v636 = vmul.f32 %v584, 1.442695
    %v637 = vpow.pop %v636
    %v638 = vmul.f32 %v585, 1.442695
    %v639 = vpow.pop %v638
    %v640 = vmul.f32 %v586, 1.442695
    %v641 = vpow.pop %v640
    %v642 = vmul.f32 %v587, 1.442695
    %v643 = vpow.pop %v642
    %v644 = vmul.f32 %v588, 1.442695
    %v645 = vpow.pop %v644
    %v646 = vmul.f32 %v589, 1.442695
    %v647 = vpow.pop %v646
    %v648 = vmul.f32 %v590, 1.442695
    %v649 = vpow.pop %v648
    %v650 = vmul.f32 %v591, 1.442695
    %v651 = vpow.pop %v650
    %v652 = vmul.f32 %v592, 1.442695
    %v653 = vpow.pop %v652
    %v654 = vmul.f32 %v593, 1.442695
    %v655 = vpow.pop %v654
    %v656 = vmul.f32 %v594, 1.442695
    %v657 = vpow.pop %v656
    %v658 = vmul.f32 %v595, 1.442695
    %v659 = vpow.pop %v658
    %v660 = vadd.f32 %v597, %v599
    %v661 = vadd.f32 %v660, %v601
    %v662 = vadd.f32 %v661, %v603
    %v663 = vadd.f32 %v662, %v605
    %v664 = vadd.f32 %v663, %v607
    %v665 = vadd.f32 %v664, %v609
    %v666 = vadd.f32 %v665, %v611
    %667 = vadd.xlane.f32.xlu0 %v666
    %v668 = vpop.xlane.xlu0 %667
    %v669 = vadd.f32 %v613, %v615
    %v670 = vadd.f32 %v669, %v617
    %v671 = vadd.f32 %v670, %v619
    %v672 = vadd.f32 %v671, %v621
    %v673 = vadd.f32 %v672, %v623
    %v674 = vadd.f32 %v673, %v625
    %v675 = vadd.f32 %v674, %v627
    %676 = vadd.xlane.f32.xlu0 %v675
    %v677 = vpop.xlane.xlu0 %676
    %v678 = vadd.f32 %v629, %v631
    %v679 = vadd.f32 %v678, %v633
    %v680 = vadd.f32 %v679, %v635
    %v681 = vadd.f32 %v680, %v637
    %v682 = vadd.f32 %v681, %v639
    %v683 = vadd.f32 %v682, %v641
    %v684 = vadd.f32 %v683, %v643
    %685 = vadd.xlane.f32.xlu0 %v684
    %v686 = vpop.xlane.xlu0 %685
    %v687 = vadd.f32 %v645, %v647
    %v688 = vadd.f32 %v687, %v649
    %v689 = vadd.f32 %v688, %v651
    %v690 = vadd.f32 %v689, %v653
    %v691 = vadd.f32 %v690, %v655
    %v692 = vadd.f32 %v691, %v657
    %v693 = vadd.f32 %v692, %v659
    %694 = vadd.xlane.f32.xlu0 %v693
    %v695 = vpop.xlane.xlu0 %694
    %v696 = vadd.f32 %v540, %v668
    %v697 = vadd.f32 %v541, %v677
    %v698 = vadd.f32 %v542, %v686
    %v699 = vadd.f32 %v543, %v695
    %vm700 = vcmask 7168
    %701 = vst.msk [vmem:[#allocation3] sm:$0xff] %vm700, %v696
    %702 = vst.msk [vmem:[#allocation3 + $0x8] sm:$0xff] %vm700, %v697
    %703 = vst.msk [vmem:[#allocation3 + $0x10] sm:$0xff] %vm700, %v698
    %704 = vst.msk [vmem:[#allocation3 + $0x18] sm:$0xff] %vm700, %v699
    %705 = vst.msk [vmem:[#allocation2] sm:$0xff] %vm700, %v520
    %706 = vst.msk [vmem:[#allocation2 + $0x8] sm:$0xff] %vm700, %v521
    %707 = vst.msk [vmem:[#allocation2 + $0x10] sm:$0xff] %vm700, %v522
    %708 = vst.msk [vmem:[#allocation2 + $0x18] sm:$0xff] %vm700, %v523
    // Predicated region
    $region22: #{etm_forward.4} parent=1 // pred_check
      %p709 = pneg %p42
    $region23: #{etm_forward.4} parent=1 // pred_check_branch
      %711 = sbr.rel (%p709) target = $region25
    $region24: #{etm_forward.4} parent=1 // pred_region
      %v712 = vld [vmem:[#allocation2] sm:$0xff]
      %v713 = vld [vmem:[#allocation2 + $0x8] sm:$0xff]
      %v714 = vld [vmem:[#allocation2 + $0x10] sm:$0xff]
      %v715 = vld [vmem:[#allocation2 + $0x18] sm:$0xff]
      %716 = vst.msk [vmem:[%s2] sm:$0xff] %vm700, %v712
      %717 = vst.msk [vmem:[%s2 + $0x8] sm:$0xff] %vm700, %v713
      %718 = vst.msk [vmem:[%s2 + $0x10] sm:$0xff] %vm700, %v714
      %719 = vst.msk [vmem:[%s2 + $0x18] sm:$0xff] %vm700, %v715
      %v720 = vld [vmem:[#allocation3] sm:$0xff]
      %v721 = vld [vmem:[#allocation3 + $0x8] sm:$0xff]
      %v722 = vld [vmem:[#allocation3 + $0x10] sm:$0xff]
      %v723 = vld [vmem:[#allocation3 + $0x18] sm:$0xff]
      %v724 = vrcp.pop %v720
      %v725 = vmul.f32 1.0, %v724
      %v726 = vrcp.pop %v721
      %v727 = vmul.f32 1.0, %v726
      %v728 = vrcp.pop %v722
      %v729 = vmul.f32 1.0, %v728
      %v730 = vrcp.pop %v723
      %v731 = vmul.f32 1.0, %v730
      %732 = vst.msk [vmem:[%s3] sm:$0xff] %vm700, %v725
      %733 = vst.msk [vmem:[%s3 + $0x8] sm:$0xff] %vm700, %v727
      %734 = vst.msk [vmem:[%s3 + $0x10] sm:$0xff] %vm700, %v729
      %735 = vst.msk [vmem:[%s3 + $0x18] sm:$0xff] %vm700, %v731
    $region25: #{etm_forward.4} parent=1 // pred_fallthru
      _
    // Predicated region
    $region26: #{etm_forward.4} parent=1 // pred_check
      _
    $region27: #{etm_forward.4} parent=1 // pred_check_branch
      %737 = sbr.rel (0) target = $region29
    $region28: #{etm_forward.4} parent=1 // pred_region
      _
    $region29: #{etm_forward.4} parent=1 // pred_fallthru
      _
    // Predicated region
    $region30: #{etm_forward.4} parent=1 // pred_check
      _
    $region31: #{etm_forward.4} parent=1 // pred_check_branch
      %739 = sbr.rel (0) target = $region33
    $region32: #{etm_forward.4} parent=1 // pred_region
      _
    $region33: #{etm_forward.4} parent=1 // pred_fallthru
      _
    // Predicated region
    $region34: #{etm_forward.4} parent=1 // pred_check
      _
    $region35: #{etm_forward.4} parent=1 // pred_check_branch
      %741 = sbr.rel (0) target = $region37
    $region36: #{etm_forward.4} parent=1 // pred_region
      _
    $region37: #{etm_forward.4} parent=1 // pred_fallthru
      _
    // Predicated region
    $region38: #{etm_forward.4} parent=1 // pred_check
      _
    $region39: #{etm_forward.4} parent=1 // pred_check_branch
      %743 = sbr.rel (0) target = $region41
    $region40: #{etm_forward.4} parent=1 // pred_region
      _
    $region41: #{etm_forward.4} parent=1 // pred_fallthru
      _
    %744 = vsyncpa [#allocation5], 1
    %745 = vsyncpa [#allocation7], 1

// kernel: etm_forward.6
$region0: #{etm_forward.6}
  #allocation0 [shape = 'u32[]', space=smem, size = 0x4, offset = 0x4, fixed_abs, tag = 'smem constant byte address 0x4 - core index']
  #allocation1 [shape = 'u32[144,128]{1,0:T(1,128)}', space=vmem, size = 0x12000, scoped, tag = 'internal scratch']
  #allocation2 [shape = 'f32[128,128]{1,0:T(8,128)}', space=vmem, size = 0x10000, scoped, tag = 'scratch operand']
  %s0 = inlined_call_operand.hbm [shape: f32[256,1024], index: 0, kind: input, shape index: {}]
  %s1 = inlined_call_operand.vmem [shape: bf16[1024,128], index: 1, kind: input, shape index: {}]
  %s2 = inlined_call_operand.hbm [shape: f32[1,128], index: 2, kind: input, shape index: {}]
  %s3 = inlined_call_operand.vmem [shape: f32[128,128], index: 3, kind: input, shape index: {}]
  %s4 = inlined_call_operand.vmem [shape: f32[1,128], index: 4, kind: input, shape index: {}]
  %s5 = inlined_call_operand.vmem [shape: f32[128,64], index: 5, kind: input, shape index: {}]
  %s6 = inlined_call_operand.vmem [shape: f32[1,64], index: 6, kind: input, shape index: {}]
  %s7 = inlined_call_operand.vmem [shape: f32[256,32], index: 7, kind: output, shape index: {0}]
  %s8 = inlined_call_operand.vmem [shape: f32[256,1], index: 8, kind: output, shape index: {1}]
  %9 = xla_tuple %s7, %s8
  %s10 = sld [smem:[#allocation0]]
  $region85: #{etm_forward.6} parent=0
    _
  %s12 = ssub.s32 1, %s10
  %s13 = scalar_select 0, %s12, %s10
  $region1: #{etm_forward.6} parent=0
    #allocation3 [shape = 'u8[524288]{0}', space=vmem, size = 0x80000, scoped, tag = 'input window, operand 0']
    #allocation4 [shape = 's32[2]{0}', space=sflag, size = 0x8, scoped, tag = 'scoped memory for etm_forward.6']
    #allocation5 [shape = 'u8[512]{0}', space=vmem, size = 0x400, scoped, tag = 'input window, operand 2, single buffered']
    #allocation6 [shape = 's32[1]{0}', space=sflag, size = 0x4, scoped, tag = 'scoped memory for etm_forward.6']
    %14 = vsyncpa [#allocation4], 0
    %s15 = scalar_lea.sflag [#allocation4], 1
    %16 = vsyncpa %s15, 0
    %17 = vsyncpa [#allocation6], 0
    loop: start=0, step=1, limit=6
    $region2: #{etm_forward.6} parent=1 // loop_pre_header
      _
    $region3: #{etm_forward.6} parent=1 // loop_header
      %s19 = sphi 0, %s23
      %p20 = scmp.ge.s32.totalorder %s19, 6
      %s26 = sphi 0, %s38
      %s27 = sphi 0, %s34
      %s28 = sphi 0, %s26
      %s29 = sphi 0, %s27
      %s30 = sphi 0, %s28
      %s31 = sphi 0, %s29
      %s43 = sphi 0, %s45
      %s46 = sphi 0, %s43
      %s47 = sphi 0, %s46
      %s63 = sphi 0, %s47
      %s69 = sphi 0, %s71
      %s72 = sphi 0, %s69
      %s73 = sphi 0, %s72
      %s89 = sphi 0, %s73
      %s93 = sphi 0, %s93
      %s95 = sphi 0, %s93
      %s96 = sphi 0, %s95
      %s110 = sphi 0, %s96
      %s114 = sphi 0, %s114
      %s116 = sphi 0, %s114
      %s117 = sphi 0, %s116
      %s131 = sphi 0, %s117
      %s135 = sphi 0, %s135
      %s137 = sphi 0, %s135
      %s138 = sphi 0, %s137
      %s152 = sphi 0, %s138
      %s156 = sphi 0, %s156
      %s158 = sphi 0, %s156
      %s159 = sphi 0, %s158
      %s173 = sphi 0, %s159
      %s177 = sphi 0, %s177
      %s179 = sphi 0, %s177
      %s180 = sphi 0, %s179
      %s194 = sphi 0, %s180
      %s200 = sphi 0, %s202
      %s203 = sphi 0, %s200
      %s204 = sphi 0, %s203
      %s220 = sphi 0, %s204
      %s226 = sphi 0, %s228
      %s229 = sphi 0, %s226
      %s230 = sphi 0, %s229
      %s246 = sphi 0, %s230
    $region4: #{etm_forward.6} parent=1 // loop_header_branch
      %22 = sbr.rel (%p20) target = $region8
    $region5: #{etm_forward.6} parent=1 // loop_body
      %s24 = ssub.s32 %s19, 1
      %s25 = ssub.s32 %s19, 2
      %s32 = sadd.s32 1, %s27
      %p33 = scmp.ge.s32.totalorder %s32, 2
      %s34 = scalar_select %p33, 0, %s32
      %s35 = sadd.s32 1, %s26
      %s36 = scalar_select %p33, %s35, %s26
      %p37 = scmp.ge.s32.totalorder %s36, 2
      %s38 = scalar_select %p37, 0, %s36
      %s39 = ssub.s32 %s26, %s38
      %s40 = ssub.s32 %s27, %s34
      %s41 = sor.u32 %s39, %s40
      %p42 = scmp.eq.s32.totalorder %s41, 0
      %s44 = sadd.s32 %s43, 1
      %s45 = scalar_select %p42, %s43, %s44
      %p48 = pneg %p42
      %p49 = scmp.eq.s32.totalorder %s19, 3
      %p50 = por %p48, %p49
      %p51 = scmp.ne.s32.totalorder %s43, %s46
      %p52 = scmp.eq.s32.totalorder %s19, 0
      %p53 = por %p51, %p52
      %p54 = scmp.ne.s32.totalorder %s43, %s46
      %p55 = scmp.eq.s32.totalorder %s24, 3
      %p56 = por %p54, %p55
      %p57 = scmp.ne.s32.totalorder %s46, %s47
      %p58 = scmp.eq.s32.totalorder %s24, 0
      %p59 = por %p57, %p58
      %p60 = scmp.ne.s32.totalorder %s46, %s47
      %p61 = scmp.eq.s32.totalorder %s25, 3
      %p62 = por %p60, %p61
      %p64 = scmp.ne.s32.totalorder %s47, %s63
      %p65 = scmp.eq.s32.totalorder %s25, 0
      %p66 = por %p64, %p65
      %s67 = ssub.s32 %s27, %s34
      %p68 = scmp.eq.s32.totalorder %s67, 0
      %s70 = sadd.s32 %s69, 1
      %s71 = scalar_select %p68, %s69, %s70
      %p74 = pneg %p68
      %p75 = scmp.eq.s32.totalorder %s19, 3
      %p76 = por %p74, %p75
      %p77 = scmp.ne.s32.totalorder %s69, %s72
      %p78 = scmp.eq.s32.totalorder %s19, 0
      %p79 = por %p77, %p78
      %p80 = scmp.ne.s32.totalorder %s69, %s72
      %p81 = scmp.eq.s32.totalorder %s24, 3
      %p82 = por %p80, %p81
      %p83 = scmp.ne.s32.totalorder %s72, %s73
      %p84 = scmp.eq.s32.totalorder %s24, 0
      %p85 = por %p83, %p84
      %p86 = scmp.ne.s32.totalorder %s72, %s73
      %p87 = scmp.eq.s32.totalorder %s25, 3
      %p88 = por %p86, %p87
      %p90 = scmp.ne.s32.totalorder %s73, %s89
      %p91 = scmp.eq.s32.totalorder %s25, 0
      %p92 = por %p90, %p91
      %s94 = sadd.s32 %s93, 1
      %p97 = scmp.eq.s32.totalorder %s19, 3
      %p98 = scmp.ne.s32.totalorder %s93, %s95
      %p99 = scmp.eq.s32.totalorder %s19, 0
      %p100 = por %p98, %p99
      %p101 = scmp.ne.s32.totalorder %s93, %s95
      %p102 = scmp.eq.s32.totalorder %s24, 3
      %p103 = por %p101, %p102
      %p104 = scmp.ne.s32.totalorder %s95, %s96
      %p105 = scmp.eq.s32.totalorder %s24, 0
      %p106 = por %p104, %p105
      %p107 = scmp.ne.s32.totalorder %s95, %s96
      %p108 = scmp.eq.s32.totalorder %s25, 3
      %p109 = por %p107, %p108
      %p111 = scmp.ne.s32.totalorder %s96, %s110
      %p112 = scmp.eq.s32.totalorder %s25, 0
      %p113 = por %p111, %p112
      %s115 = sadd.s32 %s114, 1
      %p118 = scmp.eq.s32.totalorder %s19, 3
      %p119 = scmp.ne.s32.totalorder %s114, %s116
      %p120 = scmp.eq.s32.totalorder %s19, 0
      %p121 = por %p119, %p120
      %p122 = scmp.ne.s32.totalorder %s114, %s116
      %p123 = scmp.eq.s32.totalorder %s24, 3
      %p124 = por %p122, %p123
      %p125 = scmp.ne.s32.totalorder %s116, %s117
      %p126 = scmp.eq.s32.totalorder %s24, 0
      %p127 = por %p125, %p126
      %p128 = scmp.ne.s32.totalorder %s116, %s117
      %p129 = scmp.eq.s32.totalorder %s25, 3
      %p130 = por %p128, %p129
      %p132 = scmp.ne.s32.totalorder %s117, %s131
      %p133 = scmp.eq.s32.totalorder %s25, 0
      %p134 = por %p132, %p133
      %s136 = sadd.s32 %s135, 1
      %p139 = scmp.eq.s32.totalorder %s19, 3
      %p140 = scmp.ne.s32.totalorder %s135, %s137
      %p141 = scmp.eq.s32.totalorder %s19, 0
      %p142 = por %p140, %p141
      %p143 = scmp.ne.s32.totalorder %s135, %s137
      %p144 = scmp.eq.s32.totalorder %s24, 3
      %p145 = por %p143, %p144
      %p146 = scmp.ne.s32.totalorder %s137, %s138
      %p147 = scmp.eq.s32.totalorder %s24, 0
      %p148 = por %p146, %p147
      %p149 = scmp.ne.s32.totalorder %s137, %s138
      %p150 = scmp.eq.s32.totalorder %s25, 3
      %p151 = por %p149, %p150
      %p153 = scmp.ne.s32.totalorder %s138, %s152
      %p154 = scmp.eq.s32.totalorder %s25, 0
      %p155 = por %p153, %p154
      %s157 = sadd.s32 %s156, 1
      %p160 = scmp.eq.s32.totalorder %s19, 3
      %p161 = scmp.ne.s32.totalorder %s156, %s158
      %p162 = scmp.eq.s32.totalorder %s19, 0
      %p163 = por %p161, %p162
      %p164 = scmp.ne.s32.totalorder %s156, %s158
      %p165 = scmp.eq.s32.totalorder %s24, 3
      %p166 = por %p164, %p165
      %p167 = scmp.ne.s32.totalorder %s158, %s159
      %p168 = scmp.eq.s32.totalorder %s24, 0
      %p169 = por %p167, %p168
      %p170 = scmp.ne.s32.totalorder %s158, %s159
      %p171 = scmp.eq.s32.totalorder %s25, 3
      %p172 = por %p170, %p171
      %p174 = scmp.ne.s32.totalorder %s159, %s173
      %p175 = scmp.eq.s32.totalorder %s25, 0
      %p176 = por %p174, %p175
      %s178 = sadd.s32 %s177, 1
      %p181 = scmp.eq.s32.totalorder %s19, 3
      %p182 = scmp.ne.s32.totalorder %s177, %s179
      %p183 = scmp.eq.s32.totalorder %s19, 0
      %p184 = por %p182, %p183
      %p185 = scmp.ne.s32.totalorder %s177, %s179
      %p186 = scmp.eq.s32.totalorder %s24, 3
      %p187 = por %p185, %p186
      %p188 = scmp.ne.s32.totalorder %s179, %s180
      %p189 = scmp.eq.s32.totalorder %s24, 0
      %p190 = por %p188, %p189
      %p191 = scmp.ne.s32.totalorder %s179, %s180
      %p192 = scmp.eq.s32.totalorder %s25, 3
      %p193 = por %p191, %p192
      %p195 = scmp.ne.s32.totalorder %s180, %s194
      %p196 = scmp.eq.s32.totalorder %s25, 0
      %p197 = por %p195, %p196
      %s198 = ssub.s32 %s26, %s38
      %p199 = scmp.eq.s32.totalorder %s198, 0
      %s201 = sadd.s32 %s200, 1
      %s202 = scalar_select %p199, %s200, %s201
      %p205 = pneg %p199
      %p206 = scmp.eq.s32.totalorder %s19, 3
      %p207 = por %p205, %p206
      %p208 = scmp.ne.s32.totalorder %s200, %s203
      %p209 = scmp.eq.s32.totalorder %s19, 0
      %p210 = por %p208, %p209
      %p211 = scmp.ne.s32.totalorder %s200, %s203
      %p212 = scmp.eq.s32.totalorder %s24, 3
      %p213 = por %p211, %p212
      %p214 = scmp.ne.s32.totalorder %s203, %s204
      %p215 = scmp.eq.s32.totalorder %s24, 0
      %p216 = por %p214, %p215
      %p217 = scmp.ne.s32.totalorder %s203, %s204
      %p218 = scmp.eq.s32.totalorder %s25, 3
      %p219 = por %p217, %p218
      %p221 = scmp.ne.s32.totalorder %s204, %s220
      %p222 = scmp.eq.s32.totalorder %s25, 0
      %p223 = por %p221, %p222
      %s224 = ssub.s32 %s26, %s38
      %p225 = scmp.eq.s32.totalorder %s224, 0
      %s227 = sadd.s32 %s226, 1
      %s228 = scalar_select %p225, %s226, %s227
      %p231 = pneg %p225
      %p232 = scmp.eq.s32.totalorder %s19, 3
      %p233 = por %p231, %p232
      %p234 = scmp.ne.s32.totalorder %s226, %s229
      %p235 = scmp.eq.s32.totalorder %s19, 0
      %p236 = por %p234, %p235
      %p237 = scmp.ne.s32.totalorder %s226, %s229
      %p238 = scmp.eq.s32.totalorder %s24, 3
      %p239 = por %p237, %p238
      %p240 = scmp.ne.s32.totalorder %s229, %s230
      %p241 = scmp.eq.s32.totalorder %s24, 0
      %p242 = por %p240, %p241
      %p243 = scmp.ne.s32.totalorder %s229, %s230
      %p244 = scmp.eq.s32.totalorder %s25, 3
      %p245 = por %p243, %p244
      %p247 = scmp.ne.s32.totalorder %s230, %s246
      %p248 = scmp.eq.s32.totalorder %s25, 0
      %p249 = por %p247, %p248
      %p250 = scmp.le.s32.totalorder 1, %s19
      %p251 = scmp.lt.s32.totalorder %s19, 5
      %p252 = pnand %p250, %p251
      %p253 = pneg %p252
      // Predicated region
      $region9: #{etm_forward.6} parent=5 // pred_check
        _
      $region10: #{etm_forward.6} parent=5 // pred_check_branch
        %255 = sbr.rel (%p252) target = $region12
      $region11: #{etm_forward.6} parent=5 // pred_region
        %s256 = ssub.s32 %s19, 1
        // Predicated region
        $region13: #{etm_forward.6} parent=11 // pred_check
          %p257 = pneg %p106
        $region14: #{etm_forward.6} parent=11 // pred_check_branch
          %259 = sbr.rel (%p257) target = $region16
        $region15: #{etm_forward.6} parent=11 // pred_region
          %s261 = ssub.s32 16, 16
          %262 = vsyncadd [#allocation6], %s261
          %s264 = sshll.u32 [#allocation5], 4
          %s265 = int_to_ptr.vmem [resolvable:$true] %s264
          %267 = dma.hbm_to_vmem [thread:$0]  %s2, 16, %s265, [#allocation6]
        $region16: #{etm_forward.6} parent=11 // pred_fallthru
          _
        // Predicated region
        $region17: #{etm_forward.6} parent=11 // pred_check
          %p268 = pneg %p127
        $region18: #{etm_forward.6} parent=11 // pred_check_branch
          %270 = sbr.rel (%p268) target = $region20
        $region19: #{etm_forward.6} parent=11 // pred_region
          _
        $region20: #{etm_forward.6} parent=11 // pred_fallthru
          _
        // Predicated region
        $region21: #{etm_forward.6} parent=11 // pred_check
          %p271 = pneg %p148
        $region22: #{etm_forward.6} parent=11 // pred_check_branch
          %273 = sbr.rel (%p271) target = $region24
        $region23: #{etm_forward.6} parent=11 // pred_region
          _
        $region24: #{etm_forward.6} parent=11 // pred_fallthru
          _
        // Predicated region
        $region25: #{etm_forward.6} parent=11 // pred_check
          %p274 = pneg %p169
        $region26: #{etm_forward.6} parent=11 // pred_check_branch
          %276 = sbr.rel (%p274) target = $region28
        $region27: #{etm_forward.6} parent=11 // pred_region
          _
        $region28: #{etm_forward.6} parent=11 // pred_fallthru
          _
        // Predicated region
        $region29: #{etm_forward.6} parent=11 // pred_check
          %p277 = pneg %p190
        $region30: #{etm_forward.6} parent=11 // pred_check_branch
          %279 = sbr.rel (%p277) target = $region32
        $region31: #{etm_forward.6} parent=11 // pred_region
          _
        $region32: #{etm_forward.6} parent=11 // pred_fallthru
          _
      $region12: #{etm_forward.6} parent=5 // pred_fallthru
        _
      %p280 = scmp.lt.s32.totalorder %s19, 4
      // Predicated region
      $region33: #{etm_forward.6} parent=5 // pred_check
        %p281 = pneg %p280
      $region34: #{etm_forward.6} parent=5 // pred_check_branch
        %283 = sbr.rel (%p281) target = $region36
      $region35: #{etm_forward.6} parent=5 // pred_region
        // Predicated region
        $region37: #{etm_forward.6} parent=35 // pred_check
          %p284 = pneg %p53
        $region38: #{etm_forward.6} parent=35 // pred_check_branch
          %286 = sbr.rel (%p284) target = $region40
        $region39: #{etm_forward.6} parent=35 // pred_region
          %s287 = sand.u32 %s43, 1
          %s288 = scalar_lea.sflag [#allocation4], %s287
          %s289 = sand.u32 %s43, 1
          %s290 = smul.addr %s289, 512
          %s291 = scalar_lea.vmem [#allocation3], %s290
          %s292 = smul.u32 16, %s26
          %s293 = smul.u32 4, %s27
          %s295 = ssub.s32 8192, 8192
          %296 = vsyncadd %s288, %s295
          %s297 = smul.addr %s292, 8
          %s298 = sadd.s32 %s293, %s297
          %s299 = smul.addr %s298, 128
          %s300 = scalar_lea.hbm %s0, %s299
          %s301 = sshll.u32 %s291, 4
          %s302 = int_to_ptr.vmem [resolvable:$true] %s301
          %307 = dma.hbm_to_vmem [thread:$0]  %s300, 8192, %s302, %s288, 1024, 512, 32
        $region40: #{etm_forward.6} parent=35 // pred_fallthru
          _
        // Predicated region
        $region41: #{etm_forward.6} parent=35 // pred_check
          %p308 = pneg %p79
        $region42: #{etm_forward.6} parent=35 // pred_check_branch
          %310 = sbr.rel (%p308) target = $region44
        $region43: #{etm_forward.6} parent=35 // pred_region
          %s311 = smul.u32 64, %s27
          %p312 = scmp.lt.s32.totalorder %s311, 127
          %s313 = scalar_select %p312, %s311, 127
          %s314 = smul.addr %s313, 4
          %s315 = scalar_lea.vmem %s1, %s314
          %s316 = smul.u32 64, %s27
        $region44: #{etm_forward.6} parent=35 // pred_fallthru
          _
      $region36: #{etm_forward.6} parent=5 // pred_fallthru
        _
      %p317 = scmp.le.s32.totalorder 1, %s19
      %p318 = scmp.lt.s32.totalorder %s19, 5
      %p319 = pnand %p317, %p318
      %p320 = pneg %p319
      // Predicated region
      $region45: #{etm_forward.6} parent=5 // pred_check
        _
      $region46: #{etm_forward.6} parent=5 // pred_check_branch
        %322 = sbr.rel (%p319) target = $region48
      $region47: #{etm_forward.6} parent=5 // pred_region
        %s323 = ssub.s32 %s19, 1
        %s324 = sand.u32 %s46, 1
        %s325 = scalar_lea.sflag [#allocation4], %s324
        %s326 = sand.u32 %s46, 1
        %s327 = smul.addr %s326, 512
        %s328 = scalar_lea.vmem [#allocation3], %s327
        // Predicated region
        $region49: #{etm_forward.6} parent=47 // pred_check
          %p329 = pneg %p59
        $region50: #{etm_forward.6} parent=47 // pred_check_branch
          %331 = sbr.rel (%p329) target = $region52
        $region51: #{etm_forward.6} parent=47 // pred_region
          %332 = dma.done %s325, 8192
        $region52: #{etm_forward.6} parent=47 // pred_fallthru
          _
        // Predicated region
        $region53: #{etm_forward.6} parent=47 // pred_check
          %p333 = pneg %p106
        $region54: #{etm_forward.6} parent=47 // pred_check_branch
          %335 = sbr.rel (%p333) target = $region56
        $region55: #{etm_forward.6} parent=47 // pred_region
          %336 = dma.done [#allocation6], 16
        $region56: #{etm_forward.6} parent=47 // pred_fallthru
          _
        %s337 = sand.u32 %s46, 1
        %s338 = scalar_lea.sflag [#allocation4], %s337
        %s339 = sand.u32 %s46, 1
        %s340 = smul.addr %s339, 512
        %s341 = scalar_lea.vmem [#allocation3], %s340
        %p342 = pneg %p59
        %p343 = pneg %p56
        %s344 = smul.u32 64, %s29
        %p345 = scmp.lt.s32.totalorder %s344, 127
        %s346 = scalar_select %p345, %s344, 127
        %s347 = smul.addr %s346, 4
        %s348 = scalar_lea.vmem %s1, %s347
        %p349 = pneg %p85
        %p350 = pneg %p82
        %p351 = pneg %p106
        %p352 = pneg %p103
        %p353 = pneg %p127
        %p354 = pneg %p124
        %p355 = pneg %p148
        %p356 = pneg %p145
        %p357 = pneg %p169
        %p358 = pneg %p166
        %p359 = pneg %p190
        %p360 = pneg %p187
        %p361 = pneg %p216
        %p362 = pneg %p213
        %s363 = smul.u32 16, %s28
        %p364 = scmp.lt.s32.totalorder %s363, 31
        %s365 = scalar_select %p364, %s363, 31
        %s366 = smul.addr %s365, 8
        %s367 = scalar_lea.vmem %s7, %s366
        %p368 = pneg %p242
        %p369 = pneg %p239
        %s370 = smul.u32 16, %s28
        %p371 = scmp.lt.s32.totalorder %s370, 31
        %s372 = scalar_select %p371, %s370, 31
        %s373 = smul.addr %s372, 8
        %s374 = scalar_lea.vmem %s8, %s373
        %s375 = smul.u32 16, %s28
        %s376 = smul.u32 4, %s29
        %s377 = smul.u32 64, %s29
        %p378 = scmp.lt.s32.totalorder %s377, 127
        %s379 = scalar_select %p378, %s377, 127
        %s380 = smul.addr %s379, 4
        %s381 = scalar_lea.vmem %s1, %s380
        %s382 = smul.u32 64, %s29
        %s383 = smul.u32 16, %s28
        %p384 = scmp.lt.s32.totalorder %s383, 31
        %s385 = scalar_select %p384, %s383, 31
        %s386 = smul.addr %s385, 8
        %s387 = scalar_lea.vmem %s7, %s386
        %s388 = smul.u32 16, %s28
        %s389 = smul.u32 16, %s28
        %p390 = scmp.lt.s32.totalorder %s389, 31
        %s391 = scalar_select %p390, %s389, 31
        %s392 = smul.addr %s391, 8
        %s393 = scalar_lea.vmem %s8, %s392
        %s394 = smul.u32 16, %s28
        %p396 = scmp.eq.s32.totalorder %s29, 0
        // Predicated region
        $region57: #{etm_forward.6} parent=47 // pred_check
          %p397 = pneg %p396
        $region58: #{etm_forward.6} parent=47 // pred_check_branch
          %399 = sbr.rel (%p397) target = $region60
        $region59: #{etm_forward.6} parent=47 // pred_region
          %400 = vst [vmem:[#allocation2] sm:$0xff] 0.0
          %401 = vst [vmem:[#allocation2 + $0x8] sm:$0xff] 0.0
          %402 = vst [vmem:[#allocation2 + $0x10] sm:$0xff] 0.0
          %403 = vst [vmem:[#allocation2 + $0x18] sm:$0xff] 0.0
          %404 = vst [vmem:[#allocation2 + $0x20] sm:$0xff] 0.0
          %405 = vst [vmem:[#allocation2 + $0x28] sm:$0xff] 0.0
          %406 = vst [vmem:[#allocation2 + $0x30] sm:$0xff] 0.0
          %407 = vst [vmem:[#allocation2 + $0x38] sm:$0xff] 0.0
          %408 = vst [vmem:[#allocation2 + $0x40] sm:$0xff] 0.0
          %409 = vst [vmem:[#allocation2 + $0x48] sm:$0xff] 0.0
          %410 = vst [vmem:[#allocation2 + $0x50] sm:$0xff] 0.0
          %411 = vst [vmem:[#allocation2 + $0x58] sm:$0xff] 0.0
          %412 = vst [vmem:[#allocation2 + $0x60] sm:$0xff] 0.0
          %413 = vst [vmem:[#allocation2 + $0x68] sm:$0xff] 0.0
          %414 = vst [vmem:[#allocation2 + $0x70] sm:$0xff] 0.0
          %415 = vst [vmem:[#allocation2 + $0x78] sm:$0xff] 0.0
        $region60: #{etm_forward.6} parent=47 // pred_fallthru
          _
        %v416 = vld [vmem:[#allocation2] sm:$0xff]
        %v417 = vld [vmem:[#allocation2 + $0x8] sm:$0xff]
        %v418 = vld [vmem:[#allocation2 + $0x10] sm:$0xff]
        %v419 = vld [vmem:[#allocation2 + $0x18] sm:$0xff]
        %v420 = vld [vmem:[#allocation2 + $0x20] sm:$0xff]
        %v421 = vld [vmem:[#allocation2 + $0x28] sm:$0xff]
        %v422 = vld [vmem:[#allocation2 + $0x30] sm:$0xff]
        %v423 = vld [vmem:[#allocation2 + $0x38] sm:$0xff]
        %v424 = vld [vmem:[#allocation2 + $0x40] sm:$0xff]
        %v425 = vld [vmem:[#allocation2 + $0x48] sm:$0xff]
        %v426 = vld [vmem:[#allocation2 + $0x50] sm:$0xff]
        %v427 = vld [vmem:[#allocation2 + $0x58] sm:$0xff]
        %v428 = vld [vmem:[#allocation2 + $0x60] sm:$0xff]
        %v429 = vld [vmem:[#allocation2 + $0x68] sm:$0xff]
        %v430 = vld [vmem:[#allocation2 + $0x70] sm:$0xff]
        %v431 = vld [vmem:[#allocation2 + $0x78] sm:$0xff]
        %v432 = vld [vmem:[%s328] sm:$0xff]
        %v433 = vld [vmem:[%s328 + $0x8] sm:$0xff]
        %v434 = vld [vmem:[%s328 + $0x10] sm:$0xff]
        %v435 = vld [vmem:[%s328 + $0x18] sm:$0xff]
        %v436 = vld [vmem:[%s328 + $0x20] sm:$0xff]
        %v437 = vld [vmem:[%s328 + $0x28] sm:$0xff]
        %v438 = vld [vmem:[%s328 + $0x30] sm:$0xff]
        %v439 = vld [vmem:[%s328 + $0x38] sm:$0xff]
        %v440 = vld [vmem:[%s328 + $0x40] sm:$0xff]
        %v441 = vld [vmem:[%s328 + $0x48] sm:$0xff]
        %v442 = vld [vmem:[%s328 + $0x50] sm:$0xff]
        %v443 = vld [vmem:[%s328 + $0x58] sm:$0xff]
        %v444 = vld [vmem:[%s328 + $0x60] sm:$0xff]
        %v445 = vld [vmem:[%s328 + $0x68] sm:$0xff]
        %v446 = vld [vmem:[%s328 + $0x70] sm:$0xff]
        %v447 = vld [vmem:[%s328 + $0x78] sm:$0xff]
        %v448 = vld [vmem:[%s328 + $0x80] sm:$0xff]
        %v449 = vld [vmem:[%s328 + $0x88] sm:$0xff]
        %v450 = vld [vmem:[%s328 + $0x90] sm:$0xff]
        %v451 = vld [vmem:[%s328 + $0x98] sm:$0xff]
        %v452 = vld [vmem:[%s328 + $0xa0] sm:$0xff]
        %v453 = vld [vmem:[%s328 + $0xa8] sm:$0xff]
        %v454 = vld [vmem:[%s328 + $0xb0] sm:$0xff]
        %v455 = vld [vmem:[%s328 + $0xb8] sm:$0xff]
        %v456 = vld [vmem:[%s328 + $0xc0] sm:$0xff]
        %v457 = vld [vmem:[%s328 + $0xc8] sm:$0xff]
        %v458 = vld [vmem:[%s328 + $0xd0] sm:$0xff]
        %v459 = vld [vmem:[%s328 + $0xd8] sm:$0xff]
        %v460 = vld [vmem:[%s328 + $0xe0] sm:$0xff]
        %v461 = vld [vmem:[%s328 + $0xe8] sm:$0xff]
        %v462 = vld [vmem:[%s328 + $0xf0] sm:$0xff]
        %v463 = vld [vmem:[%s328 + $0xf8] sm:$0xff]
        %v464 = vld [vmem:[%s328 + $0x100] sm:$0xff]
        %v465 = vld [vmem:[%s328 + $0x108] sm:$0xff]
        %v466 = vld [vmem:[%s328 + $0x110] sm:$0xff]
        %v467 = vld [vmem:[%s328 + $0x118] sm:$0xff]
        %v468 = vld [vmem:[%s328 + $0x120] sm:$0xff]
        %v469 = vld [vmem:[%s328 + $0x128] sm:$0xff]
        %v470 = vld [vmem:[%s328 + $0x130] sm:$0xff]
        %v471 = vld [vmem:[%s328 + $0x138] sm:$0xff]
        %v472 = vld [vmem:[%s328 + $0x140] sm:$0xff]
        %v473 = vld [vmem:[%s328 + $0x148] sm:$0xff]
        %v474 = vld [vmem:[%s328 + $0x150] sm:$0xff]
        %v475 = vld [vmem:[%s328 + $0x158] sm:$0xff]
        %v476 = vld [vmem:[%s328 + $0x160] sm:$0xff]
        %v477 = vld [vmem:[%s328 + $0x168] sm:$0xff]
        %v478 = vld [vmem:[%s328 + $0x170] sm:$0xff]
        %v479 = vld [vmem:[%s328 + $0x178] sm:$0xff]
        %v480 = vld [vmem:[%s328 + $0x180] sm:$0xff]
        %v481 = vld [vmem:[%s328 + $0x188] sm:$0xff]
        %v482 = vld [vmem:[%s328 + $0x190] sm:$0xff]
        %v483 = vld [vmem:[%s328 + $0x198] sm:$0xff]
        %v484 = vld [vmem:[%s328 + $0x1a0] sm:$0xff]
        %v485 = vld [vmem:[%s328 + $0x1a8] sm:$0xff]
        %v486 = vld [vmem:[%s328 + $0x1b0] sm:$0xff]
        %v487 = vld [vmem:[%s328 + $0x1b8] sm:$0xff]
        %v488 = vld [vmem:[%s328 + $0x1c0] sm:$0xff]
        %v489 = vld [vmem:[%s328 + $0x1c8] sm:$0xff]
        %v490 = vld [vmem:[%s328 + $0x1d0] sm:$0xff]
        %v491 = vld [vmem:[%s328 + $0x1d8] sm:$0xff]
        %v492 = vld [vmem:[%s328 + $0x1e0] sm:$0xff]
        %v493 = vld [vmem:[%s328 + $0x1e8] sm:$0xff]
        %v494 = vld [vmem:[%s328 + $0x1f0] sm:$0xff]
        %v495 = vld [vmem:[%s328 + $0x1f8] sm:$0xff]
        %v496 = vpack.c.bf16 %v436, %v432
        %v497 = vpack.c.bf16 %v437, %v433
        %v498 = vpack.c.bf16 %v438, %v434
        %v499 = vpack.c.bf16 %v439, %v435
        %v500 = vpack.c.bf16 %v444, %v440
        %v501 = vpack.c.bf16 %v445, %v441
        %v502 = vpack.c.bf16 %v446, %v442
        %v503 = vpack.c.bf16 %v447, %v443
        %v504 = vpack.c.bf16 %v452, %v448
        %v505 = vpack.c.bf16 %v453, %v449
        %v506 = vpack.c.bf16 %v454, %v450
        %v507 = vpack.c.bf16 %v455, %v451
        %v508 = vpack.c.bf16 %v460, %v456
        %v509 = vpack.c.bf16 %v461, %v457
        %v510 = vpack.c.bf16 %v462, %v458
        %v511 = vpack.c.bf16 %v463, %v459
        %v512 = vpack.c.bf16 %v468, %v464
        %v513 = vpack.c.bf16 %v469, %v465
        %v514 = vpack.c.bf16 %v470, %v466
        %v515 = vpack.c.bf16 %v471, %v467
        %v516 = vpack.c.bf16 %v476, %v472
        %v517 = vpack.c.bf16 %v477, %v473
        %v518 = vpack.c.bf16 %v478, %v474
        %v519 = vpack.c.bf16 %v479, %v475
        %v520 = vpack.c.bf16 %v484, %v480
        %v521 = vpack.c.bf16 %v485, %v481
        %v522 = vpack.c.bf16 %v486, %v482
        %v523 = vpack.c.bf16 %v487, %v483
        %v524 = vpack.c.bf16 %v492, %v488
        %v525 = vpack.c.bf16 %v493, %v489
        %v526 = vpack.c.bf16 %v494, %v490
        %v527 = vpack.c.bf16 %v495, %v491
        %v528 = vld [vmem:[%s381] sm:$0xf]
        %v529 = vld [vmem:[%s381 + $0x4] sm:$0xf]
        %v530 = vld [vmem:[%s381 + $0x8] sm:$0xf]
        %v531 = vld [vmem:[%s381 + $0xc] sm:$0xf]
        %v532 = vld [vmem:[%s381 + $0x10] sm:$0xf]
        %v533 = vld [vmem:[%s381 + $0x14] sm:$0xf]
        %v534 = vld [vmem:[%s381 + $0x18] sm:$0xf]
        %v535 = vld [vmem:[%s381 + $0x1c] sm:$0xf]
        %v536 = vld [vmem:[%s381 + $0x20] sm:$0xf]
        %v537 = vld [vmem:[%s381 + $0x24] sm:$0xf]
        %v538 = vld [vmem:[%s381 + $0x28] sm:$0xf]
        %v539 = vld [vmem:[%s381 + $0x2c] sm:$0xf]
        %v540 = vld [vmem:[%s381 + $0x30] sm:$0xf]
        %v541 = vld [vmem:[%s381 + $0x34] sm:$0xf]
        %v542 = vld [vmem:[%s381 + $0x38] sm:$0xf]
        %v543 = vld [vmem:[%s381 + $0x3c] sm:$0xf]
        %v544 = vld [vmem:[%s381 + $0x40] sm:$0xf]
        %v545 = vld [vmem:[%s381 + $0x44] sm:$0xf]
        %v546 = vld [vmem:[%s381 + $0x48] sm:$0xf]
        %v547 = vld [vmem:[%s381 + $0x4c] sm:$0xf]
        %v548 = vld [vmem:[%s381 + $0x50] sm:$0xf]
        %v549 = vld [vmem:[%s381 + $0x54] sm:$0xf]
        %v550 = vld [vmem:[%s381 + $0x58] sm:$0xf]
        %v551 = vld [vmem:[%s381 + $0x5c] sm:$0xf]
        %v552 = vld [vmem:[%s381 + $0x60] sm:$0xf]
        %v553 = vld [vmem:[%s381 + $0x64] sm:$0xf]
        %v554 = vld [vmem:[%s381 + $0x68] sm:$0xf]
        %v555 = vld [vmem:[%s381 + $0x6c] sm:$0xf]
        %v556 = vld [vmem:[%s381 + $0x70] sm:$0xf]
        %v557 = vld [vmem:[%s381 + $0x74] sm:$0xf]
        %v558 = vld [vmem:[%s381 + $0x78] sm:$0xf]
        %v559 = vld [vmem:[%s381 + $0x7c] sm:$0xf]
        %v560 = vld [vmem:[%s381 + $0x80] sm:$0xf]
        %v561 = vld [vmem:[%s381 + $0x84] sm:$0xf]
        %v562 = vld [vmem:[%s381 + $0x88] sm:$0xf]
        %v563 = vld [vmem:[%s381 + $0x8c] sm:$0xf]
        %v564 = vld [vmem:[%s381 + $0x90] sm:$0xf]
        %v565 = vld [vmem:[%s381 + $0x94] sm:$0xf]
        %v566 = vld [vmem:[%s381 + $0x98] sm:$0xf]
        %v567 = vld [vmem:[%s381 + $0x9c] sm:$0xf]
        %v568 = vld [vmem:[%s381 + $0xa0] sm:$0xf]
        %v569 = vld [vmem:[%s381 + $0xa4] sm:$0xf]
        %v570 = vld [vmem:[%s381 + $0xa8] sm:$0xf]
        %v571 = vld [vmem:[%s381 + $0xac] sm:$0xf]
        %v572 = vld [vmem:[%s381 + $0xb0] sm:$0xf]
        %v573 = vld [vmem:[%s381 + $0xb4] sm:$0xf]
        %v574 = vld [vmem:[%s381 + $0xb8] sm:$0xf]
        %v575 = vld [vmem:[%s381 + $0xbc] sm:$0xf]
        %v576 = vld [vmem:[%s381 + $0xc0] sm:$0xf]
        %v577 = vld [vmem:[%s381 + $0xc4] sm:$0xf]
        %v578 = vld [vmem:[%s381 + $0xc8] sm:$0xf]
        %v579 = vld [vmem:[%s381 + $0xcc] sm:$0xf]
        %v580 = vld [vmem:[%s381 + $0xd0] sm:$0xf]
        %v581 = vld [vmem:[%s381 + $0xd4] sm:$0xf]
        %v582 = vld [vmem:[%s381 + $0xd8] sm:$0xf]
        %v583 = vld [vmem:[%s381 + $0xdc] sm:$0xf]
        %v584 = vld [vmem:[%s381 + $0xe0] sm:$0xf]
        %v585 = vld [vmem:[%s381 + $0xe4] sm:$0xf]
        %v586 = vld [vmem:[%s381 + $0xe8] sm:$0xf]
        %v587 = vld [vmem:[%s381 + $0xec] sm:$0xf]
        %v588 = vld [vmem:[%s381 + $0xf0] sm:$0xf]
        %v589 = vld [vmem:[%s381 + $0xf4] sm:$0xf]
        %v590 = vld [vmem:[%s381 + $0xf8] sm:$0xf]
        %v591 = vld [vmem:[%s381 + $0xfc] sm:$0xf]
        %v656 = vunpack.c.l.b16 %v528
        %v657 = vunpack.c.l.b16 %v529
        %v658 = vunpack.c.l.b16 %v530
        %v659 = vunpack.c.l.b16 %v531
        %v660 = vunpack.c.l.b16 %v532
        %v661 = vunpack.c.l.b16 %v533
        %v662 = vunpack.c.l.b16 %v534
        %v663 = vunpack.c.l.b16 %v535
        %v664 = vunpack.c.l.b16 %v536
        %v665 = vunpack.c.l.b16 %v537
        %v666 = vunpack.c.l.b16 %v538
        %v667 = vunpack.c.l.b16 %v539
        %v668 = vunpack.c.l.b16 %v540
        %v669 = vunpack.c.l.b16 %v541
        %v670 = vunpack.c.l.b16 %v542
        %v671 = vunpack.c.l.b16 %v543
        %v672 = vunpack.c.l.b16 %v544
        %v673 = vunpack.c.l.b16 %v545
        %v674 = vunpack.c.l.b16 %v546
        %v675 = vunpack.c.l.b16 %v547
        %v676 = vunpack.c.l.b16 %v548
        %v677 = vunpack.c.l.b16 %v549
        %v678 = vunpack.c.l.b16 %v550
        %v679 = vunpack.c.l.b16 %v551
        %v680 = vunpack.c.l.b16 %v552
        %v681 = vunpack.c.l.b16 %v553
        %v682 = vunpack.c.l.b16 %v554
        %v683 = vunpack.c.l.b16 %v555
        %v684 = vunpack.c.l.b16 %v556
        %v685 = vunpack.c.l.b16 %v557
        %v686 = vunpack.c.l.b16 %v558
        %v687 = vunpack.c.l.b16 %v559
        %v688 = vunpack.c.l.b16 %v560
        %v689 = vunpack.c.l.b16 %v561
        %v690 = vunpack.c.l.b16 %v562
        %v691 = vunpack.c.l.b16 %v563
        %v692 = vunpack.c.l.b16 %v564
        %v693 = vunpack.c.l.b16 %v565
        %v694 = vunpack.c.l.b16 %v566
        %v695 = vunpack.c.l.b16 %v567
        %v696 = vunpack.c.l.b16 %v568
        %v697 = vunpack.c.l.b16 %v569
        %v698 = vunpack.c.l.b16 %v570
        %v699 = vunpack.c.l.b16 %v571
        %v700 = vunpack.c.l.b16 %v572
        %v701 = vunpack.c.l.b16 %v573
        %v702 = vunpack.c.l.b16 %v574
        %v703 = vunpack.c.l.b16 %v575
        %v704 = vunpack.c.l.b16 %v576
        %v705 = vunpack.c.l.b16 %v577
        %v706 = vunpack.c.l.b16 %v578
        %v707 = vunpack.c.l.b16 %v579
        %v708 = vunpack.c.l.b16 %v580
        %v709 = vunpack.c.l.b16 %v581
        %v710 = vunpack.c.l.b16 %v582
        %v711 = vunpack.c.l.b16 %v583
        %v712 = vunpack.c.l.b16 %v584
        %v713 = vunpack.c.l.b16 %v585
        %v714 = vunpack.c.l.b16 %v586
        %v715 = vunpack.c.l.b16 %v587
        %v716 = vunpack.c.l.b16 %v588
        %v717 = vunpack.c.l.b16 %v589
        %v718 = vunpack.c.l.b16 %v590
        %v719 = vunpack.c.l.b16 %v591
        %v720 = vpack.c.b16 %v657, %v656
        %v721 = vpack.c.b16 %v659, %v658
        %v722 = vpack.c.b16 %v661, %v660
        %v723 = vpack.c.b16 %v663, %v662
        %v724 = vpack.c.b16 %v665, %v664
        %v725 = vpack.c.b16 %v667, %v666
        %v726 = vpack.c.b16 %v669, %v668
        %v727 = vpack.c.b16 %v671, %v670
        %v728 = vpack.c.b16 %v673, %v672
        %v729 = vpack.c.b16 %v675, %v674
        %v730 = vpack.c.b16 %v677, %v676
        %v731 = vpack.c.b16 %v679, %v678
        %v732 = vpack.c.b16 %v681, %v680
        %v733 = vpack.c.b16 %v683, %v682
        %v734 = vpack.c.b16 %v685, %v684
        %v735 = vpack.c.b16 %v687, %v686
        %v736 = vpack.c.b16 %v689, %v688
        %v737 = vpack.c.b16 %v691, %v690
        %v738 = vpack.c.b16 %v693, %v692
        %v739 = vpack.c.b16 %v695, %v694
        %v740 = vpack.c.b16 %v697, %v696
        %v741 = vpack.c.b16 %v699, %v698
        %v742 = vpack.c.b16 %v701, %v700
        %v743 = vpack.c.b16 %v703, %v702
        %v744 = vpack.c.b16 %v705, %v704
        %v745 = vpack.c.b16 %v707, %v706
        %v746 = vpack.c.b16 %v709, %v708
        %v747 = vpack.c.b16 %v711, %v710
        %v748 = vpack.c.b16 %v713, %v712
        %v749 = vpack.c.b16 %v715, %v714
        %v750 = vpack.c.b16 %v717, %v716
        %v751 = vpack.c.b16 %v719, %v718
        %784 = vmatprep.subr.bf16.mxu0 0
        %785 = vmatpush1.bf16.msra.mxu0 %v720
        %786 = vmatprep.subr.bf16.mxu0 0
        %787 = vmatpush1.bf16.msra.mxu0 %v721
        %788 = vmatprep.subr.bf16.mxu0 0
        %789 = vmatpush1.bf16.msra.mxu0 %v722
        %790 = vmatprep.subr.bf16.mxu0 0
        %791 = vmatpush1.bf16.msra.mxu0 %v723
        %792 = vmatprep.subr.bf16.mxu0 0
        %793 = vmatpush1.bf16.msra.mxu0 %v724
        %794 = vmatprep.subr.bf16.mxu0 0
        %795 = vmatpush1.bf16.msra.mxu0 %v725
        %796 = vmatprep.subr.bf16.mxu0 0
        %797 = vmatpush1.bf16.msra.mxu0 %v726
        %798 = vmatprep.subr.bf16.mxu0 0
        %799 = vmatpush1.bf16.msra.mxu0 %v727
        %800 = vmatprep.subr.bf16.mxu0 0
        %801 = vmatpush1.bf16.msra.mxu0 %v728
        %802 = vmatprep.subr.bf16.mxu0 0
        %803 = vmatpush1.bf16.msra.mxu0 %v729
        %804 = vmatprep.subr.bf16.mxu0 0
        %805 = vmatpush1.bf16.msra.mxu0 %v730
        %806 = vmatprep.subr.bf16.mxu0 0
        %807 = vmatpush1.bf16.msra.mxu0 %v731
        %808 = vmatprep.subr.bf16.mxu0 0
        %809 = vmatpush1.bf16.msra.mxu0 %v732
        %810 = vmatprep.subr.bf16.mxu0 0
        %811 = vmatpush1.bf16.msra.mxu0 %v733
        %812 = vmatprep.subr.bf16.mxu0 0
        %813 = vmatpush1.bf16.msra.mxu0 %v734
        %814 = vmatprep.subr.bf16.mxu0 0
        %815 = vmatpush1.bf16.msra.mxu0 %v735
        %816 = vmatprep.mubr.bf16.mxu0 %v497
        %817 = vmatmul.mubr.bf16.gmra.mrb[0].mxu0 %v496
        %v818 = vpop.f32.mrb[0].mxu0
        %v819 = vadd.f32 0.0, %v818
        %v820 = vpop.f32.mrb[0].mxu0
        %v821 = vpop.f32.mrb[0].mxu0
        %v822 = vadd.f32 0.0, %v821
        %v823 = vpop.f32.mrb[0].mxu0
        %824 = vmatprep.mubr.bf16.mxu0 %v501
        %825 = vmatmul.mubr.bf16.gmra.mrb[0].mxu0 %v500
        %v826 = vpop.f32.mrb[0].mxu0
        %v827 = vadd.f32 0.0, %v826
        %v828 = vpop.f32.mrb[0].mxu0
        %v829 = vpop.f32.mrb[0].mxu0
        %v830 = vadd.f32 0.0, %v829
        %v831 = vpop.f32.mrb[0].mxu0
        %832 = vmatprep.mubr.bf16.mxu0 %v505
        %833 = vmatmul.mubr.bf16.gmra.mrb[0].mxu0 %v504
        %v834 = vpop.f32.mrb[0].mxu0
        %v835 = vadd.f32 0.0, %v834
        %v836 = vpop.f32.mrb[0].mxu0
        %v837 = vpop.f32.mrb[0].mxu0
        %v838 = vadd.f32 0.0, %v837
        %v839 = vpop.f32.mrb[0].mxu0
        %840 = vmatprep.mubr.bf16.mxu0 %v509
        %841 = vmatmul.mubr.bf16.gmra.mrb[0].mxu0 %v508
        %v842 = vpop.f32.mrb[0].mxu0
        %v843 = vadd.f32 0.0, %v842
        %v844 = vpop.f32.mrb[0].mxu0
        %v845 = vpop.f32.mrb[0].mxu0
        %v846 = vadd.f32 0.0, %v845
        %v847 = vpop.f32.mrb[0].mxu0
        %848 = vmatprep.mubr.bf16.mxu0 %v513
        %849 = vmatmul.mubr.bf16.gmra.mrb[0].mxu0 %v512
        %v850 = vpop.f32.mrb[0].mxu0
        %v851 = vadd.f32 0.0, %v850
        %v852 = vpop.f32.mrb[0].mxu0
        %v853 = vpop.f32.mrb[0].mxu0
        %v854 = vadd.f32 0.0, %v853
        %v855 = vpop.f32.mrb[0].mxu0
        %856 = vmatprep.mubr.bf16.mxu0 %v517
        %857 = vmatmul.mubr.bf16.gmra.mrb[0].mxu0 %v516
        %v858 = vpop.f32.mrb[0].mxu0
        %v859 = vadd.f32 0.0, %v858
        %v860 = vpop.f32.mrb[0].mxu0
        %v861 = vpop.f32.mrb[0].mxu0
        %v862 = vadd.f32 0.0, %v861
        %v863 = vpop.f32.mrb[0].mxu0
        %864 = vmatprep.mubr.bf16.mxu0 %v521
        %865 = vmatmul.mubr.bf16.gmra.mrb[0].mxu0 %v520
        %v866 = vpop.f32.mrb[0].mxu0
        %v867 = vadd.f32 0.0, %v866
        %v868 = vpop.f32.mrb[0].mxu0
        %v869 = vpop.f32.mrb[0].mxu0
        %v870 = vadd.f32 0.0, %v869
        %v871 = vpop.f32.mrb[0].mxu0
        %872 = vmatprep.mubr.bf16.mxu0 %v525
        %873 = vmatmul.mubr.bf16.gmra.mrb[0].mxu0 %v524
        %v874 = vpop.f32.mrb[0].mxu0
        %v875 = vadd.f32 0.0, %v874
        %v876 = vpop.f32.mrb[0].mxu0
        %v877 = vpop.f32.mrb[0].mxu0
        %v878 = vadd.f32 0.0, %v877
        %v879 = vpop.f32.mrb[0].mxu0
        %880 = vdwg.mxu0
        %881 = vmatprep.subr.bf16.mxu0 0
        %882 = vmatpush1.bf16.msra.mxu0 %v736
        %883 = vmatprep.subr.bf16.mxu0 0
        %884 = vmatpush1.bf16.msra.mxu0 %v737
        %885 = vmatprep.subr.bf16.mxu0 0
        %886 = vmatpush1.bf16.msra.mxu0 %v738
        %887 = vmatprep.subr.bf16.mxu0 0
        %888 = vmatpush1.bf16.msra.mxu0 %v739
        %889 = vmatprep.subr.bf16.mxu0 0
        %890 = vmatpush1.bf16.msra.mxu0 %v740
        %891 = vmatprep.subr.bf16.mxu0 0
        %892 = vmatpush1.bf16.msra.mxu0 %v741
        %893 = vmatprep.subr.bf16.mxu0 0
        %894 = vmatpush1.bf16.msra.mxu0 %v742
        %895 = vmatprep.subr.bf16.mxu0 0
        %896 = vmatpush1.bf16.msra.mxu0 %v743
        %897 = vmatprep.subr.bf16.mxu0 0
        %898 = vmatpush1.bf16.msra.mxu0 %v744
        %899 = vmatprep.subr.bf16.mxu0 0
        %900 = vmatpush1.bf16.msra.mxu0 %v745
        %901 = vmatprep.subr.bf16.mxu0 0
        %902 = vmatpush1.bf16.msra.mxu0 %v746
        %903 = vmatprep.subr.bf16.mxu0 0
        %904 = vmatpush1.bf16.msra.mxu0 %v747
        %905 = vmatprep.subr.bf16.mxu0 0
        %906 = vmatpush1.bf16.msra.mxu0 %v748
        %907 = vmatprep.subr.bf16.mxu0 0
        %908 = vmatpush1.bf16.msra.mxu0 %v749
        %909 = vmatprep.subr.bf16.mxu0 0
        %910 = vmatpush1.bf16.msra.mxu0 %v750
        %911 = vmatprep.subr.bf16.mxu0 0
        %912 = vmatpush1.bf16.msra.mxu0 %v751
        %913 = vmatprep.mubr.bf16.mxu0 %v499
        %914 = vmatmul.mubr.bf16.gmra.mrb[0].mxu0 %v498
        %v915 = vpop.f32.mrb[0].mxu0
        %v916 = vadd.f32 %v819, %v915
        %v917 = vpop.f32.mrb[0].mxu0
        %v918 = vpop.f32.mrb[0].mxu0
        %v919 = vadd.f32 %v822, %v918
        %v920 = vpop.f32.mrb[0].mxu0
        %921 = vmatprep.mubr.bf16.mxu0 %v503
        %922 = vmatmul.mubr.bf16.gmra.mrb[0].mxu0 %v502
        %v923 = vpop.f32.mrb[0].mxu0
        %v924 = vadd.f32 %v827, %v923
        %v925 = vpop.f32.mrb[0].mxu0
        %v926 = vpop.f32.mrb[0].mxu0
        %v927 = vadd.f32 %v830, %v926
        %v928 = vpop.f32.mrb[0].mxu0
        %929 = vmatprep.mubr.bf16.mxu0 %v507
        %930 = vmatmul.mubr.bf16.gmra.mrb[0].mxu0 %v506
        %v931 = vpop.f32.mrb[0].mxu0
        %v932 = vadd.f32 %v835, %v931
        %v933 = vpop.f32.mrb[0].mxu0
        %v934 = vpop.f32.mrb[0].mxu0
        %v935 = vadd.f32 %v838, %v934
        %v936 = vpop.f32.mrb[0].mxu0
        %937 = vmatprep.mubr.bf16.mxu0 %v511
        %938 = vmatmul.mubr.bf16.gmra.mrb[0].mxu0 %v510
        %v939 = vpop.f32.mrb[0].mxu0
        %v940 = vadd.f32 %v843, %v939
        %v941 = vpop.f32.mrb[0].mxu0
        %v942 = vpop.f32.mrb[0].mxu0
        %v943 = vadd.f32 %v846, %v942
        %v944 = vpop.f32.mrb[0].mxu0
        %945 = vmatprep.mubr.bf16.mxu0 %v515
        %946 = vmatmul.mubr.bf16.gmra.mrb[0].mxu0 %v514
        %v947 = vpop.f32.mrb[0].mxu0
        %v948 = vadd.f32 %v851, %v947
        %v949 = vpop.f32.mrb[0].mxu0
        %v950 = vpop.f32.mrb[0].mxu0
        %v951 = vadd.f32 %v854, %v950
        %v952 = vpop.f32.mrb[0].mxu0
        %953 = vmatprep.mubr.bf16.mxu0 %v519
        %954 = vmatmul.mubr.bf16.gmra.mrb[0].mxu0 %v518
        %v955 = vpop.f32.mrb[0].mxu0
        %v956 = vadd.f32 %v859, %v955
        %v957 = vpop.f32.mrb[0].mxu0
        %v958 = vpop.f32.mrb[0].mxu0
        %v959 = vadd.f32 %v862, %v958
        %v960 = vpop.f32.mrb[0].mxu0
        %961 = vmatprep.mubr.bf16.mxu0 %v523
        %962 = vmatmul.mubr.bf16.gmra.mrb[0].mxu0 %v522
        %v963 = vpop.f32.mrb[0].mxu0
        %v964 = vadd.f32 %v867, %v963
        %v965 = vpop.f32.mrb[0].mxu0
        %v966 = vpop.f32.mrb[0].mxu0
        %v967 = vadd.f32 %v870, %v966
        %v968 = vpop.f32.mrb[0].mxu0
        %969 = vmatprep.mubr.bf16.mxu0 %v527
        %970 = vmatmul.mubr.bf16.gmra.mrb[0].mxu0 %v526
        %v971 = vpop.f32.mrb[0].mxu0
        %v972 = vadd.f32 %v875, %v971
        %v973 = vpop.f32.mrb[0].mxu0
        %v974 = vpop.f32.mrb[0].mxu0
        %v975 = vadd.f32 %v878, %v974
        %v976 = vpop.f32.mrb[0].mxu0
        %977 = vdwg.mxu0
        %v978 = vadd.f32 %v416, %v916
        %v979 = vadd.f32 %v417, %v919
        %v980 = vadd.f32 %v418, %v924
        %v981 = vadd.f32 %v419, %v927
        %v982 = vadd.f32 %v420, %v932
        %v983 = vadd.f32 %v421, %v935
        %v984 = vadd.f32 %v422, %v940
        %v985 = vadd.f32 %v423, %v943
        %v986 = vadd.f32 %v424, %v948
        %v987 = vadd.f32 %v425, %v951
        %v988 = vadd.f32 %v426, %v956
        %v989 = vadd.f32 %v427, %v959
        %v990 = vadd.f32 %v428, %v964
        %v991 = vadd.f32 %v429, %v967
        %v992 = vadd.f32 %v430, %v972
        %v993 = vadd.f32 %v431, %v975
        %994 = vst [vmem:[#allocation2] sm:$0xff] %v978
        %995 = vst [vmem:[#allocation2 + $0x8] sm:$0xff] %v979
        %996 = vst [vmem:[#allocation2 + $0x10] sm:$0xff] %v980
        %997 = vst [vmem:[#allocation2 + $0x18] sm:$0xff] %v981
        %998 = vst [vmem:[#allocation2 + $0x20] sm:$0xff] %v982
        %999 = vst [vmem:[#allocation2 + $0x28] sm:$0xff] %v983
        %1000 = vst [vmem:[#allocation2 + $0x30] sm:$0xff] %v984
        %1001 = vst [vmem:[#allocation2 + $0x38] sm:$0xff] %v985
        %1002 = vst [vmem:[#allocation2 + $0x40] sm:$0xff] %v986
        %1003 = vst [vmem:[#allocation2 + $0x48] sm:$0xff] %v987
        %1004 = vst [vmem:[#allocation2 + $0x50] sm:$0xff] %v988
        %1005 = vst [vmem:[#allocation2 + $0x58] sm:$0xff] %v989
        %1006 = vst [vmem:[#allocation2 + $0x60] sm:$0xff] %v990
        %1007 = vst [vmem:[#allocation2 + $0x68] sm:$0xff] %v991
        %1008 = vst [vmem:[#allocation2 + $0x70] sm:$0xff] %v992
        %1009 = vst [vmem:[#allocation2 + $0x78] sm:$0xff] %v993
        %p1010 = scmp.eq.s32.totalorder %s29, 1
        // Predicated region
        $region61: #{etm_forward.6} parent=47 // pred_check
          %p1011 = pneg %p1010
        $region62: #{etm_forward.6} parent=47 // pred_check_branch
          %1013 = sbr.rel (%p1011) target = $region64
        $region63: #{etm_forward.6} parent=47 // pred_region
          %v1014 = vld [vmem:[#allocation2] sm:$0xff]
          %v1015 = vld [vmem:[#allocation2 + $0x8] sm:$0xff]
          %v1016 = vld [vmem:[#allocation2 + $0x10] sm:$0xff]
          %v1017 = vld [vmem:[#allocation2 + $0x18] sm:$0xff]
          %v1018 = vld [vmem:[#allocation2 + $0x20] sm:$0xff]
          %v1019 = vld [vmem:[#allocation2 + $0x28] sm:$0xff]
          %v1020 = vld [vmem:[#allocation2 + $0x30] sm:$0xff]
          %v1021 = vld [vmem:[#allocation2 + $0x38] sm:$0xff]
          %v1022 = vld [vmem:[#allocation2 + $0x40] sm:$0xff]
          %v1023 = vld [vmem:[#allocation2 + $0x48] sm:$0xff]
          %v1024 = vld [vmem:[#allocation2 + $0x50] sm:$0xff]
          %v1025 = vld [vmem:[#allocation2 + $0x58] sm:$0xff]
          %v1026 = vld [vmem:[#allocation2 + $0x60] sm:$0xff]
          %v1027 = vld [vmem:[#allocation2 + $0x68] sm:$0xff]
          %v1028 = vld [vmem:[#allocation2 + $0x70] sm:$0xff]
          %v1029 = vld [vmem:[#allocation2 + $0x78] sm:$0xff]
          %v1030 = vld [vmem:[#allocation5] sm:$0x1]
          %v1032 = vlaneseq
          %v1033 = vshrl.u32 %v1032, 7
          %v1034 = vsub.s32 0, %v1033
          %v1035 = vrot.slane %v1030, %v1034
          %v1037 = vadd.f32 %v1014, %v1035
          %v1038 = vadd.f32 %v1015, %v1035
          %v1039 = vadd.f32 %v1016, %v1035
          %v1040 = vadd.f32 %v1017, %v1035
          %v1041 = vadd.f32 %v1018, %v1035
          %v1042 = vadd.f32 %v1019, %v1035
          %v1043 = vadd.f32 %v1020, %v1035
          %v1044 = vadd.f32 %v1021, %v1035
          %v1045 = vadd.f32 %v1022, %v1035
          %v1046 = vadd.f32 %v1023, %v1035
          %v1047 = vadd.f32 %v1024, %v1035
          %v1048 = vadd.f32 %v1025, %v1035
          %v1049 = vadd.f32 %v1026, %v1035
          %v1050 = vadd.f32 %v1027, %v1035
          %v1051 = vadd.f32 %v1028, %v1035
          %v1052 = vadd.f32 %v1029, %v1035
          %v1053 = vmax.f32 %v1037, 0.0
          %v1054 = vmax.f32 %v1038, 0.0
          %v1055 = vmax.f32 %v1039, 0.0
          %v1056 = vmax.f32 %v1040, 0.0
          %v1057 = vmax.f32 %v1041, 0.0
          %v1058 = vmax.f32 %v1042, 0.0
          %v1059 = vmax.f32 %v1043, 0.0
          %v1060 = vmax.f32 %v1044, 0.0
          %v1061 = vmax.f32 %v1045, 0.0
          %v1062 = vmax.f32 %v1046, 0.0
          %v1063 = vmax.f32 %v1047, 0.0
          %v1064 = vmax.f32 %v1048, 0.0
          %v1065 = vmax.f32 %v1049, 0.0
          %v1066 = vmax.f32 %v1050, 0.0
          %v1067 = vmax.f32 %v1051, 0.0
          %v1068 = vmax.f32 %v1052, 0.0
          %v1069 = vld [vmem:[%s3] sm:$0xff]
          %v1070 = vld [vmem:[%s3 + $0x8] sm:$0xff]
          %v1071 = vld [vmem:[%s3 + $0x10] sm:$0xff]
          %v1072 = vld [vmem:[%s3 + $0x18] sm:$0xff]
          %v1073 = vld [vmem:[%s3 + $0x20] sm:$0xff]
          %v1074 = vld [vmem:[%s3 + $0x28] sm:$0xff]
          %v1075 = vld [vmem:[%s3 + $0x30] sm:$0xff]
          %v1076 = vld [vmem:[%s3 + $0x38] sm:$0xff]
          %v1077 = vld [vmem:[%s3 + $0x40] sm:$0xff]
          %v1078 = vld [vmem:[%s3 + $0x48] sm:$0xff]
          %v1079 = vld [vmem:[%s3 + $0x50] sm:$0xff]
          %v1080 = vld [vmem:[%s3 + $0x58] sm:$0xff]
          %v1081 = vld [vmem:[%s3 + $0x60] sm:$0xff]
          %v1082 = vld [vmem:[%s3 + $0x68] sm:$0xff]
          %v1083 = vld [vmem:[%s3 + $0x70] sm:$0xff]
          %v1084 = vld [vmem:[%s3 + $0x78] sm:$0xff]
          %v1085 = vld [vmem:[%s4] sm:$0x1]
          %v1087 = vlaneseq
          %v1088 = vshrl.u32 %v1087, 7
          %v1089 = vsub.s32 0, %v1088
          %v1090 = vrot.slane %v1085, %v1089
          %1092 = vmatprep.subr.mxu0 0.0
          %1093 = vmatpush1.msra.mxu0 %v1069
          %1094 = vmatprep.subr.mxu0 0.0
          %1095 = vmatpush1.msra.mxu0 %v1070
          %1096 = vmatprep.subr.mxu0 0.0
          %1097 = vmatpush1.msra.mxu0 %v1071
          %1098 = vmatprep.subr.mxu0 0.0
          %1099 = vmatpush1.msra.mxu0 %v1072
          %1100 = vmatprep.subr.mxu0 0.0
          %1101 = vmatpush1.msra.mxu0 %v1073
          %1102 = vmatprep.subr.mxu0 0.0
          %1103 = vmatpush1.msra.mxu0 %v1074
          %1104 = vmatprep.subr.mxu0 0.0
          %1105 = vmatpush1.msra.mxu0 %v1075
          %1106 = vmatprep.subr.mxu0 0.0
          %1107 = vmatpush1.msra.mxu0 %v1076
          %1108 = vmatprep.subr.mxu0 0.0
          %1109 = vmatpush1.msra.mxu0 %v1077
          %1110 = vmatprep.subr.mxu0 0.0
          %1111 = vmatpush1.msra.mxu0 %v1078
          %1112 = vmatprep.subr.mxu0 0.0
          %1113 = vmatpush1.msra.mxu0 %v1079
          %1114 = vmatprep.subr.mxu0 0.0
          %1115 = vmatpush1.msra.mxu0 %v1080
          %1116 = vmatprep.subr.mxu0 0.0
          %1117 = vmatpush1.msra.mxu0 %v1081
          %1118 = vmatprep.subr.mxu0 0.0
          %1119 = vmatpush1.msra.mxu0 %v1082
          %1120 = vmatprep.subr.mxu0 0.0
          %1121 = vmatpush1.msra.mxu0 %v1083
          %1122 = vmatprep.subr.mxu0 0.0
          %1123 = vmatpush1.msra.mxu0 %v1084
          %1124 = vmatprep.subr.mxu0 0.0
          %1125 = vmatpush1.msra.mxu0 0.0
          %1126 = vmatprep.subr.mxu0 0.0
          %1127 = vmatpush1.msra.mxu0 0.0
          %1128 = vmatprep.subr.mxu0 0.0
          %1129 = vmatpush1.msra.mxu0 0.0
          %1130 = vmatprep.subr.mxu0 0.0
          %1131 = vmatpush1.msra.mxu0 0.0
          %1132 = vmatprep.subr.mxu0 0.0
          %1133 = vmatpush1.msra.mxu0 0.0
          %1134 = vmatprep.subr.mxu0 0.0
          %1135 = vmatpush1.msra.mxu0 0.0
          %1136 = vmatprep.subr.mxu0 0.0
          %1137 = vmatpush1.msra.mxu0 0.0
          %1138 = vmatprep.subr.mxu0 0.0
          %1139 = vmatpush1.msra.mxu0 0.0
          %1140 = vmatprep.subr.mxu0 0.0
          %1141 = vmatpush1.msra.mxu0 0.0
          %1142 = vmatprep.subr.mxu0 0.0
          %1143 = vmatpush1.msra.mxu0 0.0
          %1144 = vmatprep.subr.mxu0 0.0
          %1145 = vmatpush1.msra.mxu0 0.0
          %1146 = vmatprep.subr.mxu0 0.0
          %1147 = vmatpush1.msra.mxu0 0.0
          %1148 = vmatprep.subr.mxu0 0.0
          %1149 = vmatpush1.msra.mxu0 0.0
          %1150 = vmatprep.subr.mxu0 0.0
          %1151 = vmatpush1.msra.mxu0 0.0
          %1152 = vmatprep.subr.mxu0 0.0
          %1153 = vmatpush1.msra.mxu0 0.0
          %1154 = vmatprep.subr.mxu0 0.0
          %1155 = vmatpush1.msra.mxu0 0.0
          %1156 = vmatprep.mubr.f32.mxu0 0.0
          %1157 = vmatmul.mubr.f32.gmra.mrb[0].mxu0 %v1053
          %v1158 = vpop.f32.mrb[0].mxu0
          %v1159 = vadd.f32 %v1090, %v1158
          %v1160 = vpop.f32.mrb[0].mxu0
          %1161 = vmatprep.mubr.f32.mxu0 0.0
          %1162 = vmatmul.mubr.f32.gmra.mrb[0].mxu0 %v1054
          %v1163 = vpop.f32.mrb[0].mxu0
          %v1164 = vadd.f32 %v1090, %v1163
          %v1165 = vpop.f32.mrb[0].mxu0
          %1166 = vmatprep.mubr.f32.mxu0 0.0
          %1167 = vmatmul.mubr.f32.gmra.mrb[0].mxu0 %v1055
          %v1168 = vpop.f32.mrb[0].mxu0
          %v1169 = vadd.f32 %v1090, %v1168
          %v1170 = vpop.f32.mrb[0].mxu0
          %1171 = vmatprep.mubr.f32.mxu0 0.0
          %1172 = vmatmul.mubr.f32.gmra.mrb[0].mxu0 %v1056
          %v1173 = vpop.f32.mrb[0].mxu0
          %v1174 = vadd.f32 %v1090, %v1173
          %v1175 = vpop.f32.mrb[0].mxu0
          %1176 = vmatprep.mubr.f32.mxu0 0.0
          %1177 = vmatmul.mubr.f32.gmra.mrb[0].mxu0 %v1057
          %v1178 = vpop.f32.mrb[0].mxu0
          %v1179 = vadd.f32 %v1090, %v1178
          %v1180 = vpop.f32.mrb[0].mxu0
          %1181 = vmatprep.mubr.f32.mxu0 0.0
          %1182 = vmatmul.mubr.f32.gmra.mrb[0].mxu0 %v1058
          %v1183 = vpop.f32.mrb[0].mxu0
          %v1184 = vadd.f32 %v1090, %v1183
          %v1185 = vpop.f32.mrb[0].mxu0
          %1186 = vmatprep.mubr.f32.mxu0 0.0
          %1187 = vmatmul.mubr.f32.gmra.mrb[0].mxu0 %v1059
          %v1188 = vpop.f32.mrb[0].mxu0
          %v1189 = vadd.f32 %v1090, %v1188
          %v1190 = vpop.f32.mrb[0].mxu0
          %1191 = vmatprep.mubr.f32.mxu0 0.0
          %1192 = vmatmul.mubr.f32.gmra.mrb[0].mxu0 %v1060
          %v1193 = vpop.f32.mrb[0].mxu0
          %v1194 = vadd.f32 %v1090, %v1193
          %v1195 = vpop.f32.mrb[0].mxu0
          %1196 = vmatprep.mubr.f32.mxu0 0.0
          %1197 = vmatmul.mubr.f32.gmra.mrb[0].mxu0 %v1061
          %v1198 = vpop.f32.mrb[0].mxu0
          %v1199 = vadd.f32 %v1090, %v1198
          %v1200 = vpop.f32.mrb[0].mxu0
          %1201 = vmatprep.mubr.f32.mxu0 0.0
          %1202 = vmatmul.mubr.f32.gmra.mrb[0].mxu0 %v1062
          %v1203 = vpop.f32.mrb[0].mxu0
          %v1204 = vadd.f32 %v1090, %v1203
          %v1205 = vpop.f32.mrb[0].mxu0
          %1206 = vmatprep.mubr.f32.mxu0 0.0
          %1207 = vmatmul.mubr.f32.gmra.mrb[0].mxu0 %v1063
          %v1208 = vpop.f32.mrb[0].mxu0
          %v1209 = vadd.f32 %v1090, %v1208
          %v1210 = vpop.f32.mrb[0].mxu0
          %1211 = vmatprep.mubr.f32.mxu0 0.0
          %1212 = vmatmul.mubr.f32.gmra.mrb[0].mxu0 %v1064
          %v1213 = vpop.f32.mrb[0].mxu0
          %v1214 = vadd.f32 %v1090, %v1213
          %v1215 = vpop.f32.mrb[0].mxu0
          %1216 = vmatprep.mubr.f32.mxu0 0.0
          %1217 = vmatmul.mubr.f32.gmra.mrb[0].mxu0 %v1065
          %v1218 = vpop.f32.mrb[0].mxu0
          %v1219 = vadd.f32 %v1090, %v1218
          %v1220 = vpop.f32.mrb[0].mxu0
          %1221 = vmatprep.mubr.f32.mxu0 0.0
          %1222 = vmatmul.mubr.f32.gmra.mrb[0].mxu0 %v1066
          %v1223 = vpop.f32.mrb[0].mxu0
          %v1224 = vadd.f32 %v1090, %v1223
          %v1225 = vpop.f32.mrb[0].mxu0
          %1226 = vmatprep.mubr.f32.mxu0 0.0
          %1227 = vmatmul.mubr.f32.gmra.mrb[0].mxu0 %v1067
          %v1228 = vpop.f32.mrb[0].mxu0
          %v1229 = vadd.f32 %v1090, %v1228
          %v1230 = vpop.f32.mrb[0].mxu0
          %1231 = vmatprep.mubr.f32.mxu0 0.0
          %1232 = vmatmul.mubr.f32.gmra.mrb[0].mxu0 %v1068
          %v1233 = vpop.f32.mrb[0].mxu0
          %v1234 = vadd.f32 %v1090, %v1233
          %v1235 = vpop.f32.mrb[0].mxu0
          %1236 = vdwg.mxu0
          %v1237 = vmax.f32 %v1159, 0.0
          %v1238 = vmax.f32 %v1164, 0.0
          %v1239 = vmax.f32 %v1169, 0.0
          %v1240 = vmax.f32 %v1174, 0.0
          %v1241 = vmax.f32 %v1179, 0.0
          %v1242 = vmax.f32 %v1184, 0.0
          %v1243 = vmax.f32 %v1189, 0.0
          %v1244 = vmax.f32 %v1194, 0.0
          %v1245 = vmax.f32 %v1199, 0.0
          %v1246 = vmax.f32 %v1204, 0.0
          %v1247 = vmax.f32 %v1209, 0.0
          %v1248 = vmax.f32 %v1214, 0.0
          %v1249 = vmax.f32 %v1219, 0.0
          %v1250 = vmax.f32 %v1224, 0.0
          %v1251 = vmax.f32 %v1229, 0.0
          %v1252 = vmax.f32 %v1234, 0.0
          %v1253 = vld [vmem:[%s5] sm:$0xff]
          %v1254 = vld [vmem:[%s5 + $0x8] sm:$0xff]
          %v1255 = vld [vmem:[%s5 + $0x10] sm:$0xff]
          %v1256 = vld [vmem:[%s5 + $0x18] sm:$0xff]
          %v1257 = vld [vmem:[%s5 + $0x20] sm:$0xff]
          %v1258 = vld [vmem:[%s5 + $0x28] sm:$0xff]
          %v1259 = vld [vmem:[%s5 + $0x30] sm:$0xff]
          %v1260 = vld [vmem:[%s5 + $0x38] sm:$0xff]
          %v1261 = vld [vmem:[%s5 + $0x40] sm:$0xff]
          %v1262 = vld [vmem:[%s5 + $0x48] sm:$0xff]
          %v1263 = vld [vmem:[%s5 + $0x50] sm:$0xff]
          %v1264 = vld [vmem:[%s5 + $0x58] sm:$0xff]
          %v1265 = vld [vmem:[%s5 + $0x60] sm:$0xff]
          %v1266 = vld [vmem:[%s5 + $0x68] sm:$0xff]
          %v1267 = vld [vmem:[%s5 + $0x70] sm:$0xff]
          %v1268 = vld [vmem:[%s5 + $0x78] sm:$0xff]
          %v1269 = vld [vmem:[%s6] sm:$0x1]
          %v1271 = vlaneseq
          %v1272 = vshrl.u32 %v1271, 7
          %v1273 = vsub.s32 0, %v1272
          %v1274 = vrot.slane %v1269, %v1273
          %1276 = vmatprep.subr.mxu0 0.0
          %1277 = vmatpush1.msra.mxu0 %v1253
          %1278 = vmatprep.subr.mxu0 0.0
          %1279 = vmatpush1.msra.mxu0 %v1254
          %1280 = vmatprep.subr.mxu0 0.0
          %1281 = vmatpush1.msra.mxu0 %v1255
          %1282 = vmatprep.subr.mxu0 0.0
          %1283 = vmatpush1.msra.mxu0 %v1256
          %1284 = vmatprep.subr.mxu0 0.0
          %1285 = vmatpush1.msra.mxu0 %v1257
          %1286 = vmatprep.subr.mxu0 0.0
          %1287 = vmatpush1.msra.mxu0 %v1258
          %1288 = vmatprep.subr.mxu0 0.0
          %1289 = vmatpush1.msra.mxu0 %v1259
          %1290 = vmatprep.subr.mxu0 0.0
          %1291 = vmatpush1.msra.mxu0 %v1260
          %1292 = vmatprep.subr.mxu0 0.0
          %1293 = vmatpush1.msra.mxu0 %v1261
          %1294 = vmatprep.subr.mxu0 0.0
          %1295 = vmatpush1.msra.mxu0 %v1262
          %1296 = vmatprep.subr.mxu0 0.0
          %1297 = vmatpush1.msra.mxu0 %v1263
          %1298 = vmatprep.subr.mxu0 0.0
          %1299 = vmatpush1.msra.mxu0 %v1264
          %1300 = vmatprep.subr.mxu0 0.0
          %1301 = vmatpush1.msra.mxu0 %v1265
          %1302 = vmatprep.subr.mxu0 0.0
          %1303 = vmatpush1.msra.mxu0 %v1266
          %1304 = vmatprep.subr.mxu0 0.0
          %1305 = vmatpush1.msra.mxu0 %v1267
          %1306 = vmatprep.subr.mxu0 0.0
          %1307 = vmatpush1.msra.mxu0 %v1268
          %1308 = vmatprep.subr.mxu0 0.0
          %1309 = vmatpush1.msra.mxu0 0.0
          %1310 = vmatprep.subr.mxu0 0.0
          %1311 = vmatpush1.msra.mxu0 0.0
          %1312 = vmatprep.subr.mxu0 0.0
          %1313 = vmatpush1.msra.mxu0 0.0
          %1314 = vmatprep.subr.mxu0 0.0
          %1315 = vmatpush1.msra.mxu0 0.0
          %1316 = vmatprep.subr.mxu0 0.0
          %1317 = vmatpush1.msra.mxu0 0.0
          %1318 = vmatprep.subr.mxu0 0.0
          %1319 = vmatpush1.msra.mxu0 0.0
          %1320 = vmatprep.subr.mxu0 0.0
          %1321 = vmatpush1.msra.mxu0 0.0
          %1322 = vmatprep.subr.mxu0 0.0
          %1323 = vmatpush1.msra.mxu0 0.0
          %1324 = vmatprep.subr.mxu0 0.0
          %1325 = vmatpush1.msra.mxu0 0.0
          %1326 = vmatprep.subr.mxu0 0.0
          %1327 = vmatpush1.msra.mxu0 0.0
          %1328 = vmatprep.subr.mxu0 0.0
          %1329 = vmatpush1.msra.mxu0 0.0
          %1330 = vmatprep.subr.mxu0 0.0
          %1331 = vmatpush1.msra.mxu0 0.0
          %1332 = vmatprep.subr.mxu0 0.0
          %1333 = vmatpush1.msra.mxu0 0.0
          %1334 = vmatprep.subr.mxu0 0.0
          %1335 = vmatpush1.msra.mxu0 0.0
          %1336 = vmatprep.subr.mxu0 0.0
          %1337 = vmatpush1.msra.mxu0 0.0
          %1338 = vmatprep.subr.mxu0 0.0
          %1339 = vmatpush1.msra.mxu0 0.0
          %1340 = vmatprep.mubr.f32.mxu0 0.0
          %1341 = vmatmul.mubr.f32.gmra.mrb[0].mxu0 %v1237
          %v1342 = vpop.f32.mrb[0].mxu0
          %v1343 = vadd.f32 %v1274, %v1342
          %v1344 = vpop.f32.mrb[0].mxu0
          %1345 = vmatprep.mubr.f32.mxu0 0.0
          %1346 = vmatmul.mubr.f32.gmra.mrb[0].mxu0 %v1238
          %v1347 = vpop.f32.mrb[0].mxu0
          %v1348 = vadd.f32 %v1274, %v1347
          %v1349 = vpop.f32.mrb[0].mxu0
          %1350 = vmatprep.mubr.f32.mxu0 0.0
          %1351 = vmatmul.mubr.f32.gmra.mrb[0].mxu0 %v1239
          %v1352 = vpop.f32.mrb[0].mxu0
          %v1353 = vadd.f32 %v1274, %v1352
          %v1354 = vpop.f32.mrb[0].mxu0
          %1355 = vmatprep.mubr.f32.mxu0 0.0
          %1356 = vmatmul.mubr.f32.gmra.mrb[0].mxu0 %v1240
          %v1357 = vpop.f32.mrb[0].mxu0
          %v1358 = vadd.f32 %v1274, %v1357
          %v1359 = vpop.f32.mrb[0].mxu0
          %1360 = vmatprep.mubr.f32.mxu0 0.0
          %1361 = vmatmul.mubr.f32.gmra.mrb[0].mxu0 %v1241
          %v1362 = vpop.f32.mrb[0].mxu0
          %v1363 = vadd.f32 %v1274, %v1362
          %v1364 = vpop.f32.mrb[0].mxu0
          %1365 = vmatprep.mubr.f32.mxu0 0.0
          %1366 = vmatmul.mubr.f32.gmra.mrb[0].mxu0 %v1242
          %v1367 = vpop.f32.mrb[0].mxu0
          %v1368 = vadd.f32 %v1274, %v1367
          %v1369 = vpop.f32.mrb[0].mxu0
          %1370 = vmatprep.mubr.f32.mxu0 0.0
          %1371 = vmatmul.mubr.f32.gmra.mrb[0].mxu0 %v1243
          %v1372 = vpop.f32.mrb[0].mxu0
          %v1373 = vadd.f32 %v1274, %v1372
          %v1374 = vpop.f32.mrb[0].mxu0
          %1375 = vmatprep.mubr.f32.mxu0 0.0
          %1376 = vmatmul.mubr.f32.gmra.mrb[0].mxu0 %v1244
          %v1377 = vpop.f32.mrb[0].mxu0
          %v1378 = vadd.f32 %v1274, %v1377
          %v1379 = vpop.f32.mrb[0].mxu0
          %1380 = vmatprep.mubr.f32.mxu0 0.0
          %1381 = vmatmul.mubr.f32.gmra.mrb[0].mxu0 %v1245
          %v1382 = vpop.f32.mrb[0].mxu0
          %v1383 = vadd.f32 %v1274, %v1382
          %v1384 = vpop.f32.mrb[0].mxu0
          %1385 = vmatprep.mubr.f32.mxu0 0.0
          %1386 = vmatmul.mubr.f32.gmra.mrb[0].mxu0 %v1246
          %v1387 = vpop.f32.mrb[0].mxu0
          %v1388 = vadd.f32 %v1274, %v1387
          %v1389 = vpop.f32.mrb[0].mxu0
          %1390 = vmatprep.mubr.f32.mxu0 0.0
          %1391 = vmatmul.mubr.f32.gmra.mrb[0].mxu0 %v1247
          %v1392 = vpop.f32.mrb[0].mxu0
          %v1393 = vadd.f32 %v1274, %v1392
          %v1394 = vpop.f32.mrb[0].mxu0
          %1395 = vmatprep.mubr.f32.mxu0 0.0
          %1396 = vmatmul.mubr.f32.gmra.mrb[0].mxu0 %v1248
          %v1397 = vpop.f32.mrb[0].mxu0
          %v1398 = vadd.f32 %v1274, %v1397
          %v1399 = vpop.f32.mrb[0].mxu0
          %1400 = vmatprep.mubr.f32.mxu0 0.0
          %1401 = vmatmul.mubr.f32.gmra.mrb[0].mxu0 %v1249
          %v1402 = vpop.f32.mrb[0].mxu0
          %v1403 = vadd.f32 %v1274, %v1402
          %v1404 = vpop.f32.mrb[0].mxu0
          %1405 = vmatprep.mubr.f32.mxu0 0.0
          %1406 = vmatmul.mubr.f32.gmra.mrb[0].mxu0 %v1250
          %v1407 = vpop.f32.mrb[0].mxu0
          %v1408 = vadd.f32 %v1274, %v1407
          %v1409 = vpop.f32.mrb[0].mxu0
          %1410 = vmatprep.mubr.f32.mxu0 0.0
          %1411 = vmatmul.mubr.f32.gmra.mrb[0].mxu0 %v1251
          %v1412 = vpop.f32.mrb[0].mxu0
          %v1413 = vadd.f32 %v1274, %v1412
          %v1414 = vpop.f32.mrb[0].mxu0
          %1415 = vmatprep.mubr.f32.mxu0 0.0
          %1416 = vmatmul.mubr.f32.gmra.mrb[0].mxu0 %v1252
          %v1417 = vpop.f32.mrb[0].mxu0
          %v1418 = vadd.f32 %v1274, %v1417
          %v1419 = vpop.f32.mrb[0].mxu0
          %1420 = vdwg.mxu0
          %v1421 = vadd.f32 %v1343, 1.0
          %v1422 = vadd.f32 %v1348, 1.0
          %v1423 = vadd.f32 %v1353, 1.0
          %v1424 = vadd.f32 %v1358, 1.0
          %v1425 = vadd.f32 %v1363, 1.0
          %v1426 = vadd.f32 %v1368, 1.0
          %v1427 = vadd.f32 %v1373, 1.0
          %v1428 = vadd.f32 %v1378, 1.0
          %v1429 = vadd.f32 %v1383, 1.0
          %v1430 = vadd.f32 %v1388, 1.0
          %v1431 = vadd.f32 %v1393, 1.0
          %v1432 = vadd.f32 %v1398, 1.0
          %v1433 = vadd.f32 %v1403, 1.0
          %v1434 = vadd.f32 %v1408, 1.0
          %v1435 = vadd.f32 %v1413, 1.0
          %v1436 = vadd.f32 %v1418, 1.0
          %v1437 = vmul.f32 %v1343, %v1343
          %v1438 = vmul.f32 %v1348, %v1348
          %v1439 = vmul.f32 %v1353, %v1353
          %v1440 = vmul.f32 %v1358, %v1358
          %v1441 = vmul.f32 %v1363, %v1363
          %v1442 = vmul.f32 %v1368, %v1368
          %v1443 = vmul.f32 %v1373, %v1373
          %v1444 = vmul.f32 %v1378, %v1378
          %v1445 = vmul.f32 %v1383, %v1383
          %v1446 = vmul.f32 %v1388, %v1388
          %v1447 = vmul.f32 %v1393, %v1393
          %v1448 = vmul.f32 %v1398, %v1398
          %v1449 = vmul.f32 %v1403, %v1403
          %v1450 = vmul.f32 %v1408, %v1408
          %v1451 = vmul.f32 %v1413, %v1413
          %v1452 = vmul.f32 %v1418, %v1418
          %1469 = vrot.lane.b32.xlu0 %v1437, 32
          %v1470 = vpop.permute.xlu0 %1469
          %1471 = vrot.lane.b32.xlu0 %v1438, 32
          %v1472 = vpop.permute.xlu0 %1471
          %1473 = vrot.lane.b32.xlu0 %v1439, 32
          %v1474 = vpop.permute.xlu0 %1473
          %1475 = vrot.lane.b32.xlu0 %v1440, 32
          %v1476 = vpop.permute.xlu0 %1475
          %1477 = vrot.lane.b32.xlu0 %v1441, 32
          %v1478 = vpop.permute.xlu0 %1477
          %1479 = vrot.lane.b32.xlu0 %v1442, 32
          %v1480 = vpop.permute.xlu0 %1479
          %1481 = vrot.lane.b32.xlu0 %v1443, 32
          %v1482 = vpop.permute.xlu0 %1481
          %1483 = vrot.lane.b32.xlu0 %v1444, 32
          %v1484 = vpop.permute.xlu0 %1483
          %1485 = vrot.lane.b32.xlu0 %v1445, 32
          %v1486 = vpop.permute.xlu0 %1485
          %1487 = vrot.lane.b32.xlu0 %v1446, 32
          %v1488 = vpop.permute.xlu0 %1487
          %1489 = vrot.lane.b32.xlu0 %v1447, 32
          %v1490 = vpop.permute.xlu0 %1489
          %1491 = vrot.lane.b32.xlu0 %v1448, 32
          %v1492 = vpop.permute.xlu0 %1491
          %1493 = vrot.lane.b32.xlu0 %v1449, 32
          %v1494 = vpop.permute.xlu0 %1493
          %1495 = vrot.lane.b32.xlu0 %v1450, 32
          %v1496 = vpop.permute.xlu0 %1495
          %1497 = vrot.lane.b32.xlu0 %v1451, 32
          %v1498 = vpop.permute.xlu0 %1497
          %1499 = vrot.lane.b32.xlu0 %v1452, 32
          %v1500 = vpop.permute.xlu0 %1499
          %v1517 = vsub.f32 %v1421, %v1470
          %v1518 = vsub.f32 %v1422, %v1472
          %v1519 = vsub.f32 %v1423, %v1474
          %v1520 = vsub.f32 %v1424, %v1476
          %v1521 = vsub.f32 %v1425, %v1478
          %v1522 = vsub.f32 %v1426, %v1480
          %v1523 = vsub.f32 %v1427, %v1482
          %v1524 = vsub.f32 %v1428, %v1484
          %v1525 = vsub.f32 %v1429, %v1486
          %v1526 = vsub.f32 %v1430, %v1488
          %v1527 = vsub.f32 %v1431, %v1490
          %v1528 = vsub.f32 %v1432, %v1492
          %v1529 = vsub.f32 %v1433, %v1494
          %v1530 = vsub.f32 %v1434, %v1496
          %v1531 = vsub.f32 %v1435, %v1498
          %v1532 = vsub.f32 %v1436, %v1500
          %v1533 = vmul.f32 %v1343, 1.442695
          %v1534 = vpow.pop %v1533
          %v1535 = vmul.f32 %v1348, 1.442695
          %v1536 = vpow.pop %v1535
          %v1537 = vmul.f32 %v1353, 1.442695
          %v1538 = vpow.pop %v1537
          %v1539 = vmul.f32 %v1358, 1.442695
          %v1540 = vpow.pop %v1539
          %v1541 = vmul.f32 %v1363, 1.442695
          %v1542 = vpow.pop %v1541
          %v1543 = vmul.f32 %v1368, 1.442695
          %v1544 = vpow.pop %v1543
          %v1545 = vmul.f32 %v1373, 1.442695
          %v1546 = vpow.pop %v1545
          %v1547 = vmul.f32 %v1378, 1.442695
          %v1548 = vpow.pop %v1547
          %v1549 = vmul.f32 %v1383, 1.442695
          %v1550 = vpow.pop %v1549
          %v1551 = vmul.f32 %v1388, 1.442695
          %v1552 = vpow.pop %v1551
          %v1553 = vmul.f32 %v1393, 1.442695
          %v1554 = vpow.pop %v1553
          %v1555 = vmul.f32 %v1398, 1.442695
          %v1556 = vpow.pop %v1555
          %v1557 = vmul.f32 %v1403, 1.442695
          %v1558 = vpow.pop %v1557
          %v1559 = vmul.f32 %v1408, 1.442695
          %v1560 = vpow.pop %v1559
          %v1561 = vmul.f32 %v1413, 1.442695
          %v1562 = vpow.pop %v1561
          %v1563 = vmul.f32 %v1418, 1.442695
          %v1564 = vpow.pop %v1563
          %v1565 = vsub.f32 %v1517, %v1534
          %v1566 = vsub.f32 %v1518, %v1536
          %v1567 = vsub.f32 %v1519, %v1538
          %v1568 = vsub.f32 %v1520, %v1540
          %v1569 = vsub.f32 %v1521, %v1542
          %v1570 = vsub.f32 %v1522, %v1544
          %v1571 = vsub.f32 %v1523, %v1546
          %v1572 = vsub.f32 %v1524, %v1548
          %v1573 = vsub.f32 %v1525, %v1550
          %v1574 = vsub.f32 %v1526, %v1552
          %v1575 = vsub.f32 %v1527, %v1554
          %v1576 = vsub.f32 %v1528, %v1556
          %v1577 = vsub.f32 %v1529, %v1558
          %v1578 = vsub.f32 %v1530, %v1560
          %v1579 = vsub.f32 %v1531, %v1562
          %v1580 = vsub.f32 %v1532, %v1564
          %1597 = vrot.lane.b32.xlu0 %v1565, 96
          %v1598 = vpop.permute.xlu0 %1597
          %1599 = vrot.lane.b32.xlu0 %v1566, 96
          %v1600 = vpop.permute.xlu0 %1599
          %1601 = vrot.lane.b32.xlu0 %v1567, 96
          %v1602 = vpop.permute.xlu0 %1601
          %1603 = vrot.lane.b32.xlu0 %v1568, 96
          %v1604 = vpop.permute.xlu0 %1603
          %1605 = vrot.lane.b32.xlu0 %v1569, 96
          %v1606 = vpop.permute.xlu0 %1605
          %1607 = vrot.lane.b32.xlu0 %v1570, 96
          %v1608 = vpop.permute.xlu0 %1607
          %1609 = vrot.lane.b32.xlu0 %v1571, 96
          %v1610 = vpop.permute.xlu0 %1609
          %1611 = vrot.lane.b32.xlu0 %v1572, 96
          %v1612 = vpop.permute.xlu0 %1611
          %1613 = vrot.lane.b32.xlu0 %v1573, 96
          %v1614 = vpop.permute.xlu0 %1613
          %1615 = vrot.lane.b32.xlu0 %v1574, 96
          %v1616 = vpop.permute.xlu0 %1615
          %1617 = vrot.lane.b32.xlu0 %v1575, 96
          %v1618 = vpop.permute.xlu0 %1617
          %1619 = vrot.lane.b32.xlu0 %v1576, 96
          %v1620 = vpop.permute.xlu0 %1619
          %1621 = vrot.lane.b32.xlu0 %v1577, 96
          %v1622 = vpop.permute.xlu0 %1621
          %1623 = vrot.lane.b32.xlu0 %v1578, 96
          %v1624 = vpop.permute.xlu0 %1623
          %1625 = vrot.lane.b32.xlu0 %v1579, 96
          %v1626 = vpop.permute.xlu0 %1625
          %1627 = vrot.lane.b32.xlu0 %v1580, 96
          %v1628 = vpop.permute.xlu0 %1627
          %vm1645 = vcmask 261120
          %v1646 = vsel %vm1645, %v1598, 0.0
          %1647 = vadd.xlane.f32.xlu0 %v1646
          %v1648 = vpop.xlane.xlu0 %1647
          %v1649 = vsel %vm1645, %v1600, 0.0
          %1650 = vadd.xlane.f32.xlu0 %v1649
          %v1651 = vpop.xlane.xlu0 %1650
          %v1652 = vsel %vm1645, %v1602, 0.0
          %1653 = vadd.xlane.f32.xlu0 %v1652
          %v1654 = vpop.xlane.xlu0 %1653
          %v1655 = vsel %vm1645, %v1604, 0.0
          %1656 = vadd.xlane.f32.xlu0 %v1655
          %v1657 = vpop.xlane.xlu0 %1656
          %v1658 = vsel %vm1645, %v1606, 0.0
          %1659 = vadd.xlane.f32.xlu0 %v1658
          %v1660 = vpop.xlane.xlu0 %1659
          %v1661 = vsel %vm1645, %v1608, 0.0
          %1662 = vadd.xlane.f32.xlu0 %v1661
          %v1663 = vpop.xlane.xlu0 %1662
          %v1664 = vsel %vm1645, %v1610, 0.0
          %1665 = vadd.xlane.f32.xlu0 %v1664
          %v1666 = vpop.xlane.xlu0 %1665
          %v1667 = vsel %vm1645, %v1612, 0.0
          %1668 = vadd.xlane.f32.xlu0 %v1667
          %v1669 = vpop.xlane.xlu0 %1668
          %v1670 = vsel %vm1645, %v1614, 0.0
          %1671 = vadd.xlane.f32.xlu0 %v1670
          %v1672 = vpop.xlane.xlu0 %1671
          %v1673 = vsel %vm1645, %v1616, 0.0
          %1674 = vadd.xlane.f32.xlu0 %v1673
          %v1675 = vpop.xlane.xlu0 %1674
          %v1676 = vsel %vm1645, %v1618, 0.0
          %1677 = vadd.xlane.f32.xlu0 %v1676
          %v1678 = vpop.xlane.xlu0 %1677
          %v1679 = vsel %vm1645, %v1620, 0.0
          %1680 = vadd.xlane.f32.xlu0 %v1679
          %v1681 = vpop.xlane.xlu0 %1680
          %v1682 = vsel %vm1645, %v1622, 0.0
          %1683 = vadd.xlane.f32.xlu0 %v1682
          %v1684 = vpop.xlane.xlu0 %1683
          %v1685 = vsel %vm1645, %v1624, 0.0
          %1686 = vadd.xlane.f32.xlu0 %v1685
          %v1687 = vpop.xlane.xlu0 %1686
          %v1688 = vsel %vm1645, %v1626, 0.0
          %1689 = vadd.xlane.f32.xlu0 %v1688
          %v1690 = vpop.xlane.xlu0 %1689
          %v1691 = vsel %vm1645, %v1628, 0.0
          %1692 = vadd.xlane.f32.xlu0 %v1691
          %v1693 = vpop.xlane.xlu0 %1692
          %v1694 = vmul.f32 %v1648, -0.5
          %v1695 = vmul.f32 %v1651, -0.5
          %v1696 = vmul.f32 %v1654, -0.5
          %v1697 = vmul.f32 %v1657, -0.5
          %v1698 = vmul.f32 %v1660, -0.5
          %v1699 = vmul.f32 %v1663, -0.5
          %v1700 = vmul.f32 %v1666, -0.5
          %v1701 = vmul.f32 %v1669, -0.5
          %v1702 = vmul.f32 %v1672, -0.5
          %v1703 = vmul.f32 %v1675, -0.5
          %v1704 = vmul.f32 %v1678, -0.5
          %v1705 = vmul.f32 %v1681, -0.5
          %v1706 = vmul.f32 %v1684, -0.5
          %v1707 = vmul.f32 %v1687, -0.5
          %v1708 = vmul.f32 %v1690, -0.5
          %v1709 = vmul.f32 %v1693, -0.5
          %vm1710 = vcmask 7168
          %1711 = vst.msk [vmem:[%s393] sm:$0xff] %vm1710, %v1694
          %1712 = vst.msk [vmem:[%s393 + $0x8] sm:$0xff] %vm1710, %v1695
          %1713 = vst.msk [vmem:[%s393 + $0x10] sm:$0xff] %vm1710, %v1696
          %1714 = vst.msk [vmem:[%s393 + $0x18] sm:$0xff] %vm1710, %v1697
          %1715 = vst.msk [vmem:[%s393 + $0x20] sm:$0xff] %vm1710, %v1698
          %1716 = vst.msk [vmem:[%s393 + $0x28] sm:$0xff] %vm1710, %v1699
          %1717 = vst.msk [vmem:[%s393 + $0x30] sm:$0xff] %vm1710, %v1700
          %1718 = vst.msk [vmem:[%s393 + $0x38] sm:$0xff] %vm1710, %v1701
          %1719 = vst.msk [vmem:[%s393 + $0x40] sm:$0xff] %vm1710, %v1702
          %1720 = vst.msk [vmem:[%s393 + $0x48] sm:$0xff] %vm1710, %v1703
          %1721 = vst.msk [vmem:[%s393 + $0x50] sm:$0xff] %vm1710, %v1704
          %1722 = vst.msk [vmem:[%s393 + $0x58] sm:$0xff] %vm1710, %v1705
          %1723 = vst.msk [vmem:[%s393 + $0x60] sm:$0xff] %vm1710, %v1706
          %1724 = vst.msk [vmem:[%s393 + $0x68] sm:$0xff] %vm1710, %v1707
          %1725 = vst.msk [vmem:[%s393 + $0x70] sm:$0xff] %vm1710, %v1708
          %1726 = vst.msk [vmem:[%s393 + $0x78] sm:$0xff] %vm1710, %v1709
          %v1727 = vsel %vm1645, %v1343, -inf
          %1728 = vmax.xlane.f32.xlu0 %v1727
          %v1729 = vpop.xlane.xlu0 %1728
          %v1730 = vsel %vm1645, %v1348, -inf
          %1731 = vmax.xlane.f32.xlu0 %v1730
          %v1732 = vpop.xlane.xlu0 %1731
          %v1733 = vsel %vm1645, %v1353, -inf
          %1734 = vmax.xlane.f32.xlu0 %v1733
          %v1735 = vpop.xlane.xlu0 %1734
          %v1736 = vsel %vm1645, %v1358, -inf
          %1737 = vmax.xlane.f32.xlu0 %v1736
          %v1738 = vpop.xlane.xlu0 %1737
          %v1739 = vsel %vm1645, %v1363, -inf
          %1740 = vmax.xlane.f32.xlu0 %v1739
          %v1741 = vpop.xlane.xlu0 %1740
          %v1742 = vsel %vm1645, %v1368, -inf
          %1743 = vmax.xlane.f32.xlu0 %v1742
          %v1744 = vpop.xlane.xlu0 %1743
          %v1745 = vsel %vm1645, %v1373, -inf
          %1746 = vmax.xlane.f32.xlu0 %v1745
          %v1747 = vpop.xlane.xlu0 %1746
          %v1748 = vsel %vm1645, %v1378, -inf
          %1749 = vmax.xlane.f32.xlu0 %v1748
          %v1750 = vpop.xlane.xlu0 %1749
          %v1751 = vsel %vm1645, %v1383, -inf
          %1752 = vmax.xlane.f32.xlu0 %v1751
          %v1753 = vpop.xlane.xlu0 %1752
          %v1754 = vsel %vm1645, %v1388, -inf
          %1755 = vmax.xlane.f32.xlu0 %v1754
          %v1756 = vpop.xlane.xlu0 %1755
          %v1757 = vsel %vm1645, %v1393, -inf
          %1758 = vmax.xlane.f32.xlu0 %v1757
          %v1759 = vpop.xlane.xlu0 %1758
          %v1760 = vsel %vm1645, %v1398, -inf
          %1761 = vmax.xlane.f32.xlu0 %v1760
          %v1762 = vpop.xlane.xlu0 %1761
          %v1763 = vsel %vm1645, %v1403, -inf
          %1764 = vmax.xlane.f32.xlu0 %v1763
          %v1765 = vpop.xlane.xlu0 %1764
          %v1766 = vsel %vm1645, %v1408, -inf
          %1767 = vmax.xlane.f32.xlu0 %v1766
          %v1768 = vpop.xlane.xlu0 %1767
          %v1769 = vsel %vm1645, %v1413, -inf
          %1770 = vmax.xlane.f32.xlu0 %v1769
          %v1771 = vpop.xlane.xlu0 %1770
          %v1772 = vsel %vm1645, %v1418, -inf
          %1773 = vmax.xlane.f32.xlu0 %v1772
          %v1774 = vpop.xlane.xlu0 %1773
          %v1775 = vsub.f32 %v1343, %v1729
          %v1776 = vsub.f32 %v1348, %v1732
          %v1777 = vsub.f32 %v1353, %v1735
          %v1778 = vsub.f32 %v1358, %v1738
          %v1779 = vsub.f32 %v1363, %v1741
          %v1780 = vsub.f32 %v1368, %v1744
          %v1781 = vsub.f32 %v1373, %v1747
          %v1782 = vsub.f32 %v1378, %v1750
          %v1783 = vsub.f32 %v1383, %v1753
          %v1784 = vsub.f32 %v1388, %v1756
          %v1785 = vsub.f32 %v1393, %v1759
          %v1786 = vsub.f32 %v1398, %v1762
          %v1787 = vsub.f32 %v1403, %v1765
          %v1788 = vsub.f32 %v1408, %v1768
          %v1789 = vsub.f32 %v1413, %v1771
          %v1790 = vsub.f32 %v1418, %v1774
          %v1791 = vmul.f32 %v1775, 1.442695
          %v1792 = vpow.pop %v1791
          %v1793 = vmul.f32 %v1776, 1.442695
          %v1794 = vpow.pop %v1793
          %v1795 = vmul.f32 %v1777, 1.442695
          %v1796 = vpow.pop %v1795
          %v1797 = vmul.f32 %v1778, 1.442695
          %v1798 = vpow.pop %v1797
          %v1799 = vmul.f32 %v1779, 1.442695
          %v1800 = vpow.pop %v1799
          %v1801 = vmul.f32 %v1780, 1.442695
          %v1802 = vpow.pop %v1801
          %v1803 = vmul.f32 %v1781, 1.442695
          %v1804 = vpow.pop %v1803
          %v1805 = vmul.f32 %v1782, 1.442695
          %v1806 = vpow.pop %v1805
          %v1807 = vmul.f32 %v1783, 1.442695
          %v1808 = vpow.pop %v1807
          %v1809 = vmul.f32 %v1784, 1.442695
          %v1810 = vpow.pop %v1809
          %v1811 = vmul.f32 %v1785, 1.442695
          %v1812 = vpow.pop %v1811
          %v1813 = vmul.f32 %v1786, 1.442695
          %v1814 = vpow.pop %v1813
          %v1815 = vmul.f32 %v1787, 1.442695
          %v1816 = vpow.pop %v1815
          %v1817 = vmul.f32 %v1788, 1.442695
          %v1818 = vpow.pop %v1817
          %v1819 = vmul.f32 %v1789, 1.442695
          %v1820 = vpow.pop %v1819
          %v1821 = vmul.f32 %v1790, 1.442695
          %v1822 = vpow.pop %v1821
          %v1823 = vsel %vm1645, %v1792, 0.0
          %1824 = vadd.xlane.f32.xlu0 %v1823
          %v1825 = vpop.xlane.xlu0 %1824
          %v1826 = vsel %vm1645, %v1794, 0.0
          %1827 = vadd.xlane.f32.xlu0 %v1826
          %v1828 = vpop.xlane.xlu0 %1827
          %v1829 = vsel %vm1645, %v1796, 0.0
          %1830 = vadd.xlane.f32.xlu0 %v1829
          %v1831 = vpop.xlane.xlu0 %1830
          %v1832 = vsel %vm1645, %v1798, 0.0
          %1833 = vadd.xlane.f32.xlu0 %v1832
          %v1834 = vpop.xlane.xlu0 %1833
          %v1835 = vsel %vm1645, %v1800, 0.0
          %1836 = vadd.xlane.f32.xlu0 %v1835
          %v1837 = vpop.xlane.xlu0 %1836
          %v1838 = vsel %vm1645, %v1802, 0.0
          %1839 = vadd.xlane.f32.xlu0 %v1838
          %v1840 = vpop.xlane.xlu0 %1839
          %v1841 = vsel %vm1645, %v1804, 0.0
          %1842 = vadd.xlane.f32.xlu0 %v1841
          %v1843 = vpop.xlane.xlu0 %1842
          %v1844 = vsel %vm1645, %v1806, 0.0
          %1845 = vadd.xlane.f32.xlu0 %v1844
          %v1846 = vpop.xlane.xlu0 %1845
          %v1847 = vsel %vm1645, %v1808, 0.0
          %1848 = vadd.xlane.f32.xlu0 %v1847
          %v1849 = vpop.xlane.xlu0 %1848
          %v1850 = vsel %vm1645, %v1810, 0.0
          %1851 = vadd.xlane.f32.xlu0 %v1850
          %v1852 = vpop.xlane.xlu0 %1851
          %v1853 = vsel %vm1645, %v1812, 0.0
          %1854 = vadd.xlane.f32.xlu0 %v1853
          %v1855 = vpop.xlane.xlu0 %1854
          %v1856 = vsel %vm1645, %v1814, 0.0
          %1857 = vadd.xlane.f32.xlu0 %v1856
          %v1858 = vpop.xlane.xlu0 %1857
          %v1859 = vsel %vm1645, %v1816, 0.0
          %1860 = vadd.xlane.f32.xlu0 %v1859
          %v1861 = vpop.xlane.xlu0 %1860
          %v1862 = vsel %vm1645, %v1818, 0.0
          %1863 = vadd.xlane.f32.xlu0 %v1862
          %v1864 = vpop.xlane.xlu0 %1863
          %v1865 = vsel %vm1645, %v1820, 0.0
          %1866 = vadd.xlane.f32.xlu0 %v1865
          %v1867 = vpop.xlane.xlu0 %1866
          %v1868 = vsel %vm1645, %v1822, 0.0
          %1869 = vadd.xlane.f32.xlu0 %v1868
          %v1870 = vpop.xlane.xlu0 %1869
          %v1871 = vrcp.pop %v1825
          %v1872 = vmul.f32 %v1792, %v1871
          %v1873 = vrcp.pop %v1828
          %v1874 = vmul.f32 %v1794, %v1873
          %v1875 = vrcp.pop %v1831
          %v1876 = vmul.f32 %v1796, %v1875
          %v1877 = vrcp.pop %v1834
          %v1878 = vmul.f32 %v1798, %v1877
          %v1879 = vrcp.pop %v1837
          %v1880 = vmul.f32 %v1800, %v1879
          %v1881 = vrcp.pop %v1840
          %v1882 = vmul.f32 %v1802, %v1881
          %v1883 = vrcp.pop %v1843
          %v1884 = vmul.f32 %v1804, %v1883
          %v1885 = vrcp.pop %v1846
          %v1886 = vmul.f32 %v1806, %v1885
          %v1887 = vrcp.pop %v1849
          %v1888 = vmul.f32 %v1808, %v1887
          %v1889 = vrcp.pop %v1852
          %v1890 = vmul.f32 %v1810, %v1889
          %v1891 = vrcp.pop %v1855
          %v1892 = vmul.f32 %v1812, %v1891
          %v1893 = vrcp.pop %v1858
          %v1894 = vmul.f32 %v1814, %v1893
          %v1895 = vrcp.pop %v1861
          %v1896 = vmul.f32 %v1816, %v1895
          %v1897 = vrcp.pop %v1864
          %v1898 = vmul.f32 %v1818, %v1897
          %v1899 = vrcp.pop %v1867
          %v1900 = vmul.f32 %v1820, %v1899
          %v1901 = vrcp.pop %v1870
          %v1902 = vmul.f32 %v1822, %v1901
          %1903 = vst.msk [vmem:[%s387] sm:$0xff] %vm1645, %v1872
          %1904 = vst.msk [vmem:[%s387 + $0x8] sm:$0xff] %vm1645, %v1874
          %1905 = vst.msk [vmem:[%s387 + $0x10] sm:$0xff] %vm1645, %v1876
          %1906 = vst.msk [vmem:[%s387 + $0x18] sm:$0xff] %vm1645, %v1878
          %1907 = vst.msk [vmem:[%s387 + $0x20] sm:$0xff] %vm1645, %v1880
          %1908 = vst.msk [vmem:[%s387 + $0x28] sm:$0xff] %vm1645, %v1882
          %1909 = vst.msk [vmem:[%s387 + $0x30] sm:$0xff] %vm1645, %v1884
          %1910 = vst.msk [vmem:[%s387 + $0x38] sm:$0xff] %vm1645, %v1886
          %1911 = vst.msk [vmem:[%s387 + $0x40] sm:$0xff] %vm1645, %v1888
          %1912 = vst.msk [vmem:[%s387 + $0x48] sm:$0xff] %vm1645, %v1890
          %1913 = vst.msk [vmem:[%s387 + $0x50] sm:$0xff] %vm1645, %v1892
          %1914 = vst.msk [vmem:[%s387 + $0x58] sm:$0xff] %vm1645, %v1894
          %1915 = vst.msk [vmem:[%s387 + $0x60] sm:$0xff] %vm1645, %v1896
          %1916 = vst.msk [vmem:[%s387 + $0x68] sm:$0xff] %vm1645, %v1898
          %1917 = vst.msk [vmem:[%s387 + $0x70] sm:$0xff] %vm1645, %v1900
          %1918 = vst.msk [vmem:[%s387 + $0x78] sm:$0xff] %vm1645, %v1902
        $region64: #{etm_forward.6} parent=47 // pred_fallthru
          _
        %s1919 = smul.u32 16, %s28
        %p1920 = scmp.lt.s32.totalorder %s1919, 31
        %s1921 = scalar_select %p1920, %s1919, 31
        %s1922 = smul.addr %s1921, 8
        %s1923 = scalar_lea.vmem %s7, %s1922
        %s1924 = smul.u32 16, %s28
        %p1925 = scmp.lt.s32.totalorder %s1924, 31
        %s1926 = scalar_select %p1925, %s1924, 31
        %s1927 = smul.addr %s1926, 8
        %s1928 = scalar_lea.vmem %s8, %s1927
        // Predicated region
        $region65: #{etm_forward.6} parent=47 // pred_check
          %p1929 = pneg %p213
        $region66: #{etm_forward.6} parent=47 // pred_check_branch
          %1931 = sbr.rel (%p1929) target = $region68
        $region67: #{etm_forward.6} parent=47 // pred_region
          %s1932 = smul.u32 16, %s28
        $region68: #{etm_forward.6} parent=47 // pred_fallthru
          _
        // Predicated region
        $region69: #{etm_forward.6} parent=47 // pred_check
          %p1933 = pneg %p239
        $region70: #{etm_forward.6} parent=47 // pred_check_branch
          %1935 = sbr.rel (%p1933) target = $region72
        $region71: #{etm_forward.6} parent=47 // pred_region
          %s1936 = smul.u32 16, %s28
        $region72: #{etm_forward.6} parent=47 // pred_fallthru
          _
      $region48: #{etm_forward.6} parent=5 // pred_fallthru
        _
      %p1937 = scmp.le.s32.totalorder 2, %s19
      // Predicated region
      $region73: #{etm_forward.6} parent=5 // pred_check
        %p1938 = pneg %p1937
      $region74: #{etm_forward.6} parent=5 // pred_check_branch
        %1940 = sbr.rel (%p1938) target = $region76
      $region75: #{etm_forward.6} parent=5 // pred_region
        %s1941 = ssub.s32 %s19, 2
        // Predicated region
        $region77: #{etm_forward.6} parent=75 // pred_check
          %p1942 = pneg %p219
        $region78: #{etm_forward.6} parent=75 // pred_check_branch
          %1944 = sbr.rel (%p1942) target = $region80
        $region79: #{etm_forward.6} parent=75 // pred_region
          %s1945 = smul.u32 16, %s30
          %p1946 = scmp.lt.s32.totalorder %s1945, 31
          %s1947 = scalar_select %p1946, %s1945, 31
          %s1948 = smul.addr %s1947, 8
          %s1949 = scalar_lea.vmem %s7, %s1948
        $region80: #{etm_forward.6} parent=75 // pred_fallthru
          _
        // Predicated region
        $region81: #{etm_forward.6} parent=75 // pred_check
          %p1950 = pneg %p245
        $region82: #{etm_forward.6} parent=75 // pred_check_branch
          %1952 = sbr.rel (%p1950) target = $region84
        $region83: #{etm_forward.6} parent=75 // pred_region
          %s1953 = smul.u32 16, %s30
          %p1954 = scmp.lt.s32.totalorder %s1953, 31
          %s1955 = scalar_select %p1954, %s1953, 31
          %s1956 = smul.addr %s1955, 8
          %s1957 = scalar_lea.vmem %s8, %s1956
        $region84: #{etm_forward.6} parent=75 // pred_fallthru
          _
      $region76: #{etm_forward.6} parent=5 // pred_fallthru
        _
    $region6: #{etm_forward.6} parent=1 // loop_footer
      %s23 = sadd.s32 1, %s19
    $region7: #{etm_forward.6} parent=1 // loop_footer_branch
      %18 = sbr.rel target = $region3
    $region8: #{etm_forward.6} parent=1 // loop_exit
      _
    %1958 = vsyncpa [#allocation4], 1
    %s1959 = scalar_lea.sflag [#allocation4], 1
    %1960 = vsyncpa %s1959, 1
    %1961 = vsyncpa [#allocation6], 1

// kernel: etm_forward.7
$region0: #{etm_forward.7}
  #allocation0 [shape = 'u32[]', space=smem, size = 0x4, offset = 0x4, fixed_abs, tag = 'smem constant byte address 0x4 - core index']
  #allocation1 [shape = 'u32[144,128]{1,0:T(1,128)}', space=vmem, size = 0x12000, scoped, tag = 'internal scratch']
  #allocation2 [shape = 'f32[128,1]{1,0:T(8,128)}', space=vmem, size = 0x10000, scoped, tag = 'scratch operand']
  %s0 = inlined_call_operand.vmem [shape: f32[256,1024], index: 0, kind: input, shape index: {}]
  %s1 = inlined_call_operand.vmem [shape: f32[256,32], index: 1, kind: input, shape index: {}]
  %s2 = inlined_call_operand.vmem [shape: bf16[32,1024], index: 2, kind: input, shape index: {}]
  %s3 = inlined_call_operand.vmem [shape: f32[256,1], index: 3, kind: output, shape index: {}]
  %s4 = sld [smem:[#allocation0]]
  $region99: #{etm_forward.7} parent=0
    _
  %s6 = ssub.s32 1, %s4
  %s7 = scalar_select 0, %s6, %s4
  $region1: #{etm_forward.7} parent=0
    #allocation3 [shape = 'u8[524288]{0}', space=vmem, size = 0x80000, scoped, tag = 'input window, operand 0']
    #allocation4 [shape = 'u8[65536]{0}', space=vmem, size = 0x10000, scoped, tag = 'input window, operand 2']
    loop: start=0, step=1, limit=6
    $region2: #{etm_forward.7} parent=1 // loop_pre_header
      _
    $region3: #{etm_forward.7} parent=1 // loop_header
      %s9 = sphi 0, %s13
      %p10 = scmp.ge.s32.totalorder %s9, 6
      %s16 = sphi 0, %s28
      %s17 = sphi 0, %s24
      %s18 = sphi 0, %s16
      %s19 = sphi 0, %s17
      %s20 = sphi 0, %s18
      %s21 = sphi 0, %s19
      %s33 = sphi 0, %s35
      %s36 = sphi 0, %s33
      %s37 = sphi 0, %s36
      %s53 = sphi 0, %s37
      %s59 = sphi 0, %s61
      %s62 = sphi 0, %s59
      %s63 = sphi 0, %s62
      %s79 = sphi 0, %s63
      %s85 = sphi 0, %s87
      %s88 = sphi 0, %s85
      %s89 = sphi 0, %s88
      %s105 = sphi 0, %s89
      %s111 = sphi 0, %s113
      %s114 = sphi 0, %s111
      %s115 = sphi 0, %s114
      %s131 = sphi 0, %s115
    $region4: #{etm_forward.7} parent=1 // loop_header_branch
      %12 = sbr.rel (%p10) target = $region8
    $region5: #{etm_forward.7} parent=1 // loop_body
      %s14 = ssub.s32 %s9, 1
      %s15 = ssub.s32 %s9, 2
      %s22 = sadd.s32 1, %s17
      %p23 = scmp.ge.s32.totalorder %s22, 2
      %s24 = scalar_select %p23, 0, %s22
      %s25 = sadd.s32 1, %s16
      %s26 = scalar_select %p23, %s25, %s16
      %p27 = scmp.ge.s32.totalorder %s26, 2
      %s28 = scalar_select %p27, 0, %s26
      %s29 = ssub.s32 %s16, %s28
      %s30 = ssub.s32 %s17, %s24
      %s31 = sor.u32 %s29, %s30
      %p32 = scmp.eq.s32.totalorder %s31, 0
      %s34 = sadd.s32 %s33, 1
      %s35 = scalar_select %p32, %s33, %s34
      %p38 = pneg %p32
      %p39 = scmp.eq.s32.totalorder %s9, 3
      %p40 = por %p38, %p39
      %p41 = scmp.ne.s32.totalorder %s33, %s36
      %p42 = scmp.eq.s32.totalorder %s9, 0
      %p43 = por %p41, %p42
      %p44 = scmp.ne.s32.totalorder %s33, %s36
      %p45 = scmp.eq.s32.totalorder %s14, 3
      %p46 = por %p44, %p45
      %p47 = scmp.ne.s32.totalorder %s36, %s37
      %p48 = scmp.eq.s32.totalorder %s14, 0
      %p49 = por %p47, %p48
      %p50 = scmp.ne.s32.totalorder %s36, %s37
      %p51 = scmp.eq.s32.totalorder %s15, 3
      %p52 = por %p50, %p51
      %p54 = scmp.ne.s32.totalorder %s37, %s53
      %p55 = scmp.eq.s32.totalorder %s15, 0
      %p56 = por %p54, %p55
      %s57 = ssub.s32 %s16, %s28
      %p58 = scmp.eq.s32.totalorder %s57, 0
      %s60 = sadd.s32 %s59, 1
      %s61 = scalar_select %p58, %s59, %s60
      %p64 = pneg %p58
      %p65 = scmp.eq.s32.totalorder %s9, 3
      %p66 = por %p64, %p65
      %p67 = scmp.ne.s32.totalorder %s59, %s62
      %p68 = scmp.eq.s32.totalorder %s9, 0
      %p69 = por %p67, %p68
      %p70 = scmp.ne.s32.totalorder %s59, %s62
      %p71 = scmp.eq.s32.totalorder %s14, 3
      %p72 = por %p70, %p71
      %p73 = scmp.ne.s32.totalorder %s62, %s63
      %p74 = scmp.eq.s32.totalorder %s14, 0
      %p75 = por %p73, %p74
      %p76 = scmp.ne.s32.totalorder %s62, %s63
      %p77 = scmp.eq.s32.totalorder %s15, 3
      %p78 = por %p76, %p77
      %p80 = scmp.ne.s32.totalorder %s63, %s79
      %p81 = scmp.eq.s32.totalorder %s15, 0
      %p82 = por %p80, %p81
      %s83 = ssub.s32 %s17, %s24
      %p84 = scmp.eq.s32.totalorder %s83, 0
      %s86 = sadd.s32 %s85, 1
      %s87 = scalar_select %p84, %s85, %s86
      %p90 = pneg %p84
      %p91 = scmp.eq.s32.totalorder %s9, 3
      %p92 = por %p90, %p91
      %p93 = scmp.ne.s32.totalorder %s85, %s88
      %p94 = scmp.eq.s32.totalorder %s9, 0
      %p95 = por %p93, %p94
      %p96 = scmp.ne.s32.totalorder %s85, %s88
      %p97 = scmp.eq.s32.totalorder %s14, 3
      %p98 = por %p96, %p97
      %p99 = scmp.ne.s32.totalorder %s88, %s89
      %p100 = scmp.eq.s32.totalorder %s14, 0
      %p101 = por %p99, %p100
      %p102 = scmp.ne.s32.totalorder %s88, %s89
      %p103 = scmp.eq.s32.totalorder %s15, 3
      %p104 = por %p102, %p103
      %p106 = scmp.ne.s32.totalorder %s89, %s105
      %p107 = scmp.eq.s32.totalorder %s15, 0
      %p108 = por %p106, %p107
      %s109 = ssub.s32 %s16, %s28
      %p110 = scmp.eq.s32.totalorder %s109, 0
      %s112 = sadd.s32 %s111, 1
      %s113 = scalar_select %p110, %s111, %s112
      %p116 = pneg %p110
      %p117 = scmp.eq.s32.totalorder %s9, 3
      %p118 = por %p116, %p117
      %p119 = scmp.ne.s32.totalorder %s111, %s114
      %p120 = scmp.eq.s32.totalorder %s9, 0
      %p121 = por %p119, %p120
      %p122 = scmp.ne.s32.totalorder %s111, %s114
      %p123 = scmp.eq.s32.totalorder %s14, 3
      %p124 = por %p122, %p123
      %p125 = scmp.ne.s32.totalorder %s114, %s115
      %p126 = scmp.eq.s32.totalorder %s14, 0
      %p127 = por %p125, %p126
      %p128 = scmp.ne.s32.totalorder %s114, %s115
      %p129 = scmp.eq.s32.totalorder %s15, 3
      %p130 = por %p128, %p129
      %p132 = scmp.ne.s32.totalorder %s115, %s131
      %p133 = scmp.eq.s32.totalorder %s15, 0
      %p134 = por %p132, %p133
      %p135 = scmp.le.s32.totalorder 1, %s9
      %p136 = scmp.lt.s32.totalorder %s9, 5
      %p137 = pnand %p135, %p136
      %p138 = pneg %p137
      // Predicated region
      $region9: #{etm_forward.7} parent=5 // pred_check
        _
      $region10: #{etm_forward.7} parent=5 // pred_check_branch
        %140 = sbr.rel (%p137) target = $region12
      $region11: #{etm_forward.7} parent=5 // pred_region
        %s141 = ssub.s32 %s9, 1
      $region12: #{etm_forward.7} parent=5 // pred_fallthru
        _
      %p142 = scmp.lt.s32.totalorder %s9, 4
      // Predicated region
      $region13: #{etm_forward.7} parent=5 // pred_check
        %p143 = pneg %p142
      $region14: #{etm_forward.7} parent=5 // pred_check_branch
        %145 = sbr.rel (%p143) target = $region16
      $region15: #{etm_forward.7} parent=5 // pred_region
        // Predicated region
        $region17: #{etm_forward.7} parent=15 // pred_check
          %p146 = pneg %p43
        $region18: #{etm_forward.7} parent=15 // pred_check_branch
          %148 = sbr.rel (%p146) target = $region20
        $region19: #{etm_forward.7} parent=15 // pred_region
          %s149 = sand.u32 %s33, 1
          %s150 = sand.u32 %s33, 1
          %s151 = smul.addr %s150, 512
          %s152 = scalar_lea.vmem [#allocation3], %s151
          %s153 = smul.u32 16, %s16
          %s154 = smul.u32 4, %s17
          %s155 = smul.addr %s153, 8
          %s156 = sadd.s32 %s154, %s155
          %s157 = smul.addr %s156, 8
          %s158 = scalar_lea.vmem %s0, %s157
          // Predicated region
          $region21: #{etm_forward.7} parent=19 // pred_check
            _
          $region22: #{etm_forward.7} parent=19 // pred_check_branch
            %160 = sbr.rel (0) target = $region24
          $region23: #{etm_forward.7} parent=19 // pred_region
            // Predicated region
            $region25: #{etm_forward.7} parent=23 // pred_check
              _
            $region26: #{etm_forward.7} parent=23 // pred_check_branch
              %162 = sbr.rel (0) target = $region28
            $region27: #{etm_forward.7} parent=23 // pred_region
              loop: start=0, step=1, limit=1
              $region29: #{etm_forward.7} parent=27 // loop_pre_header
                _
              $region30: #{etm_forward.7} parent=27 // loop_header
                %s164 = sphi 0, %s168
                %p165 = scmp.ge.s32.totalorder %s164, 1
                %s169 = sphi %s158, %s158
                %s170 = sphi %s152, %s152
              $region31: #{etm_forward.7} parent=27 // loop_header_branch
                %167 = sbr.rel (%p165) target = $region35
              $region32: #{etm_forward.7} parent=27 // loop_body
                %v171 = vld [vmem:[%s169] sm:$0xff]
                %172 = vst [vmem:[%s170] sm:$0xff] %v171
                %v173 = vld [vmem:[%s169 + $0x8] sm:$0xff]
                %174 = vst [vmem:[%s170 + $0x8] sm:$0xff] %v173
                %v175 = vld [vmem:[%s169 + $0x10] sm:$0xff]
                %176 = vst [vmem:[%s170 + $0x10] sm:$0xff] %v175
                %v177 = vld [vmem:[%s169 + $0x18] sm:$0xff]
                %178 = vst [vmem:[%s170 + $0x18] sm:$0xff] %v177
                %v179 = vld [vmem:[%s169 + $0x40] sm:$0xff]
                %180 = vst [vmem:[%s170 + $0x20] sm:$0xff] %v179
                %v181 = vld [vmem:[%s169 + $0x48] sm:$0xff]
                %182 = vst [vmem:[%s170 + $0x28] sm:$0xff] %v181
                %v183 = vld [vmem:[%s169 + $0x50] sm:$0xff]
                %184 = vst [vmem:[%s170 + $0x30] sm:$0xff] %v183
                %v185 = vld [vmem:[%s169 + $0x58] sm:$0xff]
                %186 = vst [vmem:[%s170 + $0x38] sm:$0xff] %v185
                %v187 = vld [vmem:[%s169 + $0x80] sm:$0xff]
                %188 = vst [vmem:[%s170 + $0x40] sm:$0xff] %v187
                %v189 = vld [vmem:[%s169 + $0x88] sm:$0xff]
                %190 = vst [vmem:[%s170 + $0x48] sm:$0xff] %v189
                %v191 = vld [vmem:[%s169 + $0x90] sm:$0xff]
                %192 = vst [vmem:[%s170 + $0x50] sm:$0xff] %v191
                %v193 = vld [vmem:[%s169 + $0x98] sm:$0xff]
                %194 = vst [vmem:[%s170 + $0x58] sm:$0xff] %v193
                %v195 = vld [vmem:[%s169 + $0xc0] sm:$0xff]
                %196 = vst [vmem:[%s170 + $0x60] sm:$0xff] %v195
                %v197 = vld [vmem:[%s169 + $0xc8] sm:$0xff]
                %198 = vst [vmem:[%s170 + $0x68] sm:$0xff] %v197
                %v199 = vld [vmem:[%s169 + $0xd0] sm:$0xff]
                %200 = vst [vmem:[%s170 + $0x70] sm:$0xff] %v199
                %v201 = vld [vmem:[%s169 + $0xd8] sm:$0xff]
                %202 = vst [vmem:[%s170 + $0x78] sm:$0xff] %v201
                %v203 = vld [vmem:[%s169 + $0x100] sm:$0xff]
                %204 = vst [vmem:[%s170 + $0x80] sm:$0xff] %v203
                %v205 = vld [vmem:[%s169 + $0x108] sm:$0xff]
                %206 = vst [vmem:[%s170 + $0x88] sm:$0xff] %v205
                %v207 = vld [vmem:[%s169 + $0x110] sm:$0xff]
                %208 = vst [vmem:[%s170 + $0x90] sm:$0xff] %v207
                %v209 = vld [vmem:[%s169 + $0x118] sm:$0xff]
                %210 = vst [vmem:[%s170 + $0x98] sm:$0xff] %v209
                %v211 = vld [vmem:[%s169 + $0x140] sm:$0xff]
                %212 = vst [vmem:[%s170 + $0xa0] sm:$0xff] %v211
                %v213 = vld [vmem:[%s169 + $0x148] sm:$0xff]
                %214 = vst [vmem:[%s170 + $0xa8] sm:$0xff] %v213
                %v215 = vld [vmem:[%s169 + $0x150] sm:$0xff]
                %216 = vst [vmem:[%s170 + $0xb0] sm:$0xff] %v215
                %v217 = vld [vmem:[%s169 + $0x158] sm:$0xff]
                %218 = vst [vmem:[%s170 + $0xb8] sm:$0xff] %v217
                %v219 = vld [vmem:[%s169 + $0x180] sm:$0xff]
                %220 = vst [vmem:[%s170 + $0xc0] sm:$0xff] %v219
                %v221 = vld [vmem:[%s169 + $0x188] sm:$0xff]
                %222 = vst [vmem:[%s170 + $0xc8] sm:$0xff] %v221
                %v223 = vld [vmem:[%s169 + $0x190] sm:$0xff]
                %224 = vst [vmem:[%s170 + $0xd0] sm:$0xff] %v223
                %v225 = vld [vmem:[%s169 + $0x198] sm:$0xff]
                %226 = vst [vmem:[%s170 + $0xd8] sm:$0xff] %v225
                %v227 = vld [vmem:[%s169 + $0x1c0] sm:$0xff]
                %228 = vst [vmem:[%s170 + $0xe0] sm:$0xff] %v227
                %v229 = vld [vmem:[%s169 + $0x1c8] sm:$0xff]
                %230 = vst [vmem:[%s170 + $0xe8] sm:$0xff] %v229
                %v231 = vld [vmem:[%s169 + $0x1d0] sm:$0xff]
                %232 = vst [vmem:[%s170 + $0xf0] sm:$0xff] %v231
                %v233 = vld [vmem:[%s169 + $0x1d8] sm:$0xff]
                %234 = vst [vmem:[%s170 + $0xf8] sm:$0xff] %v233
                %v235 = vld [vmem:[%s169 + $0x200] sm:$0xff]
                %236 = vst [vmem:[%s170 + $0x100] sm:$0xff] %v235
                %v237 = vld [vmem:[%s169 + $0x208] sm:$0xff]
                %238 = vst [vmem:[%s170 + $0x108] sm:$0xff] %v237
                %v239 = vld [vmem:[%s169 + $0x210] sm:$0xff]
                %240 = vst [vmem:[%s170 + $0x110] sm:$0xff] %v239
                %v241 = vld [vmem:[%s169 + $0x218] sm:$0xff]
                %242 = vst [vmem:[%s170 + $0x118] sm:$0xff] %v241
                %v243 = vld [vmem:[%s169 + $0x240] sm:$0xff]
                %244 = vst [vmem:[%s170 + $0x120] sm:$0xff] %v243
                %v245 = vld [vmem:[%s169 + $0x248] sm:$0xff]
                %246 = vst [vmem:[%s170 + $0x128] sm:$0xff] %v245
                %v247 = vld [vmem:[%s169 + $0x250] sm:$0xff]
                %248 = vst [vmem:[%s170 + $0x130] sm:$0xff] %v247
                %v249 = vld [vmem:[%s169 + $0x258] sm:$0xff]
                %250 = vst [vmem:[%s170 + $0x138] sm:$0xff] %v249
                %v251 = vld [vmem:[%s169 + $0x280] sm:$0xff]
                %252 = vst [vmem:[%s170 + $0x140] sm:$0xff] %v251
                %v253 = vld [vmem:[%s169 + $0x288] sm:$0xff]
                %254 = vst [vmem:[%s170 + $0x148] sm:$0xff] %v253
                %v255 = vld [vmem:[%s169 + $0x290] sm:$0xff]
                %256 = vst [vmem:[%s170 + $0x150] sm:$0xff] %v255
                %v257 = vld [vmem:[%s169 + $0x298] sm:$0xff]
                %258 = vst [vmem:[%s170 + $0x158] sm:$0xff] %v257
                %v259 = vld [vmem:[%s169 + $0x2c0] sm:$0xff]
                %260 = vst [vmem:[%s170 + $0x160] sm:$0xff] %v259
                %v261 = vld [vmem:[%s169 + $0x2c8] sm:$0xff]
                %262 = vst [vmem:[%s170 + $0x168] sm:$0xff] %v261
                %v263 = vld [vmem:[%s169 + $0x2d0] sm:$0xff]
                %264 = vst [vmem:[%s170 + $0x170] sm:$0xff] %v263
                %v265 = vld [vmem:[%s169 + $0x2d8] sm:$0xff]
                %266 = vst [vmem:[%s170 + $0x178] sm:$0xff] %v265
                %v267 = vld [vmem:[%s169 + $0x300] sm:$0xff]
                %268 = vst [vmem:[%s170 + $0x180] sm:$0xff] %v267
                %v269 = vld [vmem:[%s169 + $0x308] sm:$0xff]
                %270 = vst [vmem:[%s170 + $0x188] sm:$0xff] %v269
                %v271 = vld [vmem:[%s169 + $0x310] sm:$0xff]
                %272 = vst [vmem:[%s170 + $0x190] sm:$0xff] %v271
                %v273 = vld [vmem:[%s169 + $0x318] sm:$0xff]
                %274 = vst [vmem:[%s170 + $0x198] sm:$0xff] %v273
                %v275 = vld [vmem:[%s169 + $0x340] sm:$0xff]
                %276 = vst [vmem:[%s170 + $0x1a0] sm:$0xff] %v275
                %v277 = vld [vmem:[%s169 + $0x348] sm:$0xff]
                %278 = vst [vmem:[%s170 + $0x1a8] sm:$0xff] %v277
                %v279 = vld [vmem:[%s169 + $0x350] sm:$0xff]
                %280 = vst [vmem:[%s170 + $0x1b0] sm:$0xff] %v279
                %v281 = vld [vmem:[%s169 + $0x358] sm:$0xff]
                %282 = vst [vmem:[%s170 + $0x1b8] sm:$0xff] %v281
                %v283 = vld [vmem:[%s169 + $0x380] sm:$0xff]
                %284 = vst [vmem:[%s170 + $0x1c0] sm:$0xff] %v283
                %v285 = vld [vmem:[%s169 + $0x388] sm:$0xff]
                %286 = vst [vmem:[%s170 + $0x1c8] sm:$0xff] %v285
                %v287 = vld [vmem:[%s169 + $0x390] sm:$0xff]
                %288 = vst [vmem:[%s170 + $0x1d0] sm:$0xff] %v287
                %v289 = vld [vmem:[%s169 + $0x398] sm:$0xff]
                %290 = vst [vmem:[%s170 + $0x1d8] sm:$0xff] %v289
                %v291 = vld [vmem:[%s169 + $0x3c0] sm:$0xff]
                %292 = vst [vmem:[%s170 + $0x1e0] sm:$0xff] %v291
                %v293 = vld [vmem:[%s169 + $0x3c8] sm:$0xff]
                %294 = vst [vmem:[%s170 + $0x1e8] sm:$0xff] %v293
                %v295 = vld [vmem:[%s169 + $0x3d0] sm:$0xff]
                %296 = vst [vmem:[%s170 + $0x1f0] sm:$0xff] %v295
                %v297 = vld [vmem:[%s169 + $0x3d8] sm:$0xff]
                %298 = vst [vmem:[%s170 + $0x1f8] sm:$0xff] %v297
              $region33: #{etm_forward.7} parent=27 // loop_footer
                %s168 = sadd.s32 1, %s164
              $region34: #{etm_forward.7} parent=27 // loop_footer_branch
                %163 = sbr.rel target = $region30
              $region35: #{etm_forward.7} parent=27 // loop_exit
                _
            $region28: #{etm_forward.7} parent=23 // pred_fallthru
              _
            // Predicated region
            $region36: #{etm_forward.7} parent=23 // pred_check
              _
            $region37: #{etm_forward.7} parent=23 // pred_check_branch
              %300 = sbr.rel target = $region39
            $region38: #{etm_forward.7} parent=23 // pred_region
              _
            $region39: #{etm_forward.7} parent=23 // pred_fallthru
              _
          $region24: #{etm_forward.7} parent=19 // pred_fallthru
            _
          %301 = vnop
        $region20: #{etm_forward.7} parent=15 // pred_fallthru
          _
        // Predicated region
        $region40: #{etm_forward.7} parent=15 // pred_check
          %p302 = pneg %p69
        $region41: #{etm_forward.7} parent=15 // pred_check_branch
          %304 = sbr.rel (%p302) target = $region43
        $region42: #{etm_forward.7} parent=15 // pred_region
          %s305 = smul.u32 16, %s16
          %p306 = scmp.lt.s32.totalorder %s305, 31
          %s307 = scalar_select %p306, %s305, 31
          %s308 = smul.addr %s307, 8
          %s309 = scalar_lea.vmem %s1, %s308
          %s310 = smul.u32 16, %s16
        $region43: #{etm_forward.7} parent=15 // pred_fallthru
          _
        // Predicated region
        $region44: #{etm_forward.7} parent=15 // pred_check
          %p311 = pneg %p95
        $region45: #{etm_forward.7} parent=15 // pred_check_branch
          %313 = sbr.rel (%p311) target = $region47
        $region46: #{etm_forward.7} parent=15 // pred_region
          %s314 = sand.u32 %s85, 1
          %s315 = sand.u32 %s85, 1
          %s316 = smul.addr %s315, 64
          %s317 = scalar_lea.vmem [#allocation4], %s316
          %s318 = smul.u32 4, %s17
          %s319 = smul.addr %s318, 4
          %s320 = scalar_lea.vmem %s2, %s319
          // Predicated region
          $region48: #{etm_forward.7} parent=46 // pred_check
            _
          $region49: #{etm_forward.7} parent=46 // pred_check_branch
            %322 = sbr.rel (0) target = $region51
          $region50: #{etm_forward.7} parent=46 // pred_region
            // Predicated region
            $region52: #{etm_forward.7} parent=50 // pred_check
              _
            $region53: #{etm_forward.7} parent=50 // pred_check_branch
              %324 = sbr.rel (0) target = $region55
            $region54: #{etm_forward.7} parent=50 // pred_region
              loop: start=0, step=1, limit=1
              $region56: #{etm_forward.7} parent=54 // loop_pre_header
                _
              $region57: #{etm_forward.7} parent=54 // loop_header
                %s326 = sphi 0, %s330
                %p327 = scmp.ge.s32.totalorder %s326, 1
                %s331 = sphi %s320, %s320
                %s332 = sphi %s317, %s317
              $region58: #{etm_forward.7} parent=54 // loop_header_branch
                %329 = sbr.rel (%p327) target = $region62
              $region59: #{etm_forward.7} parent=54 // loop_body
                %v333 = vld [vmem:[%s331] sm:$0xff]
                %334 = vst [vmem:[%s332] sm:$0xff] %v333
                %v335 = vld [vmem:[%s331 + $0x8] sm:$0xff]
                %336 = vst [vmem:[%s332 + $0x8] sm:$0xff] %v335
                %v337 = vld [vmem:[%s331 + $0x20] sm:$0xff]
                %338 = vst [vmem:[%s332 + $0x10] sm:$0xff] %v337
                %v339 = vld [vmem:[%s331 + $0x28] sm:$0xff]
                %340 = vst [vmem:[%s332 + $0x18] sm:$0xff] %v339
                %v341 = vld [vmem:[%s331 + $0x40] sm:$0xff]
                %342 = vst [vmem:[%s332 + $0x20] sm:$0xff] %v341
                %v343 = vld [vmem:[%s331 + $0x48] sm:$0xff]
                %344 = vst [vmem:[%s332 + $0x28] sm:$0xff] %v343
                %v345 = vld [vmem:[%s331 + $0x60] sm:$0xff]
                %346 = vst [vmem:[%s332 + $0x30] sm:$0xff] %v345
                %v347 = vld [vmem:[%s331 + $0x68] sm:$0xff]
                %348 = vst [vmem:[%s332 + $0x38] sm:$0xff] %v347
              $region60: #{etm_forward.7} parent=54 // loop_footer
                %s330 = sadd.s32 1, %s326
              $region61: #{etm_forward.7} parent=54 // loop_footer_branch
                %325 = sbr.rel target = $region57
              $region62: #{etm_forward.7} parent=54 // loop_exit
                _
            $region55: #{etm_forward.7} parent=50 // pred_fallthru
              _
            // Predicated region
            $region63: #{etm_forward.7} parent=50 // pred_check
              _
            $region64: #{etm_forward.7} parent=50 // pred_check_branch
              %350 = sbr.rel target = $region66
            $region65: #{etm_forward.7} parent=50 // pred_region
              _
            $region66: #{etm_forward.7} parent=50 // pred_fallthru
              _
          $region51: #{etm_forward.7} parent=46 // pred_fallthru
            _
          %351 = vnop
        $region47: #{etm_forward.7} parent=15 // pred_fallthru
          _
      $region16: #{etm_forward.7} parent=5 // pred_fallthru
        _
      %p352 = scmp.le.s32.totalorder 1, %s9
      %p353 = scmp.lt.s32.totalorder %s9, 5
      %p354 = pnand %p352, %p353
      %p355 = pneg %p354
      // Predicated region
      $region67: #{etm_forward.7} parent=5 // pred_check
        _
      $region68: #{etm_forward.7} parent=5 // pred_check_branch
        %357 = sbr.rel (%p354) target = $region70
      $region69: #{etm_forward.7} parent=5 // pred_region
        %s358 = ssub.s32 %s9, 1
        %s359 = sand.u32 %s36, 1
        %s360 = sand.u32 %s36, 1
        %s361 = smul.addr %s360, 512
        %s362 = scalar_lea.vmem [#allocation3], %s361
        // Predicated region
        $region71: #{etm_forward.7} parent=69 // pred_check
          %p363 = pneg %p49
        $region72: #{etm_forward.7} parent=69 // pred_check_branch
          %365 = sbr.rel (%p363) target = $region74
        $region73: #{etm_forward.7} parent=69 // pred_region
          _
        $region74: #{etm_forward.7} parent=69 // pred_fallthru
          _
        %s366 = sand.u32 %s88, 1
        %s367 = sand.u32 %s88, 1
        %s368 = smul.addr %s367, 64
        %s369 = scalar_lea.vmem [#allocation4], %s368
        // Predicated region
        $region75: #{etm_forward.7} parent=69 // pred_check
          %p370 = pneg %p101
        $region76: #{etm_forward.7} parent=69 // pred_check_branch
          %372 = sbr.rel (%p370) target = $region78
        $region77: #{etm_forward.7} parent=69 // pred_region
          _
        $region78: #{etm_forward.7} parent=69 // pred_fallthru
          _
        %s373 = sand.u32 %s36, 1
        %s374 = sand.u32 %s36, 1
        %s375 = smul.addr %s374, 512
        %s376 = scalar_lea.vmem [#allocation3], %s375
        %p377 = pneg %p49
        %p378 = pneg %p46
        %s379 = smul.u32 16, %s18
        %p380 = scmp.lt.s32.totalorder %s379, 31
        %s381 = scalar_select %p380, %s379, 31
        %s382 = smul.addr %s381, 8
        %s383 = scalar_lea.vmem %s1, %s382
        %p384 = pneg %p75
        %p385 = pneg %p72
        %s386 = sand.u32 %s88, 1
        %s387 = sand.u32 %s88, 1
        %s388 = smul.addr %s387, 64
        %s389 = scalar_lea.vmem [#allocation4], %s388
        %p390 = pneg %p101
        %p391 = pneg %p98
        %p392 = pneg %p127
        %p393 = pneg %p124
        %s394 = smul.u32 16, %s18
        %p395 = scmp.lt.s32.totalorder %s394, 31
        %s396 = scalar_select %p395, %s394, 31
        %s397 = smul.addr %s396, 8
        %s398 = scalar_lea.vmem %s3, %s397
        %s399 = smul.u32 16, %s18
        %s400 = smul.u32 4, %s19
        %s401 = smul.u32 16, %s18
        %p402 = scmp.lt.s32.totalorder %s401, 31
        %s403 = scalar_select %p402, %s401, 31
        %s404 = smul.addr %s403, 8
        %s405 = scalar_lea.vmem %s1, %s404
        %s406 = smul.u32 16, %s18
        %s407 = smul.u32 4, %s19
        %s408 = smul.u32 16, %s18
        %p409 = scmp.lt.s32.totalorder %s408, 31
        %s410 = scalar_select %p409, %s408, 31
        %s411 = smul.addr %s410, 8
        %s412 = scalar_lea.vmem %s3, %s411
        %s413 = smul.u32 16, %s18
        %p415 = scmp.eq.s32.totalorder %s19, 0
        // Predicated region
        $region79: #{etm_forward.7} parent=69 // pred_check
          %p416 = pneg %p415
        $region80: #{etm_forward.7} parent=69 // pred_check_branch
          %418 = sbr.rel (%p416) target = $region82
        $region81: #{etm_forward.7} parent=69 // pred_region
          %vm419 = vcmask 7168
          %420 = vst.msk [vmem:[#allocation2] sm:$0xff] %vm419, 0.0
          %421 = vst.msk [vmem:[#allocation2 + $0x8] sm:$0xff] %vm419, 0.0
          %422 = vst.msk [vmem:[#allocation2 + $0x10] sm:$0xff] %vm419, 0.0
          %423 = vst.msk [vmem:[#allocation2 + $0x18] sm:$0xff] %vm419, 0.0
          %424 = vst.msk [vmem:[#allocation2 + $0x20] sm:$0xff] %vm419, 0.0
          %425 = vst.msk [vmem:[#allocation2 + $0x28] sm:$0xff] %vm419, 0.0
          %426 = vst.msk [vmem:[#allocation2 + $0x30] sm:$0xff] %vm419, 0.0
          %427 = vst.msk [vmem:[#allocation2 + $0x38] sm:$0xff] %vm419, 0.0
          %428 = vst.msk [vmem:[#allocation2 + $0x40] sm:$0xff] %vm419, 0.0
          %429 = vst.msk [vmem:[#allocation2 + $0x48] sm:$0xff] %vm419, 0.0
          %430 = vst.msk [vmem:[#allocation2 + $0x50] sm:$0xff] %vm419, 0.0
          %431 = vst.msk [vmem:[#allocation2 + $0x58] sm:$0xff] %vm419, 0.0
          %432 = vst.msk [vmem:[#allocation2 + $0x60] sm:$0xff] %vm419, 0.0
          %433 = vst.msk [vmem:[#allocation2 + $0x68] sm:$0xff] %vm419, 0.0
          %434 = vst.msk [vmem:[#allocation2 + $0x70] sm:$0xff] %vm419, 0.0
          %435 = vst.msk [vmem:[#allocation2 + $0x78] sm:$0xff] %vm419, 0.0
        $region82: #{etm_forward.7} parent=69 // pred_fallthru
          _
        %v436 = vld [vmem:[%s405] sm:$0xff]
        %v437 = vld [vmem:[%s405 + $0x8] sm:$0xff]
        %v438 = vld [vmem:[%s405 + $0x10] sm:$0xff]
        %v439 = vld [vmem:[%s405 + $0x18] sm:$0xff]
        %v440 = vld [vmem:[%s405 + $0x20] sm:$0xff]
        %v441 = vld [vmem:[%s405 + $0x28] sm:$0xff]
        %v442 = vld [vmem:[%s405 + $0x30] sm:$0xff]
        %v443 = vld [vmem:[%s405 + $0x38] sm:$0xff]
        %v444 = vld [vmem:[%s405 + $0x40] sm:$0xff]
        %v445 = vld [vmem:[%s405 + $0x48] sm:$0xff]
        %v446 = vld [vmem:[%s405 + $0x50] sm:$0xff]
        %v447 = vld [vmem:[%s405 + $0x58] sm:$0xff]
        %v448 = vld [vmem:[%s405 + $0x60] sm:$0xff]
        %v449 = vld [vmem:[%s405 + $0x68] sm:$0xff]
        %v450 = vld [vmem:[%s405 + $0x70] sm:$0xff]
        %v451 = vld [vmem:[%s405 + $0x78] sm:$0xff]
        %v452 = vpack.c.bf16 %v437, %v436
        %v453 = vpack.c.bf16 %v439, %v438
        %v454 = vpack.c.bf16 %v441, %v440
        %v455 = vpack.c.bf16 %v443, %v442
        %v456 = vpack.c.bf16 %v445, %v444
        %v457 = vpack.c.bf16 %v447, %v446
        %v458 = vpack.c.bf16 %v449, %v448
        %v459 = vpack.c.bf16 %v451, %v450
        %v460 = vld [vmem:[%s369] sm:$0xff]
        %v461 = vld [vmem:[%s369 + $0x8] sm:$0xff]
        %v462 = vld [vmem:[%s369 + $0x10] sm:$0xff]
        %v463 = vld [vmem:[%s369 + $0x18] sm:$0xff]
        %v464 = vld [vmem:[%s369 + $0x20] sm:$0xff]
        %v465 = vld [vmem:[%s369 + $0x28] sm:$0xff]
        %v466 = vld [vmem:[%s369 + $0x30] sm:$0xff]
        %v467 = vld [vmem:[%s369 + $0x38] sm:$0xff]
        %v476 = vunpack.c.l.b16 %v460
        %v477 = vunpack.c.h.b16 %v460
        %v478 = vunpack.c.l.b16 %v461
        %v479 = vunpack.c.h.b16 %v461
        %v480 = vunpack.c.l.b16 %v462
        %v481 = vunpack.c.h.b16 %v462
        %v482 = vunpack.c.l.b16 %v463
        %v483 = vunpack.c.h.b16 %v463
        %v484 = vunpack.c.l.b16 %v464
        %v485 = vunpack.c.h.b16 %v464
        %v486 = vunpack.c.l.b16 %v465
        %v487 = vunpack.c.h.b16 %v465
        %v488 = vunpack.c.l.b16 %v466
        %v489 = vunpack.c.h.b16 %v466
        %v490 = vunpack.c.l.b16 %v467
        %v491 = vunpack.c.h.b16 %v467
        %v492 = vpack.c.b16 %v480, %v476
        %v493 = vpack.c.b16 %v481, %v477
        %v494 = vpack.c.b16 %v482, %v478
        %v495 = vpack.c.b16 %v483, %v479
        %v496 = vpack.c.b16 %v488, %v484
        %v497 = vpack.c.b16 %v489, %v485
        %v498 = vpack.c.b16 %v490, %v486
        %v499 = vpack.c.b16 %v491, %v487
        %vm508 = vcmask 261120
        %v510 = vsel %vm508, %v452, 0
        %v513 = vsel %vm508, %v453, 0
        %v516 = vsel %vm508, %v454, 0
        %v519 = vsel %vm508, %v455, 0
        %v522 = vsel %vm508, %v456, 0
        %v525 = vsel %vm508, %v457, 0
        %v528 = vsel %vm508, %v458, 0
        %v531 = vsel %vm508, %v459, 0
        %533 = vmatprep.subr.bf16.mxu0 %v493
        %534 = vmatpush1.bf16.msra.mxu0 %v492
        %535 = vmatprep.subr.bf16.mxu0 %v497
        %536 = vmatpush1.bf16.msra.mxu0 %v496
        %537 = vmatprep.subr.bf16.mxu0 0
        %538 = vmatpush1.bf16.msra.mxu0 0
        %539 = vmatprep.subr.bf16.mxu0 0
        %540 = vmatpush1.bf16.msra.mxu0 0
        %541 = vmatprep.subr.bf16.mxu0 0
        %542 = vmatpush1.bf16.msra.mxu0 0
        %543 = vmatprep.subr.bf16.mxu0 0
        %544 = vmatpush1.bf16.msra.mxu0 0
        %545 = vmatprep.subr.bf16.mxu0 0
        %546 = vmatpush1.bf16.msra.mxu0 0
        %547 = vmatprep.subr.bf16.mxu0 0
        %548 = vmatpush1.bf16.msra.mxu0 0
        %549 = vmatprep.subr.bf16.mxu0 0
        %550 = vmatpush1.bf16.msra.mxu0 0
        %551 = vmatprep.subr.bf16.mxu0 0
        %552 = vmatpush1.bf16.msra.mxu0 0
        %553 = vmatprep.subr.bf16.mxu0 0
        %554 = vmatpush1.bf16.msra.mxu0 0
        %555 = vmatprep.subr.bf16.mxu0 0
        %556 = vmatpush1.bf16.msra.mxu0 0
        %557 = vmatprep.subr.bf16.mxu0 0
        %558 = vmatpush1.bf16.msra.mxu0 0
        %559 = vmatprep.subr.bf16.mxu0 0
        %560 = vmatpush1.bf16.msra.mxu0 0
        %561 = vmatprep.subr.bf16.mxu0 0
        %562 = vmatpush1.bf16.msra.mxu0 0
        %563 = vmatprep.subr.bf16.mxu0 0
        %564 = vmatpush1.bf16.msra.mxu0 0
        %565 = vmatprep.mubr.bf16.mxu0 0
        %566 = vmatmul.mubr.bf16.gmra.mrb[0].mxu0 %v510
        %v567 = vpop.f32.mrb[0].mxu0
        %v568 = vadd.f32 1e-06, %v567
        %v569 = vpop.f32.mrb[0].mxu0
        %v570 = vadd.f32 1e-06, %v569
        %v571 = vpop.f32.mrb[0].mxu0
        %v572 = vadd.f32 1e-06, %v571
        %v573 = vpop.f32.mrb[0].mxu0
        %v574 = vadd.f32 1e-06, %v573
        %575 = vmatprep.mubr.bf16.mxu0 0
        %576 = vmatmul.mubr.bf16.gmra.mrb[0].mxu0 %v513
        %v577 = vpop.f32.mrb[0].mxu0
        %v578 = vadd.f32 1e-06, %v577
        %v579 = vpop.f32.mrb[0].mxu0
        %v580 = vadd.f32 1e-06, %v579
        %v581 = vpop.f32.mrb[0].mxu0
        %v582 = vadd.f32 1e-06, %v581
        %v583 = vpop.f32.mrb[0].mxu0
        %v584 = vadd.f32 1e-06, %v583
        %585 = vmatprep.mubr.bf16.mxu0 0
        %586 = vmatmul.mubr.bf16.gmra.mrb[0].mxu0 %v516
        %v587 = vpop.f32.mrb[0].mxu0
        %v588 = vadd.f32 1e-06, %v587
        %v589 = vpop.f32.mrb[0].mxu0
        %v590 = vadd.f32 1e-06, %v589
        %v591 = vpop.f32.mrb[0].mxu0
        %v592 = vadd.f32 1e-06, %v591
        %v593 = vpop.f32.mrb[0].mxu0
        %v594 = vadd.f32 1e-06, %v593
        %595 = vmatprep.mubr.bf16.mxu0 0
        %596 = vmatmul.mubr.bf16.gmra.mrb[0].mxu0 %v519
        %v597 = vpop.f32.mrb[0].mxu0
        %v598 = vadd.f32 1e-06, %v597
        %v599 = vpop.f32.mrb[0].mxu0
        %v600 = vadd.f32 1e-06, %v599
        %v601 = vpop.f32.mrb[0].mxu0
        %v602 = vadd.f32 1e-06, %v601
        %v603 = vpop.f32.mrb[0].mxu0
        %v604 = vadd.f32 1e-06, %v603
        %605 = vmatprep.mubr.bf16.mxu0 0
        %606 = vmatmul.mubr.bf16.gmra.mrb[0].mxu0 %v522
        %v607 = vpop.f32.mrb[0].mxu0
        %v608 = vadd.f32 1e-06, %v607
        %v609 = vpop.f32.mrb[0].mxu0
        %v610 = vadd.f32 1e-06, %v609
        %v611 = vpop.f32.mrb[0].mxu0
        %v612 = vadd.f32 1e-06, %v611
        %v613 = vpop.f32.mrb[0].mxu0
        %v614 = vadd.f32 1e-06, %v613
        %615 = vmatprep.mubr.bf16.mxu0 0
        %616 = vmatmul.mubr.bf16.gmra.mrb[0].mxu0 %v525
        %v617 = vpop.f32.mrb[0].mxu0
        %v618 = vadd.f32 1e-06, %v617
        %v619 = vpop.f32.mrb[0].mxu0
        %v620 = vadd.f32 1e-06, %v619
        %v621 = vpop.f32.mrb[0].mxu0
        %v622 = vadd.f32 1e-06, %v621
        %v623 = vpop.f32.mrb[0].mxu0
        %v624 = vadd.f32 1e-06, %v623
        %625 = vmatprep.mubr.bf16.mxu0 0
        %626 = vmatmul.mubr.bf16.gmra.mrb[0].mxu0 %v528
        %v627 = vpop.f32.mrb[0].mxu0
        %v628 = vadd.f32 1e-06, %v627
        %v629 = vpop.f32.mrb[0].mxu0
        %v630 = vadd.f32 1e-06, %v629
        %v631 = vpop.f32.mrb[0].mxu0
        %v632 = vadd.f32 1e-06, %v631
        %v633 = vpop.f32.mrb[0].mxu0
        %v634 = vadd.f32 1e-06, %v633
        %635 = vmatprep.mubr.bf16.mxu0 0
        %636 = vmatmul.mubr.bf16.gmra.mrb[0].mxu0 %v531
        %v637 = vpop.f32.mrb[0].mxu0
        %v638 = vadd.f32 1e-06, %v637
        %v639 = vpop.f32.mrb[0].mxu0
        %v640 = vadd.f32 1e-06, %v639
        %v641 = vpop.f32.mrb[0].mxu0
        %v642 = vadd.f32 1e-06, %v641
        %v643 = vpop.f32.mrb[0].mxu0
        %v644 = vadd.f32 1e-06, %v643
        %645 = vdwg.mxu0
        %646 = vmatprep.subr.bf16.mxu0 %v495
        %647 = vmatpush1.bf16.msra.mxu0 %v494
        %648 = vmatprep.subr.bf16.mxu0 %v499
        %649 = vmatpush1.bf16.msra.mxu0 %v498
        %650 = vmatprep.subr.bf16.mxu0 0
        %651 = vmatpush1.bf16.msra.mxu0 0
        %652 = vmatprep.subr.bf16.mxu0 0
        %653 = vmatpush1.bf16.msra.mxu0 0
        %654 = vmatprep.subr.bf16.mxu0 0
        %655 = vmatpush1.bf16.msra.mxu0 0
        %656 = vmatprep.subr.bf16.mxu0 0
        %657 = vmatpush1.bf16.msra.mxu0 0
        %658 = vmatprep.subr.bf16.mxu0 0
        %659 = vmatpush1.bf16.msra.mxu0 0
        %660 = vmatprep.subr.bf16.mxu0 0
        %661 = vmatpush1.bf16.msra.mxu0 0
        %662 = vmatprep.subr.bf16.mxu0 0
        %663 = vmatpush1.bf16.msra.mxu0 0
        %664 = vmatprep.subr.bf16.mxu0 0
        %665 = vmatpush1.bf16.msra.mxu0 0
        %666 = vmatprep.subr.bf16.mxu0 0
        %667 = vmatpush1.bf16.msra.mxu0 0
        %668 = vmatprep.subr.bf16.mxu0 0
        %669 = vmatpush1.bf16.msra.mxu0 0
        %670 = vmatprep.subr.bf16.mxu0 0
        %671 = vmatpush1.bf16.msra.mxu0 0
        %672 = vmatprep.subr.bf16.mxu0 0
        %673 = vmatpush1.bf16.msra.mxu0 0
        %674 = vmatprep.subr.bf16.mxu0 0
        %675 = vmatpush1.bf16.msra.mxu0 0
        %676 = vmatprep.subr.bf16.mxu0 0
        %677 = vmatpush1.bf16.msra.mxu0 0
        %678 = vmatprep.mubr.bf16.mxu0 0
        %679 = vmatmul.mubr.bf16.gmra.mrb[0].mxu0 %v510
        %v680 = vpop.f32.mrb[0].mxu0
        %v681 = vadd.f32 1e-06, %v680
        %v682 = vpop.f32.mrb[0].mxu0
        %v683 = vadd.f32 1e-06, %v682
        %v684 = vpop.f32.mrb[0].mxu0
        %v685 = vadd.f32 1e-06, %v684
        %v686 = vpop.f32.mrb[0].mxu0
        %v687 = vadd.f32 1e-06, %v686
        %688 = vmatprep.mubr.bf16.mxu0 0
        %689 = vmatmul.mubr.bf16.gmra.mrb[0].mxu0 %v513
        %v690 = vpop.f32.mrb[0].mxu0
        %v691 = vadd.f32 1e-06, %v690
        %v692 = vpop.f32.mrb[0].mxu0
        %v693 = vadd.f32 1e-06, %v692
        %v694 = vpop.f32.mrb[0].mxu0
        %v695 = vadd.f32 1e-06, %v694
        %v696 = vpop.f32.mrb[0].mxu0
        %v697 = vadd.f32 1e-06, %v696
        %698 = vmatprep.mubr.bf16.mxu0 0
        %699 = vmatmul.mubr.bf16.gmra.mrb[0].mxu0 %v516
        %v700 = vpop.f32.mrb[0].mxu0
        %v701 = vadd.f32 1e-06, %v700
        %v702 = vpop.f32.mrb[0].mxu0
        %v703 = vadd.f32 1e-06, %v702
        %v704 = vpop.f32.mrb[0].mxu0
        %v705 = vadd.f32 1e-06, %v704
        %v706 = vpop.f32.mrb[0].mxu0
        %v707 = vadd.f32 1e-06, %v706
        %708 = vmatprep.mubr.bf16.mxu0 0
        %709 = vmatmul.mubr.bf16.gmra.mrb[0].mxu0 %v519
        %v710 = vpop.f32.mrb[0].mxu0
        %v711 = vadd.f32 1e-06, %v710
        %v712 = vpop.f32.mrb[0].mxu0
        %v713 = vadd.f32 1e-06, %v712
        %v714 = vpop.f32.mrb[0].mxu0
        %v715 = vadd.f32 1e-06, %v714
        %v716 = vpop.f32.mrb[0].mxu0
        %v717 = vadd.f32 1e-06, %v716
        %718 = vmatprep.mubr.bf16.mxu0 0
        %719 = vmatmul.mubr.bf16.gmra.mrb[0].mxu0 %v522
        %v720 = vpop.f32.mrb[0].mxu0
        %v721 = vadd.f32 1e-06, %v720
        %v722 = vpop.f32.mrb[0].mxu0
        %v723 = vadd.f32 1e-06, %v722
        %v724 = vpop.f32.mrb[0].mxu0
        %v725 = vadd.f32 1e-06, %v724
        %v726 = vpop.f32.mrb[0].mxu0
        %v727 = vadd.f32 1e-06, %v726
        %728 = vmatprep.mubr.bf16.mxu0 0
        %729 = vmatmul.mubr.bf16.gmra.mrb[0].mxu0 %v525
        %v730 = vpop.f32.mrb[0].mxu0
        %v731 = vadd.f32 1e-06, %v730
        %v732 = vpop.f32.mrb[0].mxu0
        %v733 = vadd.f32 1e-06, %v732
        %v734 = vpop.f32.mrb[0].mxu0
        %v735 = vadd.f32 1e-06, %v734
        %v736 = vpop.f32.mrb[0].mxu0
        %v737 = vadd.f32 1e-06, %v736
        %738 = vmatprep.mubr.bf16.mxu0 0
        %739 = vmatmul.mubr.bf16.gmra.mrb[0].mxu0 %v528
        %v740 = vpop.f32.mrb[0].mxu0
        %v741 = vadd.f32 1e-06, %v740
        %v742 = vpop.f32.mrb[0].mxu0
        %v743 = vadd.f32 1e-06, %v742
        %v744 = vpop.f32.mrb[0].mxu0
        %v745 = vadd.f32 1e-06, %v744
        %v746 = vpop.f32.mrb[0].mxu0
        %v747 = vadd.f32 1e-06, %v746
        %748 = vmatprep.mubr.bf16.mxu0 0
        %749 = vmatmul.mubr.bf16.gmra.mrb[0].mxu0 %v531
        %v750 = vpop.f32.mrb[0].mxu0
        %v751 = vadd.f32 1e-06, %v750
        %v752 = vpop.f32.mrb[0].mxu0
        %v753 = vadd.f32 1e-06, %v752
        %v754 = vpop.f32.mrb[0].mxu0
        %v755 = vadd.f32 1e-06, %v754
        %v756 = vpop.f32.mrb[0].mxu0
        %v757 = vadd.f32 1e-06, %v756
        %758 = vdwg.mxu0
        %v759 = vlog2.pop %v568
        %v760 = vmul.f32 %v759, 0.6931472
        %v761 = vlog2.pop %v570
        %v762 = vmul.f32 %v761, 0.6931472
        %v763 = vlog2.pop %v681
        %v764 = vmul.f32 %v763, 0.6931472
        %v765 = vlog2.pop %v683
        %v766 = vmul.f32 %v765, 0.6931472
        %v767 = vlog2.pop %v572
        %v768 = vmul.f32 %v767, 0.6931472
        %v769 = vlog2.pop %v574
        %v770 = vmul.f32 %v769, 0.6931472
        %v771 = vlog2.pop %v685
        %v772 = vmul.f32 %v771, 0.6931472
        %v773 = vlog2.pop %v687
        %v774 = vmul.f32 %v773, 0.6931472
        %v775 = vlog2.pop %v578
        %v776 = vmul.f32 %v775, 0.6931472
        %v777 = vlog2.pop %v580
        %v778 = vmul.f32 %v777, 0.6931472
        %v779 = vlog2.pop %v691
        %v780 = vmul.f32 %v779, 0.6931472
        %v781 = vlog2.pop %v693
        %v782 = vmul.f32 %v781, 0.6931472
        %v783 = vlog2.pop %v582
        %v784 = vmul.f32 %v783, 0.6931472
        %v785 = vlog2.pop %v584
        %v786 = vmul.f32 %v785, 0.6931472
        %v787 = vlog2.pop %v695
        %v788 = vmul.f32 %v787, 0.6931472
        %v789 = vlog2.pop %v697
        %v790 = vmul.f32 %v789, 0.6931472
        %v791 = vlog2.pop %v588
        %v792 = vmul.f32 %v791, 0.6931472
        %v793 = vlog2.pop %v590
        %v794 = vmul.f32 %v793, 0.6931472
        %v795 = vlog2.pop %v701
        %v796 = vmul.f32 %v795, 0.6931472
        %v797 = vlog2.pop %v703
        %v798 = vmul.f32 %v797, 0.6931472
        %v799 = vlog2.pop %v592
        %v800 = vmul.f32 %v799, 0.6931472
        %v801 = vlog2.pop %v594
        %v802 = vmul.f32 %v801, 0.6931472
        %v803 = vlog2.pop %v705
        %v804 = vmul.f32 %v803, 0.6931472
        %v805 = vlog2.pop %v707
        %v806 = vmul.f32 %v805, 0.6931472
        %v807 = vlog2.pop %v598
        %v808 = vmul.f32 %v807, 0.6931472
        %v809 = vlog2.pop %v600
        %v810 = vmul.f32 %v809, 0.6931472
        %v811 = vlog2.pop %v711
        %v812 = vmul.f32 %v811, 0.6931472
        %v813 = vlog2.pop %v713
        %v814 = vmul.f32 %v813, 0.6931472
        %v815 = vlog2.pop %v602
        %v816 = vmul.f32 %v815, 0.6931472
        %v817 = vlog2.pop %v604
        %v818 = vmul.f32 %v817, 0.6931472
        %v819 = vlog2.pop %v715
        %v820 = vmul.f32 %v819, 0.6931472
        %v821 = vlog2.pop %v717
        %v822 = vmul.f32 %v821, 0.6931472
        %v823 = vlog2.pop %v608
        %v824 = vmul.f32 %v823, 0.6931472
        %v825 = vlog2.pop %v610
        %v826 = vmul.f32 %v825, 0.6931472
        %v827 = vlog2.pop %v721
        %v828 = vmul.f32 %v827, 0.6931472
        %v829 = vlog2.pop %v723
        %v830 = vmul.f32 %v829, 0.6931472
        %v831 = vlog2.pop %v612
        %v832 = vmul.f32 %v831, 0.6931472
        %v833 = vlog2.pop %v614
        %v834 = vmul.f32 %v833, 0.6931472
        %v835 = vlog2.pop %v725
        %v836 = vmul.f32 %v835, 0.6931472
        %v837 = vlog2.pop %v727
        %v838 = vmul.f32 %v837, 0.6931472
        %v839 = vlog2.pop %v618
        %v840 = vmul.f32 %v839, 0.6931472
        %v841 = vlog2.pop %v620
        %v842 = vmul.f32 %v841, 0.6931472
        %v843 = vlog2.pop %v731
        %v844 = vmul.f32 %v843, 0.6931472
        %v845 = vlog2.pop %v733
        %v846 = vmul.f32 %v845, 0.6931472
        %v847 = vlog2.pop %v622
        %v848 = vmul.f32 %v847, 0.6931472
        %v849 = vlog2.pop %v624
        %v850 = vmul.f32 %v849, 0.6931472
        %v851 = vlog2.pop %v735
        %v852 = vmul.f32 %v851, 0.6931472
        %v853 = vlog2.pop %v737
        %v854 = vmul.f32 %v853, 0.6931472
        %v855 = vlog2.pop %v628
        %v856 = vmul.f32 %v855, 0.6931472
        %v857 = vlog2.pop %v630
        %v858 = vmul.f32 %v857, 0.6931472
        %v859 = vlog2.pop %v741
        %v860 = vmul.f32 %v859, 0.6931472
        %v861 = vlog2.pop %v743
        %v862 = vmul.f32 %v861, 0.6931472
        %v863 = vlog2.pop %v632
        %v864 = vmul.f32 %v863, 0.6931472
        %v865 = vlog2.pop %v634
        %v866 = vmul.f32 %v865, 0.6931472
        %v867 = vlog2.pop %v745
        %v868 = vmul.f32 %v867, 0.6931472
        %v869 = vlog2.pop %v747
        %v870 = vmul.f32 %v869, 0.6931472
        %v871 = vlog2.pop %v638
        %v872 = vmul.f32 %v871, 0.6931472
        %v873 = vlog2.pop %v640
        %v874 = vmul.f32 %v873, 0.6931472
        %v875 = vlog2.pop %v751
        %v876 = vmul.f32 %v875, 0.6931472
        %v877 = vlog2.pop %v753
        %v878 = vmul.f32 %v877, 0.6931472
        %v879 = vlog2.pop %v642
        %v880 = vmul.f32 %v879, 0.6931472
        %v881 = vlog2.pop %v644
        %v882 = vmul.f32 %v881, 0.6931472
        %v883 = vlog2.pop %v755
        %v884 = vmul.f32 %v883, 0.6931472
        %v885 = vlog2.pop %v757
        %v886 = vmul.f32 %v885, 0.6931472
        %v887 = vld [vmem:[#allocation2] sm:$0xff]
        %v888 = vld [vmem:[#allocation2 + $0x8] sm:$0xff]
        %v889 = vld [vmem:[#allocation2 + $0x10] sm:$0xff]
        %v890 = vld [vmem:[#allocation2 + $0x18] sm:$0xff]
        %v891 = vld [vmem:[#allocation2 + $0x20] sm:$0xff]
        %v892 = vld [vmem:[#allocation2 + $0x28] sm:$0xff]
        %v893 = vld [vmem:[#allocation2 + $0x30] sm:$0xff]
        %v894 = vld [vmem:[#allocation2 + $0x38] sm:$0xff]
        %v895 = vld [vmem:[#allocation2 + $0x40] sm:$0xff]
        %v896 = vld [vmem:[#allocation2 + $0x48] sm:$0xff]
        %v897 = vld [vmem:[#allocation2 + $0x50] sm:$0xff]
        %v898 = vld [vmem:[#allocation2 + $0x58] sm:$0xff]
        %v899 = vld [vmem:[#allocation2 + $0x60] sm:$0xff]
        %v900 = vld [vmem:[#allocation2 + $0x68] sm:$0xff]
        %v901 = vld [vmem:[#allocation2 + $0x70] sm:$0xff]
        %v902 = vld [vmem:[#allocation2 + $0x78] sm:$0xff]
        %v903 = vld [vmem:[%s362] sm:$0xff]
        %v904 = vld [vmem:[%s362 + $0x8] sm:$0xff]
        %v905 = vld [vmem:[%s362 + $0x10] sm:$0xff]
        %v906 = vld [vmem:[%s362 + $0x18] sm:$0xff]
        %v907 = vld [vmem:[%s362 + $0x20] sm:$0xff]
        %v908 = vld [vmem:[%s362 + $0x28] sm:$0xff]
        %v909 = vld [vmem:[%s362 + $0x30] sm:$0xff]
        %v910 = vld [vmem:[%s362 + $0x38] sm:$0xff]
        %v911 = vld [vmem:[%s362 + $0x40] sm:$0xff]
        %v912 = vld [vmem:[%s362 + $0x48] sm:$0xff]
        %v913 = vld [vmem:[%s362 + $0x50] sm:$0xff]
        %v914 = vld [vmem:[%s362 + $0x58] sm:$0xff]
        %v915 = vld [vmem:[%s362 + $0x60] sm:$0xff]
        %v916 = vld [vmem:[%s362 + $0x68] sm:$0xff]
        %v917 = vld [vmem:[%s362 + $0x70] sm:$0xff]
        %v918 = vld [vmem:[%s362 + $0x78] sm:$0xff]
        %v919 = vld [vmem:[%s362 + $0x80] sm:$0xff]
        %v920 = vld [vmem:[%s362 + $0x88] sm:$0xff]
        %v921 = vld [vmem:[%s362 + $0x90] sm:$0xff]
        %v922 = vld [vmem:[%s362 + $0x98] sm:$0xff]
        %v923 = vld [vmem:[%s362 + $0xa0] sm:$0xff]
        %v924 = vld [vmem:[%s362 + $0xa8] sm:$0xff]
        %v925 = vld [vmem:[%s362 + $0xb0] sm:$0xff]
        %v926 = vld [vmem:[%s362 + $0xb8] sm:$0xff]
        %v927 = vld [vmem:[%s362 + $0xc0] sm:$0xff]
        %v928 = vld [vmem:[%s362 + $0xc8] sm:$0xff]
        %v929 = vld [vmem:[%s362 + $0xd0] sm:$0xff]
        %v930 = vld [vmem:[%s362 + $0xd8] sm:$0xff]
        %v931 = vld [vmem:[%s362 + $0xe0] sm:$0xff]
        %v932 = vld [vmem:[%s362 + $0xe8] sm:$0xff]
        %v933 = vld [vmem:[%s362 + $0xf0] sm:$0xff]
        %v934 = vld [vmem:[%s362 + $0xf8] sm:$0xff]
        %v935 = vld [vmem:[%s362 + $0x100] sm:$0xff]
        %v936 = vld [vmem:[%s362 + $0x108] sm:$0xff]
        %v937 = vld [vmem:[%s362 + $0x110] sm:$0xff]
        %v938 = vld [vmem:[%s362 + $0x118] sm:$0xff]
        %v939 = vld [vmem:[%s362 + $0x120] sm:$0xff]
        %v940 = vld [vmem:[%s362 + $0x128] sm:$0xff]
        %v941 = vld [vmem:[%s362 + $0x130] sm:$0xff]
        %v942 = vld [vmem:[%s362 + $0x138] sm:$0xff]
        %v943 = vld [vmem:[%s362 + $0x140] sm:$0xff]
        %v944 = vld [vmem:[%s362 + $0x148] sm:$0xff]
        %v945 = vld [vmem:[%s362 + $0x150] sm:$0xff]
        %v946 = vld [vmem:[%s362 + $0x158] sm:$0xff]
        %v947 = vld [vmem:[%s362 + $0x160] sm:$0xff]
        %v948 = vld [vmem:[%s362 + $0x168] sm:$0xff]
        %v949 = vld [vmem:[%s362 + $0x170] sm:$0xff]
        %v950 = vld [vmem:[%s362 + $0x178] sm:$0xff]
        %v951 = vld [vmem:[%s362 + $0x180] sm:$0xff]
        %v952 = vld [vmem:[%s362 + $0x188] sm:$0xff]
        %v953 = vld [vmem:[%s362 + $0x190] sm:$0xff]
        %v954 = vld [vmem:[%s362 + $0x198] sm:$0xff]
        %v955 = vld [vmem:[%s362 + $0x1a0] sm:$0xff]
        %v956 = vld [vmem:[%s362 + $0x1a8] sm:$0xff]
        %v957 = vld [vmem:[%s362 + $0x1b0] sm:$0xff]
        %v958 = vld [vmem:[%s362 + $0x1b8] sm:$0xff]
        %v959 = vld [vmem:[%s362 + $0x1c0] sm:$0xff]
        %v960 = vld [vmem:[%s362 + $0x1c8] sm:$0xff]
        %v961 = vld [vmem:[%s362 + $0x1d0] sm:$0xff]
        %v962 = vld [vmem:[%s362 + $0x1d8] sm:$0xff]
        %v963 = vld [vmem:[%s362 + $0x1e0] sm:$0xff]
        %v964 = vld [vmem:[%s362 + $0x1e8] sm:$0xff]
        %v965 = vld [vmem:[%s362 + $0x1f0] sm:$0xff]
        %v966 = vld [vmem:[%s362 + $0x1f8] sm:$0xff]
        %v967 = vmul.f32 %v760, %v903
        %v968 = vmul.f32 %v762, %v904
        %v969 = vmul.f32 %v764, %v905
        %v970 = vmul.f32 %v766, %v906
        %v971 = vmul.f32 %v768, %v907
        %v972 = vmul.f32 %v770, %v908
        %v973 = vmul.f32 %v772, %v909
        %v974 = vmul.f32 %v774, %v910
        %v975 = vmul.f32 %v776, %v911
        %v976 = vmul.f32 %v778, %v912
        %v977 = vmul.f32 %v780, %v913
        %v978 = vmul.f32 %v782, %v914
        %v979 = vmul.f32 %v784, %v915
        %v980 = vmul.f32 %v786, %v916
        %v981 = vmul.f32 %v788, %v917
        %v982 = vmul.f32 %v790, %v918
        %v983 = vmul.f32 %v792, %v919
        %v984 = vmul.f32 %v794, %v920
        %v985 = vmul.f32 %v796, %v921
        %v986 = vmul.f32 %v798, %v922
        %v987 = vmul.f32 %v800, %v923
        %v988 = vmul.f32 %v802, %v924
        %v989 = vmul.f32 %v804, %v925
        %v990 = vmul.f32 %v806, %v926
        %v991 = vmul.f32 %v808, %v927
        %v992 = vmul.f32 %v810, %v928
        %v993 = vmul.f32 %v812, %v929
        %v994 = vmul.f32 %v814, %v930
        %v995 = vmul.f32 %v816, %v931
        %v996 = vmul.f32 %v818, %v932
        %v997 = vmul.f32 %v820, %v933
        %v998 = vmul.f32 %v822, %v934
        %v999 = vmul.f32 %v824, %v935
        %v1000 = vmul.f32 %v826, %v936
        %v1001 = vmul.f32 %v828, %v937
        %v1002 = vmul.f32 %v830, %v938
        %v1003 = vmul.f32 %v832, %v939
        %v1004 = vmul.f32 %v834, %v940
        %v1005 = vmul.f32 %v836, %v941
        %v1006 = vmul.f32 %v838, %v942
        %v1007 = vmul.f32 %v840, %v943
        %v1008 = vmul.f32 %v842, %v944
        %v1009 = vmul.f32 %v844, %v945
        %v1010 = vmul.f32 %v846, %v946
        %v1011 = vmul.f32 %v848, %v947
        %v1012 = vmul.f32 %v850, %v948
        %v1013 = vmul.f32 %v852, %v949
        %v1014 = vmul.f32 %v854, %v950
        %v1015 = vmul.f32 %v856, %v951
        %v1016 = vmul.f32 %v858, %v952
        %v1017 = vmul.f32 %v860, %v953
        %v1018 = vmul.f32 %v862, %v954
        %v1019 = vmul.f32 %v864, %v955
        %v1020 = vmul.f32 %v866, %v956
        %v1021 = vmul.f32 %v868, %v957
        %v1022 = vmul.f32 %v870, %v958
        %v1023 = vmul.f32 %v872, %v959
        %v1024 = vmul.f32 %v874, %v960
        %v1025 = vmul.f32 %v876, %v961
        %v1026 = vmul.f32 %v878, %v962
        %v1027 = vmul.f32 %v880, %v963
        %v1028 = vmul.f32 %v882, %v964
        %v1029 = vmul.f32 %v884, %v965
        %v1030 = vmul.f32 %v886, %v966
        %v1031 = vadd.f32 %v967, %v968
        %v1032 = vadd.f32 %v1031, %v969
        %v1033 = vadd.f32 %v1032, %v970
        %1034 = vadd.xlane.f32.xlu0 %v1033
        %v1035 = vpop.xlane.xlu0 %1034
        %v1036 = vadd.f32 %v971, %v972
        %v1037 = vadd.f32 %v1036, %v973
        %v1038 = vadd.f32 %v1037, %v974
        %1039 = vadd.xlane.f32.xlu0 %v1038
        %v1040 = vpop.xlane.xlu0 %1039
        %v1041 = vadd.f32 %v975, %v976
        %v1042 = vadd.f32 %v1041, %v977
        %v1043 = vadd.f32 %v1042, %v978
        %1044 = vadd.xlane.f32.xlu0 %v1043
        %v1045 = vpop.xlane.xlu0 %1044
        %v1046 = vadd.f32 %v979, %v980
        %v1047 = vadd.f32 %v1046, %v981
        %v1048 = vadd.f32 %v1047, %v982
        %1049 = vadd.xlane.f32.xlu0 %v1048
        %v1050 = vpop.xlane.xlu0 %1049
        %v1051 = vadd.f32 %v983, %v984
        %v1052 = vadd.f32 %v1051, %v985
        %v1053 = vadd.f32 %v1052, %v986
        %1054 = vadd.xlane.f32.xlu0 %v1053
        %v1055 = vpop.xlane.xlu0 %1054
        %v1056 = vadd.f32 %v987, %v988
        %v1057 = vadd.f32 %v1056, %v989
        %v1058 = vadd.f32 %v1057, %v990
        %1059 = vadd.xlane.f32.xlu0 %v1058
        %v1060 = vpop.xlane.xlu0 %1059
        %v1061 = vadd.f32 %v991, %v992
        %v1062 = vadd.f32 %v1061, %v993
        %v1063 = vadd.f32 %v1062, %v994
        %1064 = vadd.xlane.f32.xlu0 %v1063
        %v1065 = vpop.xlane.xlu0 %1064
        %v1066 = vadd.f32 %v995, %v996
        %v1067 = vadd.f32 %v1066, %v997
        %v1068 = vadd.f32 %v1067, %v998
        %1069 = vadd.xlane.f32.xlu0 %v1068
        %v1070 = vpop.xlane.xlu0 %1069
        %v1071 = vadd.f32 %v999, %v1000
        %v1072 = vadd.f32 %v1071, %v1001
        %v1073 = vadd.f32 %v1072, %v1002
        %1074 = vadd.xlane.f32.xlu0 %v1073
        %v1075 = vpop.xlane.xlu0 %1074
        %v1076 = vadd.f32 %v1003, %v1004
        %v1077 = vadd.f32 %v1076, %v1005
        %v1078 = vadd.f32 %v1077, %v1006
        %1079 = vadd.xlane.f32.xlu0 %v1078
        %v1080 = vpop.xlane.xlu0 %1079
        %v1081 = vadd.f32 %v1007, %v1008
        %v1082 = vadd.f32 %v1081, %v1009
        %v1083 = vadd.f32 %v1082, %v1010
        %1084 = vadd.xlane.f32.xlu0 %v1083
        %v1085 = vpop.xlane.xlu0 %1084
        %v1086 = vadd.f32 %v1011, %v1012
        %v1087 = vadd.f32 %v1086, %v1013
        %v1088 = vadd.f32 %v1087, %v1014
        %1089 = vadd.xlane.f32.xlu0 %v1088
        %v1090 = vpop.xlane.xlu0 %1089
        %v1091 = vadd.f32 %v1015, %v1016
        %v1092 = vadd.f32 %v1091, %v1017
        %v1093 = vadd.f32 %v1092, %v1018
        %1094 = vadd.xlane.f32.xlu0 %v1093
        %v1095 = vpop.xlane.xlu0 %1094
        %v1096 = vadd.f32 %v1019, %v1020
        %v1097 = vadd.f32 %v1096, %v1021
        %v1098 = vadd.f32 %v1097, %v1022
        %1099 = vadd.xlane.f32.xlu0 %v1098
        %v1100 = vpop.xlane.xlu0 %1099
        %v1101 = vadd.f32 %v1023, %v1024
        %v1102 = vadd.f32 %v1101, %v1025
        %v1103 = vadd.f32 %v1102, %v1026
        %1104 = vadd.xlane.f32.xlu0 %v1103
        %v1105 = vpop.xlane.xlu0 %1104
        %v1106 = vadd.f32 %v1027, %v1028
        %v1107 = vadd.f32 %v1106, %v1029
        %v1108 = vadd.f32 %v1107, %v1030
        %1109 = vadd.xlane.f32.xlu0 %v1108
        %v1110 = vpop.xlane.xlu0 %1109
        %v1111 = vadd.f32 %v887, %v1035
        %v1112 = vadd.f32 %v888, %v1040
        %v1113 = vadd.f32 %v889, %v1045
        %v1114 = vadd.f32 %v890, %v1050
        %v1115 = vadd.f32 %v891, %v1055
        %v1116 = vadd.f32 %v892, %v1060
        %v1117 = vadd.f32 %v893, %v1065
        %v1118 = vadd.f32 %v894, %v1070
        %v1119 = vadd.f32 %v895, %v1075
        %v1120 = vadd.f32 %v896, %v1080
        %v1121 = vadd.f32 %v897, %v1085
        %v1122 = vadd.f32 %v898, %v1090
        %v1123 = vadd.f32 %v899, %v1095
        %v1124 = vadd.f32 %v900, %v1100
        %v1125 = vadd.f32 %v901, %v1105
        %v1126 = vadd.f32 %v902, %v1110
        %vm1127 = vcmask 7168
        %1128 = vst.msk [vmem:[#allocation2] sm:$0xff] %vm1127, %v1111
        %1129 = vst.msk [vmem:[#allocation2 + $0x8] sm:$0xff] %vm1127, %v1112
        %1130 = vst.msk [vmem:[#allocation2 + $0x10] sm:$0xff] %vm1127, %v1113
        %1131 = vst.msk [vmem:[#allocation2 + $0x18] sm:$0xff] %vm1127, %v1114
        %1132 = vst.msk [vmem:[#allocation2 + $0x20] sm:$0xff] %vm1127, %v1115
        %1133 = vst.msk [vmem:[#allocation2 + $0x28] sm:$0xff] %vm1127, %v1116
        %1134 = vst.msk [vmem:[#allocation2 + $0x30] sm:$0xff] %vm1127, %v1117
        %1135 = vst.msk [vmem:[#allocation2 + $0x38] sm:$0xff] %vm1127, %v1118
        %1136 = vst.msk [vmem:[#allocation2 + $0x40] sm:$0xff] %vm1127, %v1119
        %1137 = vst.msk [vmem:[#allocation2 + $0x48] sm:$0xff] %vm1127, %v1120
        %1138 = vst.msk [vmem:[#allocation2 + $0x50] sm:$0xff] %vm1127, %v1121
        %1139 = vst.msk [vmem:[#allocation2 + $0x58] sm:$0xff] %vm1127, %v1122
        %1140 = vst.msk [vmem:[#allocation2 + $0x60] sm:$0xff] %vm1127, %v1123
        %1141 = vst.msk [vmem:[#allocation2 + $0x68] sm:$0xff] %vm1127, %v1124
        %1142 = vst.msk [vmem:[#allocation2 + $0x70] sm:$0xff] %vm1127, %v1125
        %1143 = vst.msk [vmem:[#allocation2 + $0x78] sm:$0xff] %vm1127, %v1126
        %p1144 = scmp.eq.s32.totalorder %s19, 1
        // Predicated region
        $region83: #{etm_forward.7} parent=69 // pred_check
          %p1145 = pneg %p1144
        $region84: #{etm_forward.7} parent=69 // pred_check_branch
          %1147 = sbr.rel (%p1145) target = $region86
        $region85: #{etm_forward.7} parent=69 // pred_region
          %v1148 = vld [vmem:[#allocation2] sm:$0xff]
          %v1149 = vld [vmem:[#allocation2 + $0x8] sm:$0xff]
          %v1150 = vld [vmem:[#allocation2 + $0x10] sm:$0xff]
          %v1151 = vld [vmem:[#allocation2 + $0x18] sm:$0xff]
          %v1152 = vld [vmem:[#allocation2 + $0x20] sm:$0xff]
          %v1153 = vld [vmem:[#allocation2 + $0x28] sm:$0xff]
          %v1154 = vld [vmem:[#allocation2 + $0x30] sm:$0xff]
          %v1155 = vld [vmem:[#allocation2 + $0x38] sm:$0xff]
          %v1156 = vld [vmem:[#allocation2 + $0x40] sm:$0xff]
          %v1157 = vld [vmem:[#allocation2 + $0x48] sm:$0xff]
          %v1158 = vld [vmem:[#allocation2 + $0x50] sm:$0xff]
          %v1159 = vld [vmem:[#allocation2 + $0x58] sm:$0xff]
          %v1160 = vld [vmem:[#allocation2 + $0x60] sm:$0xff]
          %v1161 = vld [vmem:[#allocation2 + $0x68] sm:$0xff]
          %v1162 = vld [vmem:[#allocation2 + $0x70] sm:$0xff]
          %v1163 = vld [vmem:[#allocation2 + $0x78] sm:$0xff]
          %v1164 = vsub.f32 0.0, %v1148
          %v1165 = vsub.f32 0.0, %v1149
          %v1166 = vsub.f32 0.0, %v1150
          %v1167 = vsub.f32 0.0, %v1151
          %v1168 = vsub.f32 0.0, %v1152
          %v1169 = vsub.f32 0.0, %v1153
          %v1170 = vsub.f32 0.0, %v1154
          %v1171 = vsub.f32 0.0, %v1155
          %v1172 = vsub.f32 0.0, %v1156
          %v1173 = vsub.f32 0.0, %v1157
          %v1174 = vsub.f32 0.0, %v1158
          %v1175 = vsub.f32 0.0, %v1159
          %v1176 = vsub.f32 0.0, %v1160
          %v1177 = vsub.f32 0.0, %v1161
          %v1178 = vsub.f32 0.0, %v1162
          %v1179 = vsub.f32 0.0, %v1163
          %1180 = vst.msk [vmem:[%s412] sm:$0xff] %vm1127, %v1164
          %1181 = vst.msk [vmem:[%s412 + $0x8] sm:$0xff] %vm1127, %v1165
          %1182 = vst.msk [vmem:[%s412 + $0x10] sm:$0xff] %vm1127, %v1166
          %1183 = vst.msk [vmem:[%s412 + $0x18] sm:$0xff] %vm1127, %v1167
          %1184 = vst.msk [vmem:[%s412 + $0x20] sm:$0xff] %vm1127, %v1168
          %1185 = vst.msk [vmem:[%s412 + $0x28] sm:$0xff] %vm1127, %v1169
          %1186 = vst.msk [vmem:[%s412 + $0x30] sm:$0xff] %vm1127, %v1170
          %1187 = vst.msk [vmem:[%s412 + $0x38] sm:$0xff] %vm1127, %v1171
          %1188 = vst.msk [vmem:[%s412 + $0x40] sm:$0xff] %vm1127, %v1172
          %1189 = vst.msk [vmem:[%s412 + $0x48] sm:$0xff] %vm1127, %v1173
          %1190 = vst.msk [vmem:[%s412 + $0x50] sm:$0xff] %vm1127, %v1174
          %1191 = vst.msk [vmem:[%s412 + $0x58] sm:$0xff] %vm1127, %v1175
          %1192 = vst.msk [vmem:[%s412 + $0x60] sm:$0xff] %vm1127, %v1176
          %1193 = vst.msk [vmem:[%s412 + $0x68] sm:$0xff] %vm1127, %v1177
          %1194 = vst.msk [vmem:[%s412 + $0x70] sm:$0xff] %vm1127, %v1178
          %1195 = vst.msk [vmem:[%s412 + $0x78] sm:$0xff] %vm1127, %v1179
        $region86: #{etm_forward.7} parent=69 // pred_fallthru
          _
        %s1196 = smul.u32 16, %s18
        %p1197 = scmp.lt.s32.totalorder %s1196, 31
        %s1198 = scalar_select %p1197, %s1196, 31
        %s1199 = smul.addr %s1198, 8
        %s1200 = scalar_lea.vmem %s3, %s1199
        // Predicated region
        $region87: #{etm_forward.7} parent=69 // pred_check
          %p1201 = pneg %p124
        $region88: #{etm_forward.7} parent=69 // pred_check_branch
          %1203 = sbr.rel (%p1201) target = $region90
        $region89: #{etm_forward.7} parent=69 // pred_region
          %s1204 = smul.u32 16, %s18
        $region90: #{etm_forward.7} parent=69 // pred_fallthru
          _
      $region70: #{etm_forward.7} parent=5 // pred_fallthru
        _
      %p1205 = scmp.le.s32.totalorder 2, %s9
      // Predicated region
      $region91: #{etm_forward.7} parent=5 // pred_check
        %p1206 = pneg %p1205
      $region92: #{etm_forward.7} parent=5 // pred_check_branch
        %1208 = sbr.rel (%p1206) target = $region94
      $region93: #{etm_forward.7} parent=5 // pred_region
        %s1209 = ssub.s32 %s9, 2
        // Predicated region
        $region95: #{etm_forward.7} parent=93 // pred_check
          %p1210 = pneg %p130
        $region96: #{etm_forward.7} parent=93 // pred_check_branch
          %1212 = sbr.rel (%p1210) target = $region98
        $region97: #{etm_forward.7} parent=93 // pred_region
          %s1213 = smul.u32 16, %s20
          %p1214 = scmp.lt.s32.totalorder %s1213, 31
          %s1215 = scalar_select %p1214, %s1213, 31
          %s1216 = smul.addr %s1215, 8
          %s1217 = scalar_lea.vmem %s3, %s1216
        $region98: #{etm_forward.7} parent=93 // pred_fallthru
          _
      $region94: #{etm_forward.7} parent=5 // pred_fallthru
        _
    $region6: #{etm_forward.7} parent=1 // loop_footer
      %s13 = sadd.s32 1, %s9
    $region7: #{etm_forward.7} parent=1 // loop_footer_branch
      %8 = sbr.rel target = $region3
    $region8: #{etm_forward.7} parent=1 // loop_exit
      _

</llo_original>
